<compile_context>
chip_gen: v7x
topology: tpu7x:2x2x1
jax: 0.10.0
libtpu: 0.0.40
codegen_flags: <defaults>
</compile_context>

<pallas_src>
import functools

import jax
import jax.numpy as jnp
from jax import lax
from jax.experimental import pallas as pl
from jax.experimental.pallas import tpu as pltpu

LEAKY_SLOPE = 0.2
EPS = 1e-5  # PyTorch InstanceNorm3d default


def _round_up(x, m):
    return (x + m - 1) // m * m


def _vmem_capacity_bytes():
    """Generation-aware VMEM capacity (falls back to the v7x per-TC 64 MiB)."""
    try:
        cap = getattr(pltpu.get_tpu_info(), "vmem_capacity_bytes", None)
        if cap:
            return int(cap)
    except Exception:
        pass
    return 64 * 1024 * 1024


def _pick_cout_chunk(cout, n_batch, d, pl_len, budget_bytes):
    """Largest Cout chunk (multiple of 8, or full Cout) whose f32 output block
    (double-buffered) fits the budget; prefers >=2 total grid work items (megacore)."""
    cands = [c for c in range(cout, 0, -1)
             if cout % c == 0 and (c % 8 == 0 or c == cout)]
    fitting = [c for c in cands if 2 * d * c * pl_len * 4 <= budget_bytes]
    if not fitting:
        return cands[-1]
    for c in fitting:                       # descending
        if n_batch * (cout // c) >= 2:
            return c
    return fitting[0]


def _conv_block_kernel(x_ref, w_ref, b_ref, mask_ref, o_ref, rhs_ref, *,
                       wp, inv_count, unroll):
    """Fused Conv3d(3,1,1) + bias + LeakyReLU(0.2) + InstanceNorm3d for one
    (batch, cout-chunk) grid step.

    x_ref:   (Dp, Cin_p, PP) bf16 -- zero-padded volume, one flattened (Hp,Wp) plane
             per depth index (row stride Wp); resident across the cout-chunk axis.
    w_ref:   (Cc, 27*Cin_p)  bf16 -- folded weights, row index = tap*Cin_p + ci.
    b_ref:   (Cc, 1)         f32
    mask_ref:(1, PL)         f32  -- 1.0 on valid (h < H, w < W) lanes, else 0.
    o_ref:   (D, Cc, PL)     f32  -- output block (lane-dense, PL % 128 == 0).
    rhs_ref: (27*Cin_p, PL)  bf16 -- VMEM scratch for the folded-K matmul RHS.
    """
    d_out, cchunk, pl_len = o_ref.shape
    cin_p = x_ref.shape[1]

    w = w_ref[...]
    b = b_ref[...]
    mask = mask_ref[...]

    def sweep(body, init):
        if unroll:
            acc = init
            for d in range(d_out):
                acc = body(d, acc)
            return acc
        return lax.fori_loop(0, d_out, body, init)

    def conv_plane(d, s):
        # Fold all 27 taps into the contraction dim: one K = 27*Cin_p MXU matmul.
        for kd in range(3):
            for kh in range(3):
                for kw in range(3):
                    tap = (kd * 3 + kh) * 3 + kw
                    off = kh * wp + kw                      # static lane offset
                    rhs_ref[pl.ds(tap * cin_p, cin_p), :] = (
                        x_ref[d + kd, :, pl.ds(off, pl_len)])
        y = jnp.dot(w, rhs_ref[...], preferred_element_type=jnp.float32)  # (Cc, PL)
        y = y + b
        y = jnp.where(y >= 0, y, LEAKY_SLOPE * y)
        o_ref[d] = y
        return s + jnp.sum(y * mask, axis=1, keepdims=True)

    zero = jnp.zeros((cchunk, 1), jnp.float32)
    mean = sweep(conv_plane, zero) * inv_count              # (Cc, 1)

    # Two-pass (shifted) variance over the VMEM-resident planes: robust vs. E[y^2]-m^2.
    def sq_plane(d, s):
        dv = (o_ref[d] - mean) * mask
        return s + jnp.sum(dv * dv, axis=1, keepdims=True)

    var = jnp.maximum(sweep(sq_plane, zero) * inv_count, 0.0)
    scale = lax.rsqrt(var + EPS)

    def norm_plane(d, c):
        o_ref[d] = (o_ref[d] - mean) * scale
        return c

    sweep(norm_plane, jnp.int32(0))


@jax.jit
def conv_block_forward(x, weight, bias):
    """x: (N, Cin, D, H, W) f32; weight: (Cout, Cin, 3, 3, 3); bias: (Cout,)."""
    n, cin, d, h, w = x.shape
    cout = weight.shape[0]

    dp, hp, wp = d + 2, h + 2, w + 2
    cin_p = _round_up(cin, 8)                     # sublane-aligned channel count
    pl_len = _round_up(h * wp, 128)               # stored per-plane length (lane-dense)
    pp = _round_up(max(hp * wp, 2 * wp + 2 + pl_len), 128)   # per-plane input stride
    inv_count = 1.0 / float(d * h * w)

    # ---- wrapper-side layout prep: zero pad + flatten each depth plane ----
    xp = jnp.pad(x, ((0, 0), (0, cin_p - cin), (1, 1), (1, 1), (1, 1)))
    xp = xp.transpose(0, 2, 1, 3, 4).reshape(n, dp, cin_p, hp * wp)
    xp = jnp.pad(xp, ((0, 0), (0, 0), (0, 0), (0, pp - hp * wp))).astype(jnp.bfloat16)

    # folded weights (Cout, 27*Cin_p): row = ((kd*3+kh)*3+kw)*Cin_p + ci
    w2 = jnp.pad(weight, ((0, 0), (0, cin_p - cin), (0, 0), (0, 0), (0, 0)))
    w2 = w2.transpose(0, 2, 3, 4, 1).reshape(cout, 27 * cin_p).astype(jnp.bfloat16)
    b2 = bias.reshape(cout, 1).astype(jnp.float32)

    q = jnp.arange(pl_len, dtype=jnp.int32)
    mask = (((q % wp) < w) & ((q // wp) < h)).astype(jnp.float32).reshape(1, pl_len)

    # ---- generation-aware VMEM budgeting & Cout chunking ----
    cap = _vmem_capacity_bytes()
    x_blk = dp * cin_p * pp * 2
    rhs_blk = 27 * cin_p * pl_len * 2
    budget = max(0, int(0.5 * cap) - 2 * x_blk - rhs_blk)
    chunk = _pick_cout_chunk(cout, n, d, pl_len, budget)
    n_chunks = cout // chunk
    o_blk = d * chunk * pl_len * 4
    w_blk = chunk * 27 * cin_p * 2
    est = 2 * (x_blk + o_blk + w_blk + pl_len * 4 + chunk * 4) + rhs_blk + (1 << 20)
    if est > int(0.85 * cap):
        # TODO(synk): two-pass (bf16 intermediate) + rolling manual-DMA depth window
        # for volumes that do not fit the fused VMEM-resident form (v7x: 64 MiB).
        raise NotImplementedError(
            "Conv_Block volume too large for the fused VMEM-resident kernel")
    vmem_limit = min(int(0.85 * cap), max(32 << 20, est + (8 << 20)))

    kernel = functools.partial(_conv_block_kernel, wp=wp, inv_count=inv_count,
                               unroll=(d <= 8))

    out_flat = pl.pallas_call(
        kernel,
        out_shape=jax.ShapeDtypeStruct((n, d, cout, pl_len), jnp.float32),
        grid_spec=pltpu.PrefetchScalarGridSpec(
            num_scalar_prefetch=0,
            grid=(n, n_chunks),
            in_specs=[
                # full padded volume, fetched once per batch (constant across chunks)
                pl.BlockSpec((None, dp, cin_p, pp), lambda i, c: (i, 0, 0, 0)),
                pl.BlockSpec((chunk, 27 * cin_p), lambda i, c: (c, 0)),
                pl.BlockSpec((chunk, 1), lambda i, c: (c, 0)),
                pl.BlockSpec((1, pl_len), lambda i, c: (0, 0)),
            ],
            out_specs=pl.BlockSpec((None, d, chunk, pl_len),
                                   lambda i, c: (i, 0, c, 0)),
            scratch_shapes=[pltpu.VMEM((27 * cin_p, pl_len), jnp.bfloat16)],
        ),
        compiler_params=pltpu.CompilerParams(
            dimension_semantics=("parallel", "parallel"),
            vmem_limit_bytes=vmem_limit),
    )(xp, w2, b2, mask)

    # drop junk pad columns/rows and return NCDHW
    out = out_flat[..., :h * wp].reshape(n, d, cout, h, wp)[..., :w]
    return out.transpose(0, 2, 1, 3, 4)


def conv_block_reference(x, weight, bias, compute_dtype=jnp.float32):
    """Pure-JAX reference matching PyTorch Conv_Block semantics."""
    y = lax.conv_general_dilated(
        x.astype(compute_dtype), weight.astype(compute_dtype),
        window_strides=(1, 1, 1),
        padding=((1, 1), (1, 1), (1, 1)),
        dimension_numbers=("NCDHW", "OIDHW", "NCDHW"),
        preferred_element_type=jnp.float32)
    y = y + bias.astype(jnp.float32).reshape(1, -1, 1, 1, 1)
    y = jnp.where(y >= 0, y, LEAKY_SLOPE * y)
    mean = jnp.mean(y, axis=(2, 3, 4), keepdims=True)
    var = jnp.mean((y - mean) ** 2, axis=(2, 3, 4), keepdims=True)
    return (y - mean) * lax.rsqrt(var + EPS)


if __name__ == "__main__":
    N, C_IN, C_OUT = 2, 4, 8
    D, H, W = 4, 16, 16

    key = jax.random.PRNGKey(0)
    kx, kw_key, kb_key = jax.random.split(key, 3)
    x = jax.random.normal(kx, (N, C_IN, D, H, W), dtype=jnp.float32)

    fan_in = C_IN * 27
    bound = 1.0 / fan_in ** 0.5
    weight = jax.random.uniform(kw_key, (C_OUT, C_IN, 3, 3, 3),
                                minval=-bound, maxval=bound, dtype=jnp.float32)
    bias = jax.random.uniform(kb_key, (C_OUT,), minval=-bound, maxval=bound,
                              dtype=jnp.float32)

    out = jax.block_until_ready(conv_block_forward(x, weight, bias))
    assert out.shape == (N, C_OUT, D, H, W), out.shape

    # Matched-precision reference (bf16 conv inputs, f32 accumulation/epilogue).
    ref_bf16 = conv_block_reference(x, weight, bias, jnp.bfloat16)
    assert jnp.allclose(out, ref_bf16, atol=2e-3, rtol=2e-3), \
        float(jnp.max(jnp.abs(out - ref_bf16)))

    # Loose sanity check vs. the pure-f32 PyTorch-semantics reference.
    ref_f32 = conv_block_reference(x, weight, bias, jnp.float32)
    assert jnp.allclose(out, ref_f32, atol=6e-2, rtol=6e-2), \
        float(jnp.max(jnp.abs(out - ref_f32)))

    print("KERNEL_OK")
</pallas_src>

<mosaic_0001>
module attributes {stable_mosaic.version = 11 : i64} {
  func.func @_conv_block_kernel(%arg0: i32, %arg1: i32, %arg2: memref<1x6x8x512xbf16, #tpu.memory_space<vmem>>, %arg3: memref<8x216xbf16, #tpu.memory_space<vmem>>, %arg4: memref<8x1xf32, #tpu.memory_space<vmem>>, %arg5: memref<1x384xf32, #tpu.memory_space<vmem>>, %arg6: memref<1x4x8x384xf32, #tpu.memory_space<vmem>>, %arg7: memref<216x384xbf16, #tpu.memory_space<vmem>>) attributes {dimension_semantics = [#tpu.dimension_semantics<parallel>, #tpu.dimension_semantics<parallel>], iteration_bounds = array<i64: 2, 1>, scalar_prefetch = 0 : i64, scratch_operands = 1 : i64, tpu.core_type = #tpu.core_type<tc>, window_params = [{transform_indices = @transform_0, window_bounds = array<i64: 1, 6, 8, 512>}, {transform_indices = @transform_1, window_bounds = array<i64: 8, 216>}, {transform_indices = @transform_2, window_bounds = array<i64: 8, 1>}, {pipeline_mode = #tpu.pipeline_mode<synchronous>, transform_indices = @transform_3, window_bounds = array<i64: 1, 384>}, {transform_indices = @transform_4, window_bounds = array<i64: 1, 4, 8, 384>}]} {
    %c0 = arith.constant 0 : index
    %c0_0 = arith.constant 0 : index
    %0 = vector.load %arg3[%c0, %c0_0] : memref<8x216xbf16, #tpu.memory_space<vmem>>, vector<8x216xbf16>
    %c0_1 = arith.constant 0 : index
    %c0_2 = arith.constant 0 : index
    %1 = vector.load %arg4[%c0_1, %c0_2] : memref<8x1xf32, #tpu.memory_space<vmem>>, vector<8x1xf32>
    %c0_3 = arith.constant 0 : index
    %c0_4 = arith.constant 0 : index
    %2 = vector.load %arg5[%c0_3, %c0_4] : memref<1x384xf32, #tpu.memory_space<vmem>>, vector<1x384xf32>
    %cst = arith.constant 0.000000e+00 : f32
    %3 = vector.broadcast %cst : f32 to vector<8x1xf32>
    %c0_5 = arith.constant 0 : index
    %c0_6 = arith.constant 0 : index
    %c0_7 = arith.constant 0 : index
    %c0_8 = arith.constant 0 : index
    %4 = vector.load %arg2[%c0_5, %c0_6, %c0_7, %c0_8] : memref<1x6x8x512xbf16, #tpu.memory_space<vmem>>, vector<1x1x8x384xbf16>
    %5 = vector.shape_cast %4 : vector<1x1x8x384xbf16> to vector<8x384xbf16>
    %c0_9 = arith.constant 0 : index
    %c0_10 = arith.constant 0 : index
    %6 = vector.load %arg7[%c0_9, %c0_10] : memref<216x384xbf16, #tpu.memory_space<vmem>>, vector<8x384xbf16>
    tpu.vector_store %arg7[%c0_9, %c0_10], %5 {strides = array<i32>} : memref<216x384xbf16, #tpu.memory_space<vmem>>, vector<8x384xbf16>,
    %c0_11 = arith.constant 0 : index
    %c0_12 = arith.constant 0 : index
    %c0_13 = arith.constant 0 : index
    %c1 = arith.constant 1 : index
    %7 = vector.load %arg2[%c0_11, %c0_12, %c0_13, %c1] : memref<1x6x8x512xbf16, #tpu.memory_space<vmem>>, vector<1x1x8x384xbf16>
    %8 = vector.shape_cast %7 : vector<1x1x8x384xbf16> to vector<8x384xbf16>
    %c8 = arith.constant 8 : index
    %c0_14 = arith.constant 0 : index
    %9 = vector.load %arg7[%c8, %c0_14] : memref<216x384xbf16, #tpu.memory_space<vmem>>, vector<8x384xbf16>
    tpu.vector_store %arg7[%c8, %c0_14], %8 {strides = array<i32>} : memref<216x384xbf16, #tpu.memory_space<vmem>>, vector<8x384xbf16>,
    %c0_15 = arith.constant 0 : index
    %c0_16 = arith.constant 0 : index
    %c0_17 = arith.constant 0 : index
    %c2 = arith.constant 2 : index
    %10 = vector.load %arg2[%c0_15, %c0_16, %c0_17, %c2] : memref<1x6x8x512xbf16, #tpu.memory_space<vmem>>, vector<1x1x8x384xbf16>
    %11 = vector.shape_cast %10 : vector<1x1x8x384xbf16> to vector<8x384xbf16>
    %c16 = arith.constant 16 : index
    %c0_18 = arith.constant 0 : index
    %12 = vector.load %arg7[%c16, %c0_18] : memref<216x384xbf16, #tpu.memory_space<vmem>>, vector<8x384xbf16>
    tpu.vector_store %arg7[%c16, %c0_18], %11 {strides = array<i32>} : memref<216x384xbf16, #tpu.memory_space<vmem>>, vector<8x384xbf16>,
    %c0_19 = arith.constant 0 : index
    %c0_20 = arith.constant 0 : index
    %c0_21 = arith.constant 0 : index
    %c18 = arith.constant 18 : index
    %13 = vector.load %arg2[%c0_19, %c0_20, %c0_21, %c18] : memref<1x6x8x512xbf16, #tpu.memory_space<vmem>>, vector<1x1x8x384xbf16>
    %14 = vector.shape_cast %13 : vector<1x1x8x384xbf16> to vector<8x384xbf16>
    %c24 = arith.constant 24 : index
    %c0_22 = arith.constant 0 : index
    %15 = vector.load %arg7[%c24, %c0_22] : memref<216x384xbf16, #tpu.memory_space<vmem>>, vector<8x384xbf16>
    tpu.vector_store %arg7[%c24, %c0_22], %14 {strides = array<i32>} : memref<216x384xbf16, #tpu.memory_space<vmem>>, vector<8x384xbf16>,
    %c0_23 = arith.constant 0 : index
    %c0_24 = arith.constant 0 : index
    %c0_25 = arith.constant 0 : index
    %c19 = arith.constant 19 : index
    %16 = vector.load %arg2[%c0_23, %c0_24, %c0_25, %c19] : memref<1x6x8x512xbf16, #tpu.memory_space<vmem>>, vector<1x1x8x384xbf16>
    %17 = vector.shape_cast %16 : vector<1x1x8x384xbf16> to vector<8x384xbf16>
    %c32 = arith.constant 32 : index
    %c0_26 = arith.constant 0 : index
    %18 = vector.load %arg7[%c32, %c0_26] : memref<216x384xbf16, #tpu.memory_space<vmem>>, vector<8x384xbf16>
    tpu.vector_store %arg7[%c32, %c0_26], %17 {strides = array<i32>} : memref<216x384xbf16, #tpu.memory_space<vmem>>, vector<8x384xbf16>,
    %c0_27 = arith.constant 0 : index
    %c0_28 = arith.constant 0 : index
    %c0_29 = arith.constant 0 : index
    %c20 = arith.constant 20 : index
    %19 = vector.load %arg2[%c0_27, %c0_28, %c0_29, %c20] : memref<1x6x8x512xbf16, #tpu.memory_space<vmem>>, vector<1x1x8x384xbf16>
    %20 = vector.shape_cast %19 : vector<1x1x8x384xbf16> to vector<8x384xbf16>
    %c40 = arith.constant 40 : index
    %c0_30 = arith.constant 0 : index
    %21 = vector.load %arg7[%c40, %c0_30] : memref<216x384xbf16, #tpu.memory_space<vmem>>, vector<8x384xbf16>
    tpu.vector_store %arg7[%c40, %c0_30], %20 {strides = array<i32>} : memref<216x384xbf16, #tpu.memory_space<vmem>>, vector<8x384xbf16>,
    %c0_31 = arith.constant 0 : index
    %c0_32 = arith.constant 0 : index
    %c0_33 = arith.constant 0 : index
    %c36 = arith.constant 36 : index
    %22 = vector.load %arg2[%c0_31, %c0_32, %c0_33, %c36] : memref<1x6x8x512xbf16, #tpu.memory_space<vmem>>, vector<1x1x8x384xbf16>
    %23 = vector.shape_cast %22 : vector<1x1x8x384xbf16> to vector<8x384xbf16>
    %c48 = arith.constant 48 : index
    %c0_34 = arith.constant 0 : index
    %24 = vector.load %arg7[%c48, %c0_34] : memref<216x384xbf16, #tpu.memory_space<vmem>>, vector<8x384xbf16>
    tpu.vector_store %arg7[%c48, %c0_34], %23 {strides = array<i32>} : memref<216x384xbf16, #tpu.memory_space<vmem>>, vector<8x384xbf16>,
    %c0_35 = arith.constant 0 : index
    %c0_36 = arith.constant 0 : index
    %c0_37 = arith.constant 0 : index
    %c37 = arith.constant 37 : index
    %25 = vector.load %arg2[%c0_35, %c0_36, %c0_37, %c37] : memref<1x6x8x512xbf16, #tpu.memory_space<vmem>>, vector<1x1x8x384xbf16>
    %26 = vector.shape_cast %25 : vector<1x1x8x384xbf16> to vector<8x384xbf16>
    %c56 = arith.constant 56 : index
    %c0_38 = arith.constant 0 : index
    %27 = vector.load %arg7[%c56, %c0_38] : memref<216x384xbf16, #tpu.memory_space<vmem>>, vector<8x384xbf16>
    tpu.vector_store %arg7[%c56, %c0_38], %26 {strides = array<i32>} : memref<216x384xbf16, #tpu.memory_space<vmem>>, vector<8x384xbf16>,
    %c0_39 = arith.constant 0 : index
    %c0_40 = arith.constant 0 : index
    %c0_41 = arith.constant 0 : index
    %c38 = arith.constant 38 : index
    %28 = vector.load %arg2[%c0_39, %c0_40, %c0_41, %c38] : memref<1x6x8x512xbf16, #tpu.memory_space<vmem>>, vector<1x1x8x384xbf16>
    %29 = vector.shape_cast %28 : vector<1x1x8x384xbf16> to vector<8x384xbf16>
    %c64 = arith.constant 64 : index
    %c0_42 = arith.constant 0 : index
    %30 = vector.load %arg7[%c64, %c0_42] : memref<216x384xbf16, #tpu.memory_space<vmem>>, vector<8x384xbf16>
    tpu.vector_store %arg7[%c64, %c0_42], %29 {strides = array<i32>} : memref<216x384xbf16, #tpu.memory_space<vmem>>, vector<8x384xbf16>,
    %c0_43 = arith.constant 0 : index
    %c1_44 = arith.constant 1 : index
    %c0_45 = arith.constant 0 : index
    %c0_46 = arith.constant 0 : index
    %31 = vector.load %arg2[%c0_43, %c1_44, %c0_45, %c0_46] : memref<1x6x8x512xbf16, #tpu.memory_space<vmem>>, vector<1x1x8x384xbf16>
    %32 = vector.shape_cast %31 : vector<1x1x8x384xbf16> to vector<8x384xbf16>
    %c72 = arith.constant 72 : index
    %c0_47 = arith.constant 0 : index
    %33 = vector.load %arg7[%c72, %c0_47] : memref<216x384xbf16, #tpu.memory_space<vmem>>, vector<8x384xbf16>
    tpu.vector_store %arg7[%c72, %c0_47], %32 {strides = array<i32>} : memref<216x384xbf16, #tpu.memory_space<vmem>>, vector<8x384xbf16>,
    %c0_48 = arith.constant 0 : index
    %c1_49 = arith.constant 1 : index
    %c0_50 = arith.constant 0 : index
    %c1_51 = arith.constant 1 : index
    %34 = vector.load %arg2[%c0_48, %c1_49, %c0_50, %c1_51] : memref<1x6x8x512xbf16, #tpu.memory_space<vmem>>, vector<1x1x8x384xbf16>
    %35 = vector.shape_cast %34 : vector<1x1x8x384xbf16> to vector<8x384xbf16>
    %c80 = arith.constant 80 : index
    %c0_52 = arith.constant 0 : index
    %36 = vector.load %arg7[%c80, %c0_52] : memref<216x384xbf16, #tpu.memory_space<vmem>>, vector<8x384xbf16>
    tpu.vector_store %arg7[%c80, %c0_52], %35 {strides = array<i32>} : memref<216x384xbf16, #tpu.memory_space<vmem>>, vector<8x384xbf16>,
    %c0_53 = arith.constant 0 : index
    %c1_54 = arith.constant 1 : index
    %c0_55 = arith.constant 0 : index
    %c2_56 = arith.constant 2 : index
    %37 = vector.load %arg2[%c0_53, %c1_54, %c0_55, %c2_56] : memref<1x6x8x512xbf16, #tpu.memory_space<vmem>>, vector<1x1x8x384xbf16>
    %38 = vector.shape_cast %37 : vector<1x1x8x384xbf16> to vector<8x384xbf16>
    %c88 = arith.constant 88 : index
    %c0_57 = arith.constant 0 : index
    %39 = vector.load %arg7[%c88, %c0_57] : memref<216x384xbf16, #tpu.memory_space<vmem>>, vector<8x384xbf16>
    tpu.vector_store %arg7[%c88, %c0_57], %38 {strides = array<i32>} : memref<216x384xbf16, #tpu.memory_space<vmem>>, vector<8x384xbf16>,
    %c0_58 = arith.constant 0 : index
    %c1_59 = arith.constant 1 : index
    %c0_60 = arith.constant 0 : index
    %c18_61 = arith.constant 18 : index
    %40 = vector.load %arg2[%c0_58, %c1_59, %c0_60, %c18_61] : memref<1x6x8x512xbf16, #tpu.memory_space<vmem>>, vector<1x1x8x384xbf16>
    %41 = vector.shape_cast %40 : vector<1x1x8x384xbf16> to vector<8x384xbf16>
    %c96 = arith.constant 96 : index
    %c0_62 = arith.constant 0 : index
    %42 = vector.load %arg7[%c96, %c0_62] : memref<216x384xbf16, #tpu.memory_space<vmem>>, vector<8x384xbf16>
    tpu.vector_store %arg7[%c96, %c0_62], %41 {strides = array<i32>} : memref<216x384xbf16, #tpu.memory_space<vmem>>, vector<8x384xbf16>,
    %c0_63 = arith.constant 0 : index
    %c1_64 = arith.constant 1 : index
    %c0_65 = arith.constant 0 : index
    %c19_66 = arith.constant 19 : index
    %43 = vector.load %arg2[%c0_63, %c1_64, %c0_65, %c19_66] : memref<1x6x8x512xbf16, #tpu.memory_space<vmem>>, vector<1x1x8x384xbf16>
    %44 = vector.shape_cast %43 : vector<1x1x8x384xbf16> to vector<8x384xbf16>
    %c104 = arith.constant 104 : index
    %c0_67 = arith.constant 0 : index
    %45 = vector.load %arg7[%c104, %c0_67] : memref<216x384xbf16, #tpu.memory_space<vmem>>, vector<8x384xbf16>
    tpu.vector_store %arg7[%c104, %c0_67], %44 {strides = array<i32>} : memref<216x384xbf16, #tpu.memory_space<vmem>>, vector<8x384xbf16>,
    %c0_68 = arith.constant 0 : index
    %c1_69 = arith.constant 1 : index
    %c0_70 = arith.constant 0 : index
    %c20_71 = arith.constant 20 : index
    %46 = vector.load %arg2[%c0_68, %c1_69, %c0_70, %c20_71] : memref<1x6x8x512xbf16, #tpu.memory_space<vmem>>, vector<1x1x8x384xbf16>
    %47 = vector.shape_cast %46 : vector<1x1x8x384xbf16> to vector<8x384xbf16>
    %c112 = arith.constant 112 : index
    %c0_72 = arith.constant 0 : index
    %48 = vector.load %arg7[%c112, %c0_72] : memref<216x384xbf16, #tpu.memory_space<vmem>>, vector<8x384xbf16>
    tpu.vector_store %arg7[%c112, %c0_72], %47 {strides = array<i32>} : memref<216x384xbf16, #tpu.memory_space<vmem>>, vector<8x384xbf16>,
    %c0_73 = arith.constant 0 : index
    %c1_74 = arith.constant 1 : index
    %c0_75 = arith.constant 0 : index
    %c36_76 = arith.constant 36 : index
    %49 = vector.load %arg2[%c0_73, %c1_74, %c0_75, %c36_76] : memref<1x6x8x512xbf16, #tpu.memory_space<vmem>>, vector<1x1x8x384xbf16>
    %50 = vector.shape_cast %49 : vector<1x1x8x384xbf16> to vector<8x384xbf16>
    %c120 = arith.constant 120 : index
    %c0_77 = arith.constant 0 : index
    %51 = vector.load %arg7[%c120, %c0_77] : memref<216x384xbf16, #tpu.memory_space<vmem>>, vector<8x384xbf16>
    tpu.vector_store %arg7[%c120, %c0_77], %50 {strides = array<i32>} : memref<216x384xbf16, #tpu.memory_space<vmem>>, vector<8x384xbf16>,
    %c0_78 = arith.constant 0 : index
    %c1_79 = arith.constant 1 : index
    %c0_80 = arith.constant 0 : index
    %c37_81 = arith.constant 37 : index
    %52 = vector.load %arg2[%c0_78, %c1_79, %c0_80, %c37_81] : memref<1x6x8x512xbf16, #tpu.memory_space<vmem>>, vector<1x1x8x384xbf16>
    %53 = vector.shape_cast %52 : vector<1x1x8x384xbf16> to vector<8x384xbf16>
    %c128 = arith.constant 128 : index
    %c0_82 = arith.constant 0 : index
    %54 = vector.load %arg7[%c128, %c0_82] : memref<216x384xbf16, #tpu.memory_space<vmem>>, vector<8x384xbf16>
    tpu.vector_store %arg7[%c128, %c0_82], %53 {strides = array<i32>} : memref<216x384xbf16, #tpu.memory_space<vmem>>, vector<8x384xbf16>,
    %c0_83 = arith.constant 0 : index
    %c1_84 = arith.constant 1 : index
    %c0_85 = arith.constant 0 : index
    %c38_86 = arith.constant 38 : index
    %55 = vector.load %arg2[%c0_83, %c1_84, %c0_85, %c38_86] : memref<1x6x8x512xbf16, #tpu.memory_space<vmem>>, vector<1x1x8x384xbf16>
    %56 = vector.shape_cast %55 : vector<1x1x8x384xbf16> to vector<8x384xbf16>
    %c136 = arith.constant 136 : index
    %c0_87 = arith.constant 0 : index
    %57 = vector.load %arg7[%c136, %c0_87] : memref<216x384xbf16, #tpu.memory_space<vmem>>, vector<8x384xbf16>
    tpu.vector_store %arg7[%c136, %c0_87], %56 {strides = array<i32>} : memref<216x384xbf16, #tpu.memory_space<vmem>>, vector<8x384xbf16>,
    %c0_88 = arith.constant 0 : index
    %c2_89 = arith.constant 2 : index
    %c0_90 = arith.constant 0 : index
    %c0_91 = arith.constant 0 : index
    %58 = vector.load %arg2[%c0_88, %c2_89, %c0_90, %c0_91] : memref<1x6x8x512xbf16, #tpu.memory_space<vmem>>, vector<1x1x8x384xbf16>
    %59 = vector.shape_cast %58 : vector<1x1x8x384xbf16> to vector<8x384xbf16>
    %c144 = arith.constant 144 : index
    %c0_92 = arith.constant 0 : index
    %60 = vector.load %arg7[%c144, %c0_92] : memref<216x384xbf16, #tpu.memory_space<vmem>>, vector<8x384xbf16>
    tpu.vector_store %arg7[%c144, %c0_92], %59 {strides = array<i32>} : memref<216x384xbf16, #tpu.memory_space<vmem>>, vector<8x384xbf16>,
    %c0_93 = arith.constant 0 : index
    %c2_94 = arith.constant 2 : index
    %c0_95 = arith.constant 0 : index
    %c1_96 = arith.constant 1 : index
    %61 = vector.load %arg2[%c0_93, %c2_94, %c0_95, %c1_96] : memref<1x6x8x512xbf16, #tpu.memory_space<vmem>>, vector<1x1x8x384xbf16>
    %62 = vector.shape_cast %61 : vector<1x1x8x384xbf16> to vector<8x384xbf16>
    %c152 = arith.constant 152 : index
    %c0_97 = arith.constant 0 : index
    %63 = vector.load %arg7[%c152, %c0_97] : memref<216x384xbf16, #tpu.memory_space<vmem>>, vector<8x384xbf16>
    tpu.vector_store %arg7[%c152, %c0_97], %62 {strides = array<i32>} : memref<216x384xbf16, #tpu.memory_space<vmem>>, vector<8x384xbf16>,
    %c0_98 = arith.constant 0 : index
    %c2_99 = arith.constant 2 : index
    %c0_100 = arith.constant 0 : index
    %c2_101 = arith.constant 2 : index
    %64 = vector.load %arg2[%c0_98, %c2_99, %c0_100, %c2_101] : memref<1x6x8x512xbf16, #tpu.memory_space<vmem>>, vector<1x1x8x384xbf16>
    %65 = vector.shape_cast %64 : vector<1x1x8x384xbf16> to vector<8x384xbf16>
    %c160 = arith.constant 160 : index
    %c0_102 = arith.constant 0 : index
    %66 = vector.load %arg7[%c160, %c0_102] : memref<216x384xbf16, #tpu.memory_space<vmem>>, vector<8x384xbf16>
    tpu.vector_store %arg7[%c160, %c0_102], %65 {strides = array<i32>} : memref<216x384xbf16, #tpu.memory_space<vmem>>, vector<8x384xbf16>,
    %c0_103 = arith.constant 0 : index
    %c2_104 = arith.constant 2 : index
    %c0_105 = arith.constant 0 : index
    %c18_106 = arith.constant 18 : index
    %67 = vector.load %arg2[%c0_103, %c2_104, %c0_105, %c18_106] : memref<1x6x8x512xbf16, #tpu.memory_space<vmem>>, vector<1x1x8x384xbf16>
    %68 = vector.shape_cast %67 : vector<1x1x8x384xbf16> to vector<8x384xbf16>
    %c168 = arith.constant 168 : index
    %c0_107 = arith.constant 0 : index
    %69 = vector.load %arg7[%c168, %c0_107] : memref<216x384xbf16, #tpu.memory_space<vmem>>, vector<8x384xbf16>
    tpu.vector_store %arg7[%c168, %c0_107], %68 {strides = array<i32>} : memref<216x384xbf16, #tpu.memory_space<vmem>>, vector<8x384xbf16>,
    %c0_108 = arith.constant 0 : index
    %c2_109 = arith.constant 2 : index
    %c0_110 = arith.constant 0 : index
    %c19_111 = arith.constant 19 : index
    %70 = vector.load %arg2[%c0_108, %c2_109, %c0_110, %c19_111] : memref<1x6x8x512xbf16, #tpu.memory_space<vmem>>, vector<1x1x8x384xbf16>
    %71 = vector.shape_cast %70 : vector<1x1x8x384xbf16> to vector<8x384xbf16>
    %c176 = arith.constant 176 : index
    %c0_112 = arith.constant 0 : index
    %72 = vector.load %arg7[%c176, %c0_112] : memref<216x384xbf16, #tpu.memory_space<vmem>>, vector<8x384xbf16>
    tpu.vector_store %arg7[%c176, %c0_112], %71 {strides = array<i32>} : memref<216x384xbf16, #tpu.memory_space<vmem>>, vector<8x384xbf16>,
    %c0_113 = arith.constant 0 : index
    %c2_114 = arith.constant 2 : index
    %c0_115 = arith.constant 0 : index
    %c20_116 = arith.constant 20 : index
    %73 = vector.load %arg2[%c0_113, %c2_114, %c0_115, %c20_116] : memref<1x6x8x512xbf16, #tpu.memory_space<vmem>>, vector<1x1x8x384xbf16>
    %74 = vector.shape_cast %73 : vector<1x1x8x384xbf16> to vector<8x384xbf16>
    %c184 = arith.constant 184 : index
    %c0_117 = arith.constant 0 : index
    %75 = vector.load %arg7[%c184, %c0_117] : memref<216x384xbf16, #tpu.memory_space<vmem>>, vector<8x384xbf16>
    tpu.vector_store %arg7[%c184, %c0_117], %74 {strides = array<i32>} : memref<216x384xbf16, #tpu.memory_space<vmem>>, vector<8x384xbf16>,
    %c0_118 = arith.constant 0 : index
    %c2_119 = arith.constant 2 : index
    %c0_120 = arith.constant 0 : index
    %c36_121 = arith.constant 36 : index
    %76 = vector.load %arg2[%c0_118, %c2_119, %c0_120, %c36_121] : memref<1x6x8x512xbf16, #tpu.memory_space<vmem>>, vector<1x1x8x384xbf16>
    %77 = vector.shape_cast %76 : vector<1x1x8x384xbf16> to vector<8x384xbf16>
    %c192 = arith.constant 192 : index
    %c0_122 = arith.constant 0 : index
    %78 = vector.load %arg7[%c192, %c0_122] : memref<216x384xbf16, #tpu.memory_space<vmem>>, vector<8x384xbf16>
    tpu.vector_store %arg7[%c192, %c0_122], %77 {strides = array<i32>} : memref<216x384xbf16, #tpu.memory_space<vmem>>, vector<8x384xbf16>,
    %c0_123 = arith.constant 0 : index
    %c2_124 = arith.constant 2 : index
    %c0_125 = arith.constant 0 : index
    %c37_126 = arith.constant 37 : index
    %79 = vector.load %arg2[%c0_123, %c2_124, %c0_125, %c37_126] : memref<1x6x8x512xbf16, #tpu.memory_space<vmem>>, vector<1x1x8x384xbf16>
    %80 = vector.shape_cast %79 : vector<1x1x8x384xbf16> to vector<8x384xbf16>
    %c200 = arith.constant 200 : index
    %c0_127 = arith.constant 0 : index
    %81 = vector.load %arg7[%c200, %c0_127] : memref<216x384xbf16, #tpu.memory_space<vmem>>, vector<8x384xbf16>
    tpu.vector_store %arg7[%c200, %c0_127], %80 {strides = array<i32>} : memref<216x384xbf16, #tpu.memory_space<vmem>>, vector<8x384xbf16>,
    %c0_128 = arith.constant 0 : index
    %c2_129 = arith.constant 2 : index
    %c0_130 = arith.constant 0 : index
    %c38_131 = arith.constant 38 : index
    %82 = vector.load %arg2[%c0_128, %c2_129, %c0_130, %c38_131] : memref<1x6x8x512xbf16, #tpu.memory_space<vmem>>, vector<1x1x8x384xbf16>
    %83 = vector.shape_cast %82 : vector<1x1x8x384xbf16> to vector<8x384xbf16>
    %c208 = arith.constant 208 : index
    %c0_132 = arith.constant 0 : index
    %84 = vector.load %arg7[%c208, %c0_132] : memref<216x384xbf16, #tpu.memory_space<vmem>>, vector<8x384xbf16>
    tpu.vector_store %arg7[%c208, %c0_132], %83 {strides = array<i32>} : memref<216x384xbf16, #tpu.memory_space<vmem>>, vector<8x384xbf16>,
    %c0_133 = arith.constant 0 : index
    %c0_134 = arith.constant 0 : index
    %85 = vector.load %arg7[%c0_133, %c0_134] : memref<216x384xbf16, #tpu.memory_space<vmem>>, vector<216x384xbf16>
    %cst_135 = arith.constant dense<0.000000e+00> : vector<8x384xf32>
    %86 = tpu.matmul %0, %85, %cst_135 {dimension_numbers = #tpu.dot_dimension_numbers<[1], [0], [0], [1], [0, 0, 1, 1], [], []>} : vector<8x216xbf16>, vector<216x384xbf16>, vector<8x384xf32> -> vector<8x384xf32>
    %87 = vector.broadcast %1 : vector<8x1xf32> to vector<8x384xf32>
    %88 = arith.addf %86, %87 : vector<8x384xf32>
    %cst_136 = arith.constant 0.000000e+00 : f32
    %89 = vector.broadcast %cst_136 : f32 to vector<8x384xf32>
    %90 = arith.cmpf oge, %88, %89 : vector<8x384xf32>
    %cst_137 = arith.constant 2.000000e-01 : f32
    %91 = vector.broadcast %cst_137 : f32 to vector<8x384xf32>
    %92 = arith.mulf %91, %88 : vector<8x384xf32>
    %93 = arith.select %90, %88, %92 : vector<8x384xi1>, vector<8x384xf32>
    %c0_138 = arith.constant 0 : index
    %c0_139 = arith.constant 0 : index
    %c0_140 = arith.constant 0 : index
    %c0_141 = arith.constant 0 : index
    %94 = vector.load %arg6[%c0_138, %c0_139, %c0_140, %c0_141] : memref<1x4x8x384xf32, #tpu.memory_space<vmem>>, vector<1x1x8x384xf32>
    %95 = vector.shape_cast %94 : vector<1x1x8x384xf32> to vector<8x384xf32>
    %96 = vector.shape_cast %93 : vector<8x384xf32> to vector<1x1x8x384xf32>
    tpu.vector_store %arg6[%c0_138, %c0_139, %c0_140, %c0_141], %96 {strides = array<i32>} : memref<1x4x8x384xf32, #tpu.memory_space<vmem>>, vector<1x1x8x384xf32>,
    %97 = vector.broadcast %2 : vector<1x384xf32> to vector<8x384xf32>
    %98 = arith.mulf %93, %97 : vector<8x384xf32>
    %cst_142 = arith.constant dense<0.000000e+00> : vector<8xf32>
    %99 = vector.multi_reduction <add>, %98, %cst_142 [1] : vector<8x384xf32> to vector<8xf32>
    %100 = vector.shape_cast %99 : vector<8xf32> to vector<8x1xf32>
    %101 = arith.addf %3, %100 : vector<8x1xf32>
    %c0_143 = arith.constant 0 : index
    %c1_144 = arith.constant 1 : index
    %c0_145 = arith.constant 0 : index
    %c0_146 = arith.constant 0 : index
    %102 = vector.load %arg2[%c0_143, %c1_144, %c0_145, %c0_146] : memref<1x6x8x512xbf16, #tpu.memory_space<vmem>>, vector<1x1x8x384xbf16>
    %103 = vector.shape_cast %102 : vector<1x1x8x384xbf16> to vector<8x384xbf16>
    %c0_147 = arith.constant 0 : index
    %c0_148 = arith.constant 0 : index
    %104 = vector.load %arg7[%c0_147, %c0_148] : memref<216x384xbf16, #tpu.memory_space<vmem>>, vector<8x384xbf16>
    tpu.vector_store %arg7[%c0_147, %c0_148], %103 {strides = array<i32>} : memref<216x384xbf16, #tpu.memory_space<vmem>>, vector<8x384xbf16>,
    %c0_149 = arith.constant 0 : index
    %c1_150 = arith.constant 1 : index
    %c0_151 = arith.constant 0 : index
    %c1_152 = arith.constant 1 : index
    %105 = vector.load %arg2[%c0_149, %c1_150, %c0_151, %c1_152] : memref<1x6x8x512xbf16, #tpu.memory_space<vmem>>, vector<1x1x8x384xbf16>
    %106 = vector.shape_cast %105 : vector<1x1x8x384xbf16> to vector<8x384xbf16>
    %c8_153 = arith.constant 8 : index
    %c0_154 = arith.constant 0 : index
    %107 = vector.load %arg7[%c8_153, %c0_154] : memref<216x384xbf16, #tpu.memory_space<vmem>>, vector<8x384xbf16>
    tpu.vector_store %arg7[%c8_153, %c0_154], %106 {strides = array<i32>} : memref<216x384xbf16, #tpu.memory_space<vmem>>, vector<8x384xbf16>,
    %c0_155 = arith.constant 0 : index
    %c1_156 = arith.constant 1 : index
    %c0_157 = arith.constant 0 : index
    %c2_158 = arith.constant 2 : index
    %108 = vector.load %arg2[%c0_155, %c1_156, %c0_157, %c2_158] : memref<1x6x8x512xbf16, #tpu.memory_space<vmem>>, vector<1x1x8x384xbf16>
    %109 = vector.shape_cast %108 : vector<1x1x8x384xbf16> to vector<8x384xbf16>
    %c16_159 = arith.constant 16 : index
    %c0_160 = arith.constant 0 : index
    %110 = vector.load %arg7[%c16_159, %c0_160] : memref<216x384xbf16, #tpu.memory_space<vmem>>, vector<8x384xbf16>
    tpu.vector_store %arg7[%c16_159, %c0_160], %109 {strides = array<i32>} : memref<216x384xbf16, #tpu.memory_space<vmem>>, vector<8x384xbf16>,
    %c0_161 = arith.constant 0 : index
    %c1_162 = arith.constant 1 : index
    %c0_163 = arith.constant 0 : index
    %c18_164 = arith.constant 18 : index
    %111 = vector.load %arg2[%c0_161, %c1_162, %c0_163, %c18_164] : memref<1x6x8x512xbf16, #tpu.memory_space<vmem>>, vector<1x1x8x384xbf16>
    %112 = vector.shape_cast %111 : vector<1x1x8x384xbf16> to vector<8x384xbf16>
    %c24_165 = arith.constant 24 : index
    %c0_166 = arith.constant 0 : index
    %113 = vector.load %arg7[%c24_165, %c0_166] : memref<216x384xbf16, #tpu.memory_space<vmem>>, vector<8x384xbf16>
    tpu.vector_store %arg7[%c24_165, %c0_166], %112 {strides = array<i32>} : memref<216x384xbf16, #tpu.memory_space<vmem>>, vector<8x384xbf16>,
    %c0_167 = arith.constant 0 : index
    %c1_168 = arith.constant 1 : index
    %c0_169 = arith.constant 0 : index
    %c19_170 = arith.constant 19 : index
    %114 = vector.load %arg2[%c0_167, %c1_168, %c0_169, %c19_170] : memref<1x6x8x512xbf16, #tpu.memory_space<vmem>>, vector<1x1x8x384xbf16>
    %115 = vector.shape_cast %114 : vector<1x1x8x384xbf16> to vector<8x384xbf16>
    %c32_171 = arith.constant 32 : index
    %c0_172 = arith.constant 0 : index
    %116 = vector.load %arg7[%c32_171, %c0_172] : memref<216x384xbf16, #tpu.memory_space<vmem>>, vector<8x384xbf16>
    tpu.vector_store %arg7[%c32_171, %c0_172], %115 {strides = array<i32>} : memref<216x384xbf16, #tpu.memory_space<vmem>>, vector<8x384xbf16>,
    %c0_173 = arith.constant 0 : index
    %c1_174 = arith.constant 1 : index
    %c0_175 = arith.constant 0 : index
    %c20_176 = arith.constant 20 : index
    %117 = vector.load %arg2[%c0_173, %c1_174, %c0_175, %c20_176] : memref<1x6x8x512xbf16, #tpu.memory_space<vmem>>, vector<1x1x8x384xbf16>
    %118 = vector.shape_cast %117 : vector<1x1x8x384xbf16> to vector<8x384xbf16>
    %c40_177 = arith.constant 40 : index
    %c0_178 = arith.constant 0 : index
    %119 = vector.load %arg7[%c40_177, %c0_178] : memref<216x384xbf16, #tpu.memory_space<vmem>>, vector<8x384xbf16>
    tpu.vector_store %arg7[%c40_177, %c0_178], %118 {strides = array<i32>} : memref<216x384xbf16, #tpu.memory_space<vmem>>, vector<8x384xbf16>,
    %c0_179 = arith.constant 0 : index
    %c1_180 = arith.constant 1 : index
    %c0_181 = arith.constant 0 : index
    %c36_182 = arith.constant 36 : index
    %120 = vector.load %arg2[%c0_179, %c1_180, %c0_181, %c36_182] : memref<1x6x8x512xbf16, #tpu.memory_space<vmem>>, vector<1x1x8x384xbf16>
    %121 = vector.shape_cast %120 : vector<1x1x8x384xbf16> to vector<8x384xbf16>
    %c48_183 = arith.constant 48 : index
    %c0_184 = arith.constant 0 : index
    %122 = vector.load %arg7[%c48_183, %c0_184] : memref<216x384xbf16, #tpu.memory_space<vmem>>, vector<8x384xbf16>
    tpu.vector_store %arg7[%c48_183, %c0_184], %121 {strides = array<i32>} : memref<216x384xbf16, #tpu.memory_space<vmem>>, vector<8x384xbf16>,
    %c0_185 = arith.constant 0 : index
    %c1_186 = arith.constant 1 : index
    %c0_187 = arith.constant 0 : index
    %c37_188 = arith.constant 37 : index
    %123 = vector.load %arg2[%c0_185, %c1_186, %c0_187, %c37_188] : memref<1x6x8x512xbf16, #tpu.memory_space<vmem>>, vector<1x1x8x384xbf16>
    %124 = vector.shape_cast %123 : vector<1x1x8x384xbf16> to vector<8x384xbf16>
    %c56_189 = arith.constant 56 : index
    %c0_190 = arith.constant 0 : index
    %125 = vector.load %arg7[%c56_189, %c0_190] : memref<216x384xbf16, #tpu.memory_space<vmem>>, vector<8x384xbf16>
    tpu.vector_store %arg7[%c56_189, %c0_190], %124 {strides = array<i32>} : memref<216x384xbf16, #tpu.memory_space<vmem>>, vector<8x384xbf16>,
    %c0_191 = arith.constant 0 : index
    %c1_192 = arith.constant 1 : index
    %c0_193 = arith.constant 0 : index
    %c38_194 = arith.constant 38 : index
    %126 = vector.load %arg2[%c0_191, %c1_192, %c0_193, %c38_194] : memref<1x6x8x512xbf16, #tpu.memory_space<vmem>>, vector<1x1x8x384xbf16>
    %127 = vector.shape_cast %126 : vector<1x1x8x384xbf16> to vector<8x384xbf16>
    %c64_195 = arith.constant 64 : index
    %c0_196 = arith.constant 0 : index
    %128 = vector.load %arg7[%c64_195, %c0_196] : memref<216x384xbf16, #tpu.memory_space<vmem>>, vector<8x384xbf16>
    tpu.vector_store %arg7[%c64_195, %c0_196], %127 {strides = array<i32>} : memref<216x384xbf16, #tpu.memory_space<vmem>>, vector<8x384xbf16>,
    %c0_197 = arith.constant 0 : index
    %c2_198 = arith.constant 2 : index
    %c0_199 = arith.constant 0 : index
    %c0_200 = arith.constant 0 : index
    %129 = vector.load %arg2[%c0_197, %c2_198, %c0_199, %c0_200] : memref<1x6x8x512xbf16, #tpu.memory_space<vmem>>, vector<1x1x8x384xbf16>
    %130 = vector.shape_cast %129 : vector<1x1x8x384xbf16> to vector<8x384xbf16>
    %c72_201 = arith.constant 72 : index
    %c0_202 = arith.constant 0 : index
    %131 = vector.load %arg7[%c72_201, %c0_202] : memref<216x384xbf16, #tpu.memory_space<vmem>>, vector<8x384xbf16>
    tpu.vector_store %arg7[%c72_201, %c0_202], %130 {strides = array<i32>} : memref<216x384xbf16, #tpu.memory_space<vmem>>, vector<8x384xbf16>,
    %c0_203 = arith.constant 0 : index
    %c2_204 = arith.constant 2 : index
    %c0_205 = arith.constant 0 : index
    %c1_206 = arith.constant 1 : index
    %132 = vector.load %arg2[%c0_203, %c2_204, %c0_205, %c1_206] : memref<1x6x8x512xbf16, #tpu.memory_space<vmem>>, vector<1x1x8x384xbf16>
    %133 = vector.shape_cast %132 : vector<1x1x8x384xbf16> to vector<8x384xbf16>
    %c80_207 = arith.constant 80 : index
    %c0_208 = arith.constant 0 : index
    %134 = vector.load %arg7[%c80_207, %c0_208] : memref<216x384xbf16, #tpu.memory_space<vmem>>, vector<8x384xbf16>
    tpu.vector_store %arg7[%c80_207, %c0_208], %133 {strides = array<i32>} : memref<216x384xbf16, #tpu.memory_space<vmem>>, vector<8x384xbf16>,
    %c0_209 = arith.constant 0 : index
    %c2_210 = arith.constant 2 : index
    %c0_211 = arith.constant 0 : index
    %c2_212 = arith.constant 2 : index
    %135 = vector.load %arg2[%c0_209, %c2_210, %c0_211, %c2_212] : memref<1x6x8x512xbf16, #tpu.memory_space<vmem>>, vector<1x1x8x384xbf16>
    %136 = vector.shape_cast %135 : vector<1x1x8x384xbf16> to vector<8x384xbf16>
    %c88_213 = arith.constant 88 : index
    %c0_214 = arith.constant 0 : index
    %137 = vector.load %arg7[%c88_213, %c0_214] : memref<216x384xbf16, #tpu.memory_space<vmem>>, vector<8x384xbf16>
    tpu.vector_store %arg7[%c88_213, %c0_214], %136 {strides = array<i32>} : memref<216x384xbf16, #tpu.memory_space<vmem>>, vector<8x384xbf16>,
    %c0_215 = arith.constant 0 : index
    %c2_216 = arith.constant 2 : index
    %c0_217 = arith.constant 0 : index
    %c18_218 = arith.constant 18 : index
    %138 = vector.load %arg2[%c0_215, %c2_216, %c0_217, %c18_218] : memref<1x6x8x512xbf16, #tpu.memory_space<vmem>>, vector<1x1x8x384xbf16>
    %139 = vector.shape_cast %138 : vector<1x1x8x384xbf16> to vector<8x384xbf16>
    %c96_219 = arith.constant 96 : index
    %c0_220 = arith.constant 0 : index
    %140 = vector.load %arg7[%c96_219, %c0_220] : memref<216x384xbf16, #tpu.memory_space<vmem>>, vector<8x384xbf16>
    tpu.vector_store %arg7[%c96_219, %c0_220], %139 {strides = array<i32>} : memref<216x384xbf16, #tpu.memory_space<vmem>>, vector<8x384xbf16>,
    %c0_221 = arith.constant 0 : index
    %c2_222 = arith.constant 2 : index
    %c0_223 = arith.constant 0 : index
    %c19_224 = arith.constant 19 : index
    %141 = vector.load %arg2[%c0_221, %c2_222, %c0_223, %c19_224] : memref<1x6x8x512xbf16, #tpu.memory_space<vmem>>, vector<1x1x8x384xbf16>
    %142 = vector.shape_cast %141 : vector<1x1x8x384xbf16> to vector<8x384xbf16>
    %c104_225 = arith.constant 104 : index
    %c0_226 = arith.constant 0 : index
    %143 = vector.load %arg7[%c104_225, %c0_226] : memref<216x384xbf16, #tpu.memory_space<vmem>>, vector<8x384xbf16>
    tpu.vector_store %arg7[%c104_225, %c0_226], %142 {strides = array<i32>} : memref<216x384xbf16, #tpu.memory_space<vmem>>, vector<8x384xbf16>,
    %c0_227 = arith.constant 0 : index
    %c2_228 = arith.constant 2 : index
    %c0_229 = arith.constant 0 : index
    %c20_230 = arith.constant 20 : index
    %144 = vector.load %arg2[%c0_227, %c2_228, %c0_229, %c20_230] : memref<1x6x8x512xbf16, #tpu.memory_space<vmem>>, vector<1x1x8x384xbf16>
    %145 = vector.shape_cast %144 : vector<1x1x8x384xbf16> to vector<8x384xbf16>
    %c112_231 = arith.constant 112 : index
    %c0_232 = arith.constant 0 : index
    %146 = vector.load %arg7[%c112_231, %c0_232] : memref<216x384xbf16, #tpu.memory_space<vmem>>, vector<8x384xbf16>
    tpu.vector_store %arg7[%c112_231, %c0_232], %145 {strides = array<i32>} : memref<216x384xbf16, #tpu.memory_space<vmem>>, vector<8x384xbf16>,
    %c0_233 = arith.constant 0 : index
    %c2_234 = arith.constant 2 : index
    %c0_235 = arith.constant 0 : index
    %c36_236 = arith.constant 36 : index
    %147 = vector.load %arg2[%c0_233, %c2_234, %c0_235, %c36_236] : memref<1x6x8x512xbf16, #tpu.memory_space<vmem>>, vector<1x1x8x384xbf16>
    %148 = vector.shape_cast %147 : vector<1x1x8x384xbf16> to vector<8x384xbf16>
    %c120_237 = arith.constant 120 : index
    %c0_238 = arith.constant 0 : index
    %149 = vector.load %arg7[%c120_237, %c0_238] : memref<216x384xbf16, #tpu.memory_space<vmem>>, vector<8x384xbf16>
    tpu.vector_store %arg7[%c120_237, %c0_238], %148 {strides = array<i32>} : memref<216x384xbf16, #tpu.memory_space<vmem>>, vector<8x384xbf16>,
    %c0_239 = arith.constant 0 : index
    %c2_240 = arith.constant 2 : index
    %c0_241 = arith.constant 0 : index
    %c37_242 = arith.constant 37 : index
    %150 = vector.load %arg2[%c0_239, %c2_240, %c0_241, %c37_242] : memref<1x6x8x512xbf16, #tpu.memory_space<vmem>>, vector<1x1x8x384xbf16>
    %151 = vector.shape_cast %150 : vector<1x1x8x384xbf16> to vector<8x384xbf16>
    %c128_243 = arith.constant 128 : index
    %c0_244 = arith.constant 0 : index
    %152 = vector.load %arg7[%c128_243, %c0_244] : memref<216x384xbf16, #tpu.memory_space<vmem>>, vector<8x384xbf16>
    tpu.vector_store %arg7[%c128_243, %c0_244], %151 {strides = array<i32>} : memref<216x384xbf16, #tpu.memory_space<vmem>>, vector<8x384xbf16>,
    %c0_245 = arith.constant 0 : index
    %c2_246 = arith.constant 2 : index
    %c0_247 = arith.constant 0 : index
    %c38_248 = arith.constant 38 : index
    %153 = vector.load %arg2[%c0_245, %c2_246, %c0_247, %c38_248] : memref<1x6x8x512xbf16, #tpu.memory_space<vmem>>, vector<1x1x8x384xbf16>
    %154 = vector.shape_cast %153 : vector<1x1x8x384xbf16> to vector<8x384xbf16>
    %c136_249 = arith.constant 136 : index
    %c0_250 = arith.constant 0 : index
    %155 = vector.load %arg7[%c136_249, %c0_250] : memref<216x384xbf16, #tpu.memory_space<vmem>>, vector<8x384xbf16>
    tpu.vector_store %arg7[%c136_249, %c0_250], %154 {strides = array<i32>} : memref<216x384xbf16, #tpu.memory_space<vmem>>, vector<8x384xbf16>,
    %c0_251 = arith.constant 0 : index
    %c3 = arith.constant 3 : index
    %c0_252 = arith.constant 0 : index
    %c0_253 = arith.constant 0 : index
    %156 = vector.load %arg2[%c0_251, %c3, %c0_252, %c0_253] : memref<1x6x8x512xbf16, #tpu.memory_space<vmem>>, vector<1x1x8x384xbf16>
    %157 = vector.shape_cast %156 : vector<1x1x8x384xbf16> to vector<8x384xbf16>
    %c144_254 = arith.constant 144 : index
    %c0_255 = arith.constant 0 : index
    %158 = vector.load %arg7[%c144_254, %c0_255] : memref<216x384xbf16, #tpu.memory_space<vmem>>, vector<8x384xbf16>
    tpu.vector_store %arg7[%c144_254, %c0_255], %157 {strides = array<i32>} : memref<216x384xbf16, #tpu.memory_space<vmem>>, vector<8x384xbf16>,
    %c0_256 = arith.constant 0 : index
    %c3_257 = arith.constant 3 : index
    %c0_258 = arith.constant 0 : index
    %c1_259 = arith.constant 1 : index
    %159 = vector.load %arg2[%c0_256, %c3_257, %c0_258, %c1_259] : memref<1x6x8x512xbf16, #tpu.memory_space<vmem>>, vector<1x1x8x384xbf16>
    %160 = vector.shape_cast %159 : vector<1x1x8x384xbf16> to vector<8x384xbf16>
    %c152_260 = arith.constant 152 : index
    %c0_261 = arith.constant 0 : index
    %161 = vector.load %arg7[%c152_260, %c0_261] : memref<216x384xbf16, #tpu.memory_space<vmem>>, vector<8x384xbf16>
    tpu.vector_store %arg7[%c152_260, %c0_261], %160 {strides = array<i32>} : memref<216x384xbf16, #tpu.memory_space<vmem>>, vector<8x384xbf16>,
    %c0_262 = arith.constant 0 : index
    %c3_263 = arith.constant 3 : index
    %c0_264 = arith.constant 0 : index
    %c2_265 = arith.constant 2 : index
    %162 = vector.load %arg2[%c0_262, %c3_263, %c0_264, %c2_265] : memref<1x6x8x512xbf16, #tpu.memory_space<vmem>>, vector<1x1x8x384xbf16>
    %163 = vector.shape_cast %162 : vector<1x1x8x384xbf16> to vector<8x384xbf16>
    %c160_266 = arith.constant 160 : index
    %c0_267 = arith.constant 0 : index
    %164 = vector.load %arg7[%c160_266, %c0_267] : memref<216x384xbf16, #tpu.memory_space<vmem>>, vector<8x384xbf16>
    tpu.vector_store %arg7[%c160_266, %c0_267], %163 {strides = array<i32>} : memref<216x384xbf16, #tpu.memory_space<vmem>>, vector<8x384xbf16>,
    %c0_268 = arith.constant 0 : index
    %c3_269 = arith.constant 3 : index
    %c0_270 = arith.constant 0 : index
    %c18_271 = arith.constant 18 : index
    %165 = vector.load %arg2[%c0_268, %c3_269, %c0_270, %c18_271] : memref<1x6x8x512xbf16, #tpu.memory_space<vmem>>, vector<1x1x8x384xbf16>
    %166 = vector.shape_cast %165 : vector<1x1x8x384xbf16> to vector<8x384xbf16>
    %c168_272 = arith.constant 168 : index
    %c0_273 = arith.constant 0 : index
    %167 = vector.load %arg7[%c168_272, %c0_273] : memref<216x384xbf16, #tpu.memory_space<vmem>>, vector<8x384xbf16>
    tpu.vector_store %arg7[%c168_272, %c0_273], %166 {strides = array<i32>} : memref<216x384xbf16, #tpu.memory_space<vmem>>, vector<8x384xbf16>,
    %c0_274 = arith.constant 0 : index
    %c3_275 = arith.constant 3 : index
    %c0_276 = arith.constant 0 : index
    %c19_277 = arith.constant 19 : index
    %168 = vector.load %arg2[%c0_274, %c3_275, %c0_276, %c19_277] : memref<1x6x8x512xbf16, #tpu.memory_space<vmem>>, vector<1x1x8x384xbf16>
    %169 = vector.shape_cast %168 : vector<1x1x8x384xbf16> to vector<8x384xbf16>
    %c176_278 = arith.constant 176 : index
    %c0_279 = arith.constant 0 : index
    %170 = vector.load %arg7[%c176_278, %c0_279] : memref<216x384xbf16, #tpu.memory_space<vmem>>, vector<8x384xbf16>
    tpu.vector_store %arg7[%c176_278, %c0_279], %169 {strides = array<i32>} : memref<216x384xbf16, #tpu.memory_space<vmem>>, vector<8x384xbf16>,
    %c0_280 = arith.constant 0 : index
    %c3_281 = arith.constant 3 : index
    %c0_282 = arith.constant 0 : index
    %c20_283 = arith.constant 20 : index
    %171 = vector.load %arg2[%c0_280, %c3_281, %c0_282, %c20_283] : memref<1x6x8x512xbf16, #tpu.memory_space<vmem>>, vector<1x1x8x384xbf16>
    %172 = vector.shape_cast %171 : vector<1x1x8x384xbf16> to vector<8x384xbf16>
    %c184_284 = arith.constant 184 : index
    %c0_285 = arith.constant 0 : index
    %173 = vector.load %arg7[%c184_284, %c0_285] : memref<216x384xbf16, #tpu.memory_space<vmem>>, vector<8x384xbf16>
    tpu.vector_store %arg7[%c184_284, %c0_285], %172 {strides = array<i32>} : memref<216x384xbf16, #tpu.memory_space<vmem>>, vector<8x384xbf16>,
    %c0_286 = arith.constant 0 : index
    %c3_287 = arith.constant 3 : index
    %c0_288 = arith.constant 0 : index
    %c36_289 = arith.constant 36 : index
    %174 = vector.load %arg2[%c0_286, %c3_287, %c0_288, %c36_289] : memref<1x6x8x512xbf16, #tpu.memory_space<vmem>>, vector<1x1x8x384xbf16>
    %175 = vector.shape_cast %174 : vector<1x1x8x384xbf16> to vector<8x384xbf16>
    %c192_290 = arith.constant 192 : index
    %c0_291 = arith.constant 0 : index
    %176 = vector.load %arg7[%c192_290, %c0_291] : memref<216x384xbf16, #tpu.memory_space<vmem>>, vector<8x384xbf16>
    tpu.vector_store %arg7[%c192_290, %c0_291], %175 {strides = array<i32>} : memref<216x384xbf16, #tpu.memory_space<vmem>>, vector<8x384xbf16>,
    %c0_292 = arith.constant 0 : index
    %c3_293 = arith.constant 3 : index
    %c0_294 = arith.constant 0 : index
    %c37_295 = arith.constant 37 : index
    %177 = vector.load %arg2[%c0_292, %c3_293, %c0_294, %c37_295] : memref<1x6x8x512xbf16, #tpu.memory_space<vmem>>, vector<1x1x8x384xbf16>
    %178 = vector.shape_cast %177 : vector<1x1x8x384xbf16> to vector<8x384xbf16>
    %c200_296 = arith.constant 200 : index
    %c0_297 = arith.constant 0 : index
    %179 = vector.load %arg7[%c200_296, %c0_297] : memref<216x384xbf16, #tpu.memory_space<vmem>>, vector<8x384xbf16>
    tpu.vector_store %arg7[%c200_296, %c0_297], %178 {strides = array<i32>} : memref<216x384xbf16, #tpu.memory_space<vmem>>, vector<8x384xbf16>,
    %c0_298 = arith.constant 0 : index
    %c3_299 = arith.constant 3 : index
    %c0_300 = arith.constant 0 : index
    %c38_301 = arith.constant 38 : index
    %180 = vector.load %arg2[%c0_298, %c3_299, %c0_300, %c38_301] : memref<1x6x8x512xbf16, #tpu.memory_space<vmem>>, vector<1x1x8x384xbf16>
    %181 = vector.shape_cast %180 : vector<1x1x8x384xbf16> to vector<8x384xbf16>
    %c208_302 = arith.constant 208 : index
    %c0_303 = arith.constant 0 : index
    %182 = vector.load %arg7[%c208_302, %c0_303] : memref<216x384xbf16, #tpu.memory_space<vmem>>, vector<8x384xbf16>
    tpu.vector_store %arg7[%c208_302, %c0_303], %181 {strides = array<i32>} : memref<216x384xbf16, #tpu.memory_space<vmem>>, vector<8x384xbf16>,
    %c0_304 = arith.constant 0 : index
    %c0_305 = arith.constant 0 : index
    %183 = vector.load %arg7[%c0_304, %c0_305] : memref<216x384xbf16, #tpu.memory_space<vmem>>, vector<216x384xbf16>
    %cst_306 = arith.constant dense<0.000000e+00> : vector<8x384xf32>
    %184 = tpu.matmul %0, %183, %cst_306 {dimension_numbers = #tpu.dot_dimension_numbers<[1], [0], [0], [1], [0, 0, 1, 1], [], []>} : vector<8x216xbf16>, vector<216x384xbf16>, vector<8x384xf32> -> vector<8x384xf32>
    %185 = vector.broadcast %1 : vector<8x1xf32> to vector<8x384xf32>
    %186 = arith.addf %184, %185 : vector<8x384xf32>
    %cst_307 = arith.constant 0.000000e+00 : f32
    %187 = vector.broadcast %cst_307 : f32 to vector<8x384xf32>
    %188 = arith.cmpf oge, %186, %187 : vector<8x384xf32>
    %cst_308 = arith.constant 2.000000e-01 : f32
    %189 = vector.broadcast %cst_308 : f32 to vector<8x384xf32>
    %190 = arith.mulf %189, %186 : vector<8x384xf32>
    %191 = arith.select %188, %186, %190 : vector<8x384xi1>, vector<8x384xf32>
    %c0_309 = arith.constant 0 : index
    %c1_310 = arith.constant 1 : index
    %c0_311 = arith.constant 0 : index
    %c0_312 = arith.constant 0 : index
    %192 = vector.load %arg6[%c0_309, %c1_310, %c0_311, %c0_312] : memref<1x4x8x384xf32, #tpu.memory_space<vmem>>, vector<1x1x8x384xf32>
    %193 = vector.shape_cast %192 : vector<1x1x8x384xf32> to vector<8x384xf32>
    %194 = vector.shape_cast %191 : vector<8x384xf32> to vector<1x1x8x384xf32>
    tpu.vector_store %arg6[%c0_309, %c1_310, %c0_311, %c0_312], %194 {strides = array<i32>} : memref<1x4x8x384xf32, #tpu.memory_space<vmem>>, vector<1x1x8x384xf32>,
    %195 = vector.broadcast %2 : vector<1x384xf32> to vector<8x384xf32>
    %196 = arith.mulf %191, %195 : vector<8x384xf32>
    %cst_313 = arith.constant dense<0.000000e+00> : vector<8xf32>
    %197 = vector.multi_reduction <add>, %196, %cst_313 [1] : vector<8x384xf32> to vector<8xf32>
    %198 = vector.shape_cast %197 : vector<8xf32> to vector<8x1xf32>
    %199 = arith.addf %101, %198 : vector<8x1xf32>
    %c0_314 = arith.constant 0 : index
    %c2_315 = arith.constant 2 : index
    %c0_316 = arith.constant 0 : index
    %c0_317 = arith.constant 0 : index
    %200 = vector.load %arg2[%c0_314, %c2_315, %c0_316, %c0_317] : memref<1x6x8x512xbf16, #tpu.memory_space<vmem>>, vector<1x1x8x384xbf16>
    %201 = vector.shape_cast %200 : vector<1x1x8x384xbf16> to vector<8x384xbf16>
    %c0_318 = arith.constant 0 : index
    %c0_319 = arith.constant 0 : index
    %202 = vector.load %arg7[%c0_318, %c0_319] : memref<216x384xbf16, #tpu.memory_space<vmem>>, vector<8x384xbf16>
    tpu.vector_store %arg7[%c0_318, %c0_319], %201 {strides = array<i32>} : memref<216x384xbf16, #tpu.memory_space<vmem>>, vector<8x384xbf16>,
    %c0_320 = arith.constant 0 : index
    %c2_321 = arith.constant 2 : index
    %c0_322 = arith.constant 0 : index
    %c1_323 = arith.constant 1 : index
    %203 = vector.load %arg2[%c0_320, %c2_321, %c0_322, %c1_323] : memref<1x6x8x512xbf16, #tpu.memory_space<vmem>>, vector<1x1x8x384xbf16>
    %204 = vector.shape_cast %203 : vector<1x1x8x384xbf16> to vector<8x384xbf16>
    %c8_324 = arith.constant 8 : index
    %c0_325 = arith.constant 0 : index
    %205 = vector.load %arg7[%c8_324, %c0_325] : memref<216x384xbf16, #tpu.memory_space<vmem>>, vector<8x384xbf16>
    tpu.vector_store %arg7[%c8_324, %c0_325], %204 {strides = array<i32>} : memref<216x384xbf16, #tpu.memory_space<vmem>>, vector<8x384xbf16>,
    %c0_326 = arith.constant 0 : index
    %c2_327 = arith.constant 2 : index
    %c0_328 = arith.constant 0 : index
    %c2_329 = arith.constant 2 : index
    %206 = vector.load %arg2[%c0_326, %c2_327, %c0_328, %c2_329] : memref<1x6x8x512xbf16, #tpu.memory_space<vmem>>, vector<1x1x8x384xbf16>
    %207 = vector.shape_cast %206 : vector<1x1x8x384xbf16> to vector<8x384xbf16>
    %c16_330 = arith.constant 16 : index
    %c0_331 = arith.constant 0 : index
    %208 = vector.load %arg7[%c16_330, %c0_331] : memref<216x384xbf16, #tpu.memory_space<vmem>>, vector<8x384xbf16>
    tpu.vector_store %arg7[%c16_330, %c0_331], %207 {strides = array<i32>} : memref<216x384xbf16, #tpu.memory_space<vmem>>, vector<8x384xbf16>,
    %c0_332 = arith.constant 0 : index
    %c2_333 = arith.constant 2 : index
    %c0_334 = arith.constant 0 : index
    %c18_335 = arith.constant 18 : index
    %209 = vector.load %arg2[%c0_332, %c2_333, %c0_334, %c18_335] : memref<1x6x8x512xbf16, #tpu.memory_space<vmem>>, vector<1x1x8x384xbf16>
    %210 = vector.shape_cast %209 : vector<1x1x8x384xbf16> to vector<8x384xbf16>
    %c24_336 = arith.constant 24 : index
    %c0_337 = arith.constant 0 : index
    %211 = vector.load %arg7[%c24_336, %c0_337] : memref<216x384xbf16, #tpu.memory_space<vmem>>, vector<8x384xbf16>
    tpu.vector_store %arg7[%c24_336, %c0_337], %210 {strides = array<i32>} : memref<216x384xbf16, #tpu.memory_space<vmem>>, vector<8x384xbf16>,
    %c0_338 = arith.constant 0 : index
    %c2_339 = arith.constant 2 : index
    %c0_340 = arith.constant 0 : index
    %c19_341 = arith.constant 19 : index
    %212 = vector.load %arg2[%c0_338, %c2_339, %c0_340, %c19_341] : memref<1x6x8x512xbf16, #tpu.memory_space<vmem>>, vector<1x1x8x384xbf16>
    %213 = vector.shape_cast %212 : vector<1x1x8x384xbf16> to vector<8x384xbf16>
    %c32_342 = arith.constant 32 : index
    %c0_343 = arith.constant 0 : index
    %214 = vector.load %arg7[%c32_342, %c0_343] : memref<216x384xbf16, #tpu.memory_space<vmem>>, vector<8x384xbf16>
    tpu.vector_store %arg7[%c32_342, %c0_343], %213 {strides = array<i32>} : memref<216x384xbf16, #tpu.memory_space<vmem>>, vector<8x384xbf16>,
    %c0_344 = arith.constant 0 : index
    %c2_345 = arith.constant 2 : index
    %c0_346 = arith.constant 0 : index
    %c20_347 = arith.constant 20 : index
    %215 = vector.load %arg2[%c0_344, %c2_345, %c0_346, %c20_347] : memref<1x6x8x512xbf16, #tpu.memory_space<vmem>>, vector<1x1x8x384xbf16>
    %216 = vector.shape_cast %215 : vector<1x1x8x384xbf16> to vector<8x384xbf16>
    %c40_348 = arith.constant 40 : index
    %c0_349 = arith.constant 0 : index
    %217 = vector.load %arg7[%c40_348, %c0_349] : memref<216x384xbf16, #tpu.memory_space<vmem>>, vector<8x384xbf16>
    tpu.vector_store %arg7[%c40_348, %c0_349], %216 {strides = array<i32>} : memref<216x384xbf16, #tpu.memory_space<vmem>>, vector<8x384xbf16>,
    %c0_350 = arith.constant 0 : index
    %c2_351 = arith.constant 2 : index
    %c0_352 = arith.constant 0 : index
    %c36_353 = arith.constant 36 : index
    %218 = vector.load %arg2[%c0_350, %c2_351, %c0_352, %c36_353] : memref<1x6x8x512xbf16, #tpu.memory_space<vmem>>, vector<1x1x8x384xbf16>
    %219 = vector.shape_cast %218 : vector<1x1x8x384xbf16> to vector<8x384xbf16>
    %c48_354 = arith.constant 48 : index
    %c0_355 = arith.constant 0 : index
    %220 = vector.load %arg7[%c48_354, %c0_355] : memref<216x384xbf16, #tpu.memory_space<vmem>>, vector<8x384xbf16>
    tpu.vector_store %arg7[%c48_354, %c0_355], %219 {strides = array<i32>} : memref<216x384xbf16, #tpu.memory_space<vmem>>, vector<8x384xbf16>,
    %c0_356 = arith.constant 0 : index
    %c2_357 = arith.constant 2 : index
    %c0_358 = arith.constant 0 : index
    %c37_359 = arith.constant 37 : index
    %221 = vector.load %arg2[%c0_356, %c2_357, %c0_358, %c37_359] : memref<1x6x8x512xbf16, #tpu.memory_space<vmem>>, vector<1x1x8x384xbf16>
    %222 = vector.shape_cast %221 : vector<1x1x8x384xbf16> to vector<8x384xbf16>
    %c56_360 = arith.constant 56 : index
    %c0_361 = arith.constant 0 : index
    %223 = vector.load %arg7[%c56_360, %c0_361] : memref<216x384xbf16, #tpu.memory_space<vmem>>, vector<8x384xbf16>
    tpu.vector_store %arg7[%c56_360, %c0_361], %222 {strides = array<i32>} : memref<216x384xbf16, #tpu.memory_space<vmem>>, vector<8x384xbf16>,
    %c0_362 = arith.constant 0 : index
    %c2_363 = arith.constant 2 : index
    %c0_364 = arith.constant 0 : index
    %c38_365 = arith.constant 38 : index
    %224 = vector.load %arg2[%c0_362, %c2_363, %c0_364, %c38_365] : memref<1x6x8x512xbf16, #tpu.memory_space<vmem>>, vector<1x1x8x384xbf16>
    %225 = vector.shape_cast %224 : vector<1x1x8x384xbf16> to vector<8x384xbf16>
    %c64_366 = arith.constant 64 : index
    %c0_367 = arith.constant 0 : index
    %226 = vector.load %arg7[%c64_366, %c0_367] : memref<216x384xbf16, #tpu.memory_space<vmem>>, vector<8x384xbf16>
    tpu.vector_store %arg7[%c64_366, %c0_367], %225 {strides = array<i32>} : memref<216x384xbf16, #tpu.memory_space<vmem>>, vector<8x384xbf16>,
    %c0_368 = arith.constant 0 : index
    %c3_369 = arith.constant 3 : index
    %c0_370 = arith.constant 0 : index
    %c0_371 = arith.constant 0 : index
    %227 = vector.load %arg2[%c0_368, %c3_369, %c0_370, %c0_371] : memref<1x6x8x512xbf16, #tpu.memory_space<vmem>>, vector<1x1x8x384xbf16>
    %228 = vector.shape_cast %227 : vector<1x1x8x384xbf16> to vector<8x384xbf16>
    %c72_372 = arith.constant 72 : index
    %c0_373 = arith.constant 0 : index
    %229 = vector.load %arg7[%c72_372, %c0_373] : memref<216x384xbf16, #tpu.memory_space<vmem>>, vector<8x384xbf16>
    tpu.vector_store %arg7[%c72_372, %c0_373], %228 {strides = array<i32>} : memref<216x384xbf16, #tpu.memory_space<vmem>>, vector<8x384xbf16>,
    %c0_374 = arith.constant 0 : index
    %c3_375 = arith.constant 3 : index
    %c0_376 = arith.constant 0 : index
    %c1_377 = arith.constant 1 : index
    %230 = vector.load %arg2[%c0_374, %c3_375, %c0_376, %c1_377] : memref<1x6x8x512xbf16, #tpu.memory_space<vmem>>, vector<1x1x8x384xbf16>
    %231 = vector.shape_cast %230 : vector<1x1x8x384xbf16> to vector<8x384xbf16>
    %c80_378 = arith.constant 80 : index
    %c0_379 = arith.constant 0 : index
    %232 = vector.load %arg7[%c80_378, %c0_379] : memref<216x384xbf16, #tpu.memory_space<vmem>>, vector<8x384xbf16>
    tpu.vector_store %arg7[%c80_378, %c0_379], %231 {strides = array<i32>} : memref<216x384xbf16, #tpu.memory_space<vmem>>, vector<8x384xbf16>,
    %c0_380 = arith.constant 0 : index
    %c3_381 = arith.constant 3 : index
    %c0_382 = arith.constant 0 : index
    %c2_383 = arith.constant 2 : index
    %233 = vector.load %arg2[%c0_380, %c3_381, %c0_382, %c2_383] : memref<1x6x8x512xbf16, #tpu.memory_space<vmem>>, vector<1x1x8x384xbf16>
    %234 = vector.shape_cast %233 : vector<1x1x8x384xbf16> to vector<8x384xbf16>
    %c88_384 = arith.constant 88 : index
    %c0_385 = arith.constant 0 : index
    %235 = vector.load %arg7[%c88_384, %c0_385] : memref<216x384xbf16, #tpu.memory_space<vmem>>, vector<8x384xbf16>
    tpu.vector_store %arg7[%c88_384, %c0_385], %234 {strides = array<i32>} : memref<216x384xbf16, #tpu.memory_space<vmem>>, vector<8x384xbf16>,
    %c0_386 = arith.constant 0 : index
    %c3_387 = arith.constant 3 : index
    %c0_388 = arith.constant 0 : index
    %c18_389 = arith.constant 18 : index
    %236 = vector.load %arg2[%c0_386, %c3_387, %c0_388, %c18_389] : memref<1x6x8x512xbf16, #tpu.memory_space<vmem>>, vector<1x1x8x384xbf16>
    %237 = vector.shape_cast %236 : vector<1x1x8x384xbf16> to vector<8x384xbf16>
    %c96_390 = arith.constant 96 : index
    %c0_391 = arith.constant 0 : index
    %238 = vector.load %arg7[%c96_390, %c0_391] : memref<216x384xbf16, #tpu.memory_space<vmem>>, vector<8x384xbf16>
    tpu.vector_store %arg7[%c96_390, %c0_391], %237 {strides = array<i32>} : memref<216x384xbf16, #tpu.memory_space<vmem>>, vector<8x384xbf16>,
    %c0_392 = arith.constant 0 : index
    %c3_393 = arith.constant 3 : index
    %c0_394 = arith.constant 0 : index
    %c19_395 = arith.constant 19 : index
    %239 = vector.load %arg2[%c0_392, %c3_393, %c0_394, %c19_395] : memref<1x6x8x512xbf16, #tpu.memory_space<vmem>>, vector<1x1x8x384xbf16>
    %240 = vector.shape_cast %239 : vector<1x1x8x384xbf16> to vector<8x384xbf16>
    %c104_396 = arith.constant 104 : index
    %c0_397 = arith.constant 0 : index
    %241 = vector.load %arg7[%c104_396, %c0_397] : memref<216x384xbf16, #tpu.memory_space<vmem>>, vector<8x384xbf16>
    tpu.vector_store %arg7[%c104_396, %c0_397], %240 {strides = array<i32>} : memref<216x384xbf16, #tpu.memory_space<vmem>>, vector<8x384xbf16>,
    %c0_398 = arith.constant 0 : index
    %c3_399 = arith.constant 3 : index
    %c0_400 = arith.constant 0 : index
    %c20_401 = arith.constant 20 : index
    %242 = vector.load %arg2[%c0_398, %c3_399, %c0_400, %c20_401] : memref<1x6x8x512xbf16, #tpu.memory_space<vmem>>, vector<1x1x8x384xbf16>
    %243 = vector.shape_cast %242 : vector<1x1x8x384xbf16> to vector<8x384xbf16>
    %c112_402 = arith.constant 112 : index
    %c0_403 = arith.constant 0 : index
    %244 = vector.load %arg7[%c112_402, %c0_403] : memref<216x384xbf16, #tpu.memory_space<vmem>>, vector<8x384xbf16>
    tpu.vector_store %arg7[%c112_402, %c0_403], %243 {strides = array<i32>} : memref<216x384xbf16, #tpu.memory_space<vmem>>, vector<8x384xbf16>,
    %c0_404 = arith.constant 0 : index
    %c3_405 = arith.constant 3 : index
    %c0_406 = arith.constant 0 : index
    %c36_407 = arith.constant 36 : index
    %245 = vector.load %arg2[%c0_404, %c3_405, %c0_406, %c36_407] : memref<1x6x8x512xbf16, #tpu.memory_space<vmem>>, vector<1x1x8x384xbf16>
    %246 = vector.shape_cast %245 : vector<1x1x8x384xbf16> to vector<8x384xbf16>
    %c120_408 = arith.constant 120 : index
    %c0_409 = arith.constant 0 : index
    %247 = vector.load %arg7[%c120_408, %c0_409] : memref<216x384xbf16, #tpu.memory_space<vmem>>, vector<8x384xbf16>
    tpu.vector_store %arg7[%c120_408, %c0_409], %246 {strides = array<i32>} : memref<216x384xbf16, #tpu.memory_space<vmem>>, vector<8x384xbf16>,
    %c0_410 = arith.constant 0 : index
    %c3_411 = arith.constant 3 : index
    %c0_412 = arith.constant 0 : index
    %c37_413 = arith.constant 37 : index
    %248 = vector.load %arg2[%c0_410, %c3_411, %c0_412, %c37_413] : memref<1x6x8x512xbf16, #tpu.memory_space<vmem>>, vector<1x1x8x384xbf16>
    %249 = vector.shape_cast %248 : vector<1x1x8x384xbf16> to vector<8x384xbf16>
    %c128_414 = arith.constant 128 : index
    %c0_415 = arith.constant 0 : index
    %250 = vector.load %arg7[%c128_414, %c0_415] : memref<216x384xbf16, #tpu.memory_space<vmem>>, vector<8x384xbf16>
    tpu.vector_store %arg7[%c128_414, %c0_415], %249 {strides = array<i32>} : memref<216x384xbf16, #tpu.memory_space<vmem>>, vector<8x384xbf16>,
    %c0_416 = arith.constant 0 : index
    %c3_417 = arith.constant 3 : index
    %c0_418 = arith.constant 0 : index
    %c38_419 = arith.constant 38 : index
    %251 = vector.load %arg2[%c0_416, %c3_417, %c0_418, %c38_419] : memref<1x6x8x512xbf16, #tpu.memory_space<vmem>>, vector<1x1x8x384xbf16>
    %252 = vector.shape_cast %251 : vector<1x1x8x384xbf16> to vector<8x384xbf16>
    %c136_420 = arith.constant 136 : index
    %c0_421 = arith.constant 0 : index
    %253 = vector.load %arg7[%c136_420, %c0_421] : memref<216x384xbf16, #tpu.memory_space<vmem>>, vector<8x384xbf16>
    tpu.vector_store %arg7[%c136_420, %c0_421], %252 {strides = array<i32>} : memref<216x384xbf16, #tpu.memory_space<vmem>>, vector<8x384xbf16>,
    %c0_422 = arith.constant 0 : index
    %c4 = arith.constant 4 : index
    %c0_423 = arith.constant 0 : index
    %c0_424 = arith.constant 0 : index
    %254 = vector.load %arg2[%c0_422, %c4, %c0_423, %c0_424] : memref<1x6x8x512xbf16, #tpu.memory_space<vmem>>, vector<1x1x8x384xbf16>
    %255 = vector.shape_cast %254 : vector<1x1x8x384xbf16> to vector<8x384xbf16>
    %c144_425 = arith.constant 144 : index
    %c0_426 = arith.constant 0 : index
    %256 = vector.load %arg7[%c144_425, %c0_426] : memref<216x384xbf16, #tpu.memory_space<vmem>>, vector<8x384xbf16>
    tpu.vector_store %arg7[%c144_425, %c0_426], %255 {strides = array<i32>} : memref<216x384xbf16, #tpu.memory_space<vmem>>, vector<8x384xbf16>,
    %c0_427 = arith.constant 0 : index
    %c4_428 = arith.constant 4 : index
    %c0_429 = arith.constant 0 : index
    %c1_430 = arith.constant 1 : index
    %257 = vector.load %arg2[%c0_427, %c4_428, %c0_429, %c1_430] : memref<1x6x8x512xbf16, #tpu.memory_space<vmem>>, vector<1x1x8x384xbf16>
    %258 = vector.shape_cast %257 : vector<1x1x8x384xbf16> to vector<8x384xbf16>
    %c152_431 = arith.constant 152 : index
    %c0_432 = arith.constant 0 : index
    %259 = vector.load %arg7[%c152_431, %c0_432] : memref<216x384xbf16, #tpu.memory_space<vmem>>, vector<8x384xbf16>
    tpu.vector_store %arg7[%c152_431, %c0_432], %258 {strides = array<i32>} : memref<216x384xbf16, #tpu.memory_space<vmem>>, vector<8x384xbf16>,
    %c0_433 = arith.constant 0 : index
    %c4_434 = arith.constant 4 : index
    %c0_435 = arith.constant 0 : index
    %c2_436 = arith.constant 2 : index
    %260 = vector.load %arg2[%c0_433, %c4_434, %c0_435, %c2_436] : memref<1x6x8x512xbf16, #tpu.memory_space<vmem>>, vector<1x1x8x384xbf16>
    %261 = vector.shape_cast %260 : vector<1x1x8x384xbf16> to vector<8x384xbf16>
    %c160_437 = arith.constant 160 : index
    %c0_438 = arith.constant 0 : index
    %262 = vector.load %arg7[%c160_437, %c0_438] : memref<216x384xbf16, #tpu.memory_space<vmem>>, vector<8x384xbf16>
    tpu.vector_store %arg7[%c160_437, %c0_438], %261 {strides = array<i32>} : memref<216x384xbf16, #tpu.memory_space<vmem>>, vector<8x384xbf16>,
    %c0_439 = arith.constant 0 : index
    %c4_440 = arith.constant 4 : index
    %c0_441 = arith.constant 0 : index
    %c18_442 = arith.constant 18 : index
    %263 = vector.load %arg2[%c0_439, %c4_440, %c0_441, %c18_442] : memref<1x6x8x512xbf16, #tpu.memory_space<vmem>>, vector<1x1x8x384xbf16>
    %264 = vector.shape_cast %263 : vector<1x1x8x384xbf16> to vector<8x384xbf16>
    %c168_443 = arith.constant 168 : index
    %c0_444 = arith.constant 0 : index
    %265 = vector.load %arg7[%c168_443, %c0_444] : memref<216x384xbf16, #tpu.memory_space<vmem>>, vector<8x384xbf16>
    tpu.vector_store %arg7[%c168_443, %c0_444], %264 {strides = array<i32>} : memref<216x384xbf16, #tpu.memory_space<vmem>>, vector<8x384xbf16>,
    %c0_445 = arith.constant 0 : index
    %c4_446 = arith.constant 4 : index
    %c0_447 = arith.constant 0 : index
    %c19_448 = arith.constant 19 : index
    %266 = vector.load %arg2[%c0_445, %c4_446, %c0_447, %c19_448] : memref<1x6x8x512xbf16, #tpu.memory_space<vmem>>, vector<1x1x8x384xbf16>
    %267 = vector.shape_cast %266 : vector<1x1x8x384xbf16> to vector<8x384xbf16>
    %c176_449 = arith.constant 176 : index
    %c0_450 = arith.constant 0 : index
    %268 = vector.load %arg7[%c176_449, %c0_450] : memref<216x384xbf16, #tpu.memory_space<vmem>>, vector<8x384xbf16>
    tpu.vector_store %arg7[%c176_449, %c0_450], %267 {strides = array<i32>} : memref<216x384xbf16, #tpu.memory_space<vmem>>, vector<8x384xbf16>,
    %c0_451 = arith.constant 0 : index
    %c4_452 = arith.constant 4 : index
    %c0_453 = arith.constant 0 : index
    %c20_454 = arith.constant 20 : index
    %269 = vector.load %arg2[%c0_451, %c4_452, %c0_453, %c20_454] : memref<1x6x8x512xbf16, #tpu.memory_space<vmem>>, vector<1x1x8x384xbf16>
    %270 = vector.shape_cast %269 : vector<1x1x8x384xbf16> to vector<8x384xbf16>
    %c184_455 = arith.constant 184 : index
    %c0_456 = arith.constant 0 : index
    %271 = vector.load %arg7[%c184_455, %c0_456] : memref<216x384xbf16, #tpu.memory_space<vmem>>, vector<8x384xbf16>
    tpu.vector_store %arg7[%c184_455, %c0_456], %270 {strides = array<i32>} : memref<216x384xbf16, #tpu.memory_space<vmem>>, vector<8x384xbf16>,
    %c0_457 = arith.constant 0 : index
    %c4_458 = arith.constant 4 : index
    %c0_459 = arith.constant 0 : index
    %c36_460 = arith.constant 36 : index
    %272 = vector.load %arg2[%c0_457, %c4_458, %c0_459, %c36_460] : memref<1x6x8x512xbf16, #tpu.memory_space<vmem>>, vector<1x1x8x384xbf16>
    %273 = vector.shape_cast %272 : vector<1x1x8x384xbf16> to vector<8x384xbf16>
    %c192_461 = arith.constant 192 : index
    %c0_462 = arith.constant 0 : index
    %274 = vector.load %arg7[%c192_461, %c0_462] : memref<216x384xbf16, #tpu.memory_space<vmem>>, vector<8x384xbf16>
    tpu.vector_store %arg7[%c192_461, %c0_462], %273 {strides = array<i32>} : memref<216x384xbf16, #tpu.memory_space<vmem>>, vector<8x384xbf16>,
    %c0_463 = arith.constant 0 : index
    %c4_464 = arith.constant 4 : index
    %c0_465 = arith.constant 0 : index
    %c37_466 = arith.constant 37 : index
    %275 = vector.load %arg2[%c0_463, %c4_464, %c0_465, %c37_466] : memref<1x6x8x512xbf16, #tpu.memory_space<vmem>>, vector<1x1x8x384xbf16>
    %276 = vector.shape_cast %275 : vector<1x1x8x384xbf16> to vector<8x384xbf16>
    %c200_467 = arith.constant 200 : index
    %c0_468 = arith.constant 0 : index
    %277 = vector.load %arg7[%c200_467, %c0_468] : memref<216x384xbf16, #tpu.memory_space<vmem>>, vector<8x384xbf16>
    tpu.vector_store %arg7[%c200_467, %c0_468], %276 {strides = array<i32>} : memref<216x384xbf16, #tpu.memory_space<vmem>>, vector<8x384xbf16>,
    %c0_469 = arith.constant 0 : index
    %c4_470 = arith.constant 4 : index
    %c0_471 = arith.constant 0 : index
    %c38_472 = arith.constant 38 : index
    %278 = vector.load %arg2[%c0_469, %c4_470, %c0_471, %c38_472] : memref<1x6x8x512xbf16, #tpu.memory_space<vmem>>, vector<1x1x8x384xbf16>
    %279 = vector.shape_cast %278 : vector<1x1x8x384xbf16> to vector<8x384xbf16>
    %c208_473 = arith.constant 208 : index
    %c0_474 = arith.constant 0 : index
    %280 = vector.load %arg7[%c208_473, %c0_474] : memref<216x384xbf16, #tpu.memory_space<vmem>>, vector<8x384xbf16>
    tpu.vector_store %arg7[%c208_473, %c0_474], %279 {strides = array<i32>} : memref<216x384xbf16, #tpu.memory_space<vmem>>, vector<8x384xbf16>,
    %c0_475 = arith.constant 0 : index
    %c0_476 = arith.constant 0 : index
    %281 = vector.load %arg7[%c0_475, %c0_476] : memref<216x384xbf16, #tpu.memory_space<vmem>>, vector<216x384xbf16>
    %cst_477 = arith.constant dense<0.000000e+00> : vector<8x384xf32>
    %282 = tpu.matmul %0, %281, %cst_477 {dimension_numbers = #tpu.dot_dimension_numbers<[1], [0], [0], [1], [0, 0, 1, 1], [], []>} : vector<8x216xbf16>, vector<216x384xbf16>, vector<8x384xf32> -> vector<8x384xf32>
    %283 = vector.broadcast %1 : vector<8x1xf32> to vector<8x384xf32>
    %284 = arith.addf %282, %283 : vector<8x384xf32>
    %cst_478 = arith.constant 0.000000e+00 : f32
    %285 = vector.broadcast %cst_478 : f32 to vector<8x384xf32>
    %286 = arith.cmpf oge, %284, %285 : vector<8x384xf32>
    %cst_479 = arith.constant 2.000000e-01 : f32
    %287 = vector.broadcast %cst_479 : f32 to vector<8x384xf32>
    %288 = arith.mulf %287, %284 : vector<8x384xf32>
    %289 = arith.select %286, %284, %288 : vector<8x384xi1>, vector<8x384xf32>
    %c0_480 = arith.constant 0 : index
    %c2_481 = arith.constant 2 : index
    %c0_482 = arith.constant 0 : index
    %c0_483 = arith.constant 0 : index
    %290 = vector.load %arg6[%c0_480, %c2_481, %c0_482, %c0_483] : memref<1x4x8x384xf32, #tpu.memory_space<vmem>>, vector<1x1x8x384xf32>
    %291 = vector.shape_cast %290 : vector<1x1x8x384xf32> to vector<8x384xf32>
    %292 = vector.shape_cast %289 : vector<8x384xf32> to vector<1x1x8x384xf32>
    tpu.vector_store %arg6[%c0_480, %c2_481, %c0_482, %c0_483], %292 {strides = array<i32>} : memref<1x4x8x384xf32, #tpu.memory_space<vmem>>, vector<1x1x8x384xf32>,
    %293 = vector.broadcast %2 : vector<1x384xf32> to vector<8x384xf32>
    %294 = arith.mulf %289, %293 : vector<8x384xf32>
    %cst_484 = arith.constant dense<0.000000e+00> : vector<8xf32>
    %295 = vector.multi_reduction <add>, %294, %cst_484 [1] : vector<8x384xf32> to vector<8xf32>
    %296 = vector.shape_cast %295 : vector<8xf32> to vector<8x1xf32>
    %297 = arith.addf %199, %296 : vector<8x1xf32>
    %c0_485 = arith.constant 0 : index
    %c3_486 = arith.constant 3 : index
    %c0_487 = arith.constant 0 : index
    %c0_488 = arith.constant 0 : index
    %298 = vector.load %arg2[%c0_485, %c3_486, %c0_487, %c0_488] : memref<1x6x8x512xbf16, #tpu.memory_space<vmem>>, vector<1x1x8x384xbf16>
    %299 = vector.shape_cast %298 : vector<1x1x8x384xbf16> to vector<8x384xbf16>
    %c0_489 = arith.constant 0 : index
    %c0_490 = arith.constant 0 : index
    %300 = vector.load %arg7[%c0_489, %c0_490] : memref<216x384xbf16, #tpu.memory_space<vmem>>, vector<8x384xbf16>
    tpu.vector_store %arg7[%c0_489, %c0_490], %299 {strides = array<i32>} : memref<216x384xbf16, #tpu.memory_space<vmem>>, vector<8x384xbf16>,
    %c0_491 = arith.constant 0 : index
    %c3_492 = arith.constant 3 : index
    %c0_493 = arith.constant 0 : index
    %c1_494 = arith.constant 1 : index
    %301 = vector.load %arg2[%c0_491, %c3_492, %c0_493, %c1_494] : memref<1x6x8x512xbf16, #tpu.memory_space<vmem>>, vector<1x1x8x384xbf16>
    %302 = vector.shape_cast %301 : vector<1x1x8x384xbf16> to vector<8x384xbf16>
    %c8_495 = arith.constant 8 : index
    %c0_496 = arith.constant 0 : index
    %303 = vector.load %arg7[%c8_495, %c0_496] : memref<216x384xbf16, #tpu.memory_space<vmem>>, vector<8x384xbf16>
    tpu.vector_store %arg7[%c8_495, %c0_496], %302 {strides = array<i32>} : memref<216x384xbf16, #tpu.memory_space<vmem>>, vector<8x384xbf16>,
    %c0_497 = arith.constant 0 : index
    %c3_498 = arith.constant 3 : index
    %c0_499 = arith.constant 0 : index
    %c2_500 = arith.constant 2 : index
    %304 = vector.load %arg2[%c0_497, %c3_498, %c0_499, %c2_500] : memref<1x6x8x512xbf16, #tpu.memory_space<vmem>>, vector<1x1x8x384xbf16>
    %305 = vector.shape_cast %304 : vector<1x1x8x384xbf16> to vector<8x384xbf16>
    %c16_501 = arith.constant 16 : index
    %c0_502 = arith.constant 0 : index
    %306 = vector.load %arg7[%c16_501, %c0_502] : memref<216x384xbf16, #tpu.memory_space<vmem>>, vector<8x384xbf16>
    tpu.vector_store %arg7[%c16_501, %c0_502], %305 {strides = array<i32>} : memref<216x384xbf16, #tpu.memory_space<vmem>>, vector<8x384xbf16>,
    %c0_503 = arith.constant 0 : index
    %c3_504 = arith.constant 3 : index
    %c0_505 = arith.constant 0 : index
    %c18_506 = arith.constant 18 : index
    %307 = vector.load %arg2[%c0_503, %c3_504, %c0_505, %c18_506] : memref<1x6x8x512xbf16, #tpu.memory_space<vmem>>, vector<1x1x8x384xbf16>
    %308 = vector.shape_cast %307 : vector<1x1x8x384xbf16> to vector<8x384xbf16>
    %c24_507 = arith.constant 24 : index
    %c0_508 = arith.constant 0 : index
    %309 = vector.load %arg7[%c24_507, %c0_508] : memref<216x384xbf16, #tpu.memory_space<vmem>>, vector<8x384xbf16>
    tpu.vector_store %arg7[%c24_507, %c0_508], %308 {strides = array<i32>} : memref<216x384xbf16, #tpu.memory_space<vmem>>, vector<8x384xbf16>,
    %c0_509 = arith.constant 0 : index
    %c3_510 = arith.constant 3 : index
    %c0_511 = arith.constant 0 : index
    %c19_512 = arith.constant 19 : index
    %310 = vector.load %arg2[%c0_509, %c3_510, %c0_511, %c19_512] : memref<1x6x8x512xbf16, #tpu.memory_space<vmem>>, vector<1x1x8x384xbf16>
    %311 = vector.shape_cast %310 : vector<1x1x8x384xbf16> to vector<8x384xbf16>
    %c32_513 = arith.constant 32 : index
    %c0_514 = arith.constant 0 : index
    %312 = vector.load %arg7[%c32_513, %c0_514] : memref<216x384xbf16, #tpu.memory_space<vmem>>, vector<8x384xbf16>
    tpu.vector_store %arg7[%c32_513, %c0_514], %311 {strides = array<i32>} : memref<216x384xbf16, #tpu.memory_space<vmem>>, vector<8x384xbf16>,
    %c0_515 = arith.constant 0 : index
    %c3_516 = arith.constant 3 : index
    %c0_517 = arith.constant 0 : index
    %c20_518 = arith.constant 20 : index
    %313 = vector.load %arg2[%c0_515, %c3_516, %c0_517, %c20_518] : memref<1x6x8x512xbf16, #tpu.memory_space<vmem>>, vector<1x1x8x384xbf16>
    %314 = vector.shape_cast %313 : vector<1x1x8x384xbf16> to vector<8x384xbf16>
    %c40_519 = arith.constant 40 : index
    %c0_520 = arith.constant 0 : index
    %315 = vector.load %arg7[%c40_519, %c0_520] : memref<216x384xbf16, #tpu.memory_space<vmem>>, vector<8x384xbf16>
    tpu.vector_store %arg7[%c40_519, %c0_520], %314 {strides = array<i32>} : memref<216x384xbf16, #tpu.memory_space<vmem>>, vector<8x384xbf16>,
    %c0_521 = arith.constant 0 : index
    %c3_522 = arith.constant 3 : index
    %c0_523 = arith.constant 0 : index
    %c36_524 = arith.constant 36 : index
    %316 = vector.load %arg2[%c0_521, %c3_522, %c0_523, %c36_524] : memref<1x6x8x512xbf16, #tpu.memory_space<vmem>>, vector<1x1x8x384xbf16>
    %317 = vector.shape_cast %316 : vector<1x1x8x384xbf16> to vector<8x384xbf16>
    %c48_525 = arith.constant 48 : index
    %c0_526 = arith.constant 0 : index
    %318 = vector.load %arg7[%c48_525, %c0_526] : memref<216x384xbf16, #tpu.memory_space<vmem>>, vector<8x384xbf16>
    tpu.vector_store %arg7[%c48_525, %c0_526], %317 {strides = array<i32>} : memref<216x384xbf16, #tpu.memory_space<vmem>>, vector<8x384xbf16>,
    %c0_527 = arith.constant 0 : index
    %c3_528 = arith.constant 3 : index
    %c0_529 = arith.constant 0 : index
    %c37_530 = arith.constant 37 : index
    %319 = vector.load %arg2[%c0_527, %c3_528, %c0_529, %c37_530] : memref<1x6x8x512xbf16, #tpu.memory_space<vmem>>, vector<1x1x8x384xbf16>
    %320 = vector.shape_cast %319 : vector<1x1x8x384xbf16> to vector<8x384xbf16>
    %c56_531 = arith.constant 56 : index
    %c0_532 = arith.constant 0 : index
    %321 = vector.load %arg7[%c56_531, %c0_532] : memref<216x384xbf16, #tpu.memory_space<vmem>>, vector<8x384xbf16>
    tpu.vector_store %arg7[%c56_531, %c0_532], %320 {strides = array<i32>} : memref<216x384xbf16, #tpu.memory_space<vmem>>, vector<8x384xbf16>,
    %c0_533 = arith.constant 0 : index
    %c3_534 = arith.constant 3 : index
    %c0_535 = arith.constant 0 : index
    %c38_536 = arith.constant 38 : index
    %322 = vector.load %arg2[%c0_533, %c3_534, %c0_535, %c38_536] : memref<1x6x8x512xbf16, #tpu.memory_space<vmem>>, vector<1x1x8x384xbf16>
    %323 = vector.shape_cast %322 : vector<1x1x8x384xbf16> to vector<8x384xbf16>
    %c64_537 = arith.constant 64 : index
    %c0_538 = arith.constant 0 : index
    %324 = vector.load %arg7[%c64_537, %c0_538] : memref<216x384xbf16, #tpu.memory_space<vmem>>, vector<8x384xbf16>
    tpu.vector_store %arg7[%c64_537, %c0_538], %323 {strides = array<i32>} : memref<216x384xbf16, #tpu.memory_space<vmem>>, vector<8x384xbf16>,
    %c0_539 = arith.constant 0 : index
    %c4_540 = arith.constant 4 : index
    %c0_541 = arith.constant 0 : index
    %c0_542 = arith.constant 0 : index
    %325 = vector.load %arg2[%c0_539, %c4_540, %c0_541, %c0_542] : memref<1x6x8x512xbf16, #tpu.memory_space<vmem>>, vector<1x1x8x384xbf16>
    %326 = vector.shape_cast %325 : vector<1x1x8x384xbf16> to vector<8x384xbf16>
    %c72_543 = arith.constant 72 : index
    %c0_544 = arith.constant 0 : index
    %327 = vector.load %arg7[%c72_543, %c0_544] : memref<216x384xbf16, #tpu.memory_space<vmem>>, vector<8x384xbf16>
    tpu.vector_store %arg7[%c72_543, %c0_544], %326 {strides = array<i32>} : memref<216x384xbf16, #tpu.memory_space<vmem>>, vector<8x384xbf16>,
    %c0_545 = arith.constant 0 : index
    %c4_546 = arith.constant 4 : index
    %c0_547 = arith.constant 0 : index
    %c1_548 = arith.constant 1 : index
    %328 = vector.load %arg2[%c0_545, %c4_546, %c0_547, %c1_548] : memref<1x6x8x512xbf16, #tpu.memory_space<vmem>>, vector<1x1x8x384xbf16>
    %329 = vector.shape_cast %328 : vector<1x1x8x384xbf16> to vector<8x384xbf16>
    %c80_549 = arith.constant 80 : index
    %c0_550 = arith.constant 0 : index
    %330 = vector.load %arg7[%c80_549, %c0_550] : memref<216x384xbf16, #tpu.memory_space<vmem>>, vector<8x384xbf16>
    tpu.vector_store %arg7[%c80_549, %c0_550], %329 {strides = array<i32>} : memref<216x384xbf16, #tpu.memory_space<vmem>>, vector<8x384xbf16>,
    %c0_551 = arith.constant 0 : index
    %c4_552 = arith.constant 4 : index
    %c0_553 = arith.constant 0 : index
    %c2_554 = arith.constant 2 : index
    %331 = vector.load %arg2[%c0_551, %c4_552, %c0_553, %c2_554] : memref<1x6x8x512xbf16, #tpu.memory_space<vmem>>, vector<1x1x8x384xbf16>
    %332 = vector.shape_cast %331 : vector<1x1x8x384xbf16> to vector<8x384xbf16>
    %c88_555 = arith.constant 88 : index
    %c0_556 = arith.constant 0 : index
    %333 = vector.load %arg7[%c88_555, %c0_556] : memref<216x384xbf16, #tpu.memory_space<vmem>>, vector<8x384xbf16>
    tpu.vector_store %arg7[%c88_555, %c0_556], %332 {strides = array<i32>} : memref<216x384xbf16, #tpu.memory_space<vmem>>, vector<8x384xbf16>,
    %c0_557 = arith.constant 0 : index
    %c4_558 = arith.constant 4 : index
    %c0_559 = arith.constant 0 : index
    %c18_560 = arith.constant 18 : index
    %334 = vector.load %arg2[%c0_557, %c4_558, %c0_559, %c18_560] : memref<1x6x8x512xbf16, #tpu.memory_space<vmem>>, vector<1x1x8x384xbf16>
    %335 = vector.shape_cast %334 : vector<1x1x8x384xbf16> to vector<8x384xbf16>
    %c96_561 = arith.constant 96 : index
    %c0_562 = arith.constant 0 : index
    %336 = vector.load %arg7[%c96_561, %c0_562] : memref<216x384xbf16, #tpu.memory_space<vmem>>, vector<8x384xbf16>
    tpu.vector_store %arg7[%c96_561, %c0_562], %335 {strides = array<i32>} : memref<216x384xbf16, #tpu.memory_space<vmem>>, vector<8x384xbf16>,
    %c0_563 = arith.constant 0 : index
    %c4_564 = arith.constant 4 : index
    %c0_565 = arith.constant 0 : index
    %c19_566 = arith.constant 19 : index
    %337 = vector.load %arg2[%c0_563, %c4_564, %c0_565, %c19_566] : memref<1x6x8x512xbf16, #tpu.memory_space<vmem>>, vector<1x1x8x384xbf16>
    %338 = vector.shape_cast %337 : vector<1x1x8x384xbf16> to vector<8x384xbf16>
    %c104_567 = arith.constant 104 : index
    %c0_568 = arith.constant 0 : index
    %339 = vector.load %arg7[%c104_567, %c0_568] : memref<216x384xbf16, #tpu.memory_space<vmem>>, vector<8x384xbf16>
    tpu.vector_store %arg7[%c104_567, %c0_568], %338 {strides = array<i32>} : memref<216x384xbf16, #tpu.memory_space<vmem>>, vector<8x384xbf16>,
    %c0_569 = arith.constant 0 : index
    %c4_570 = arith.constant 4 : index
    %c0_571 = arith.constant 0 : index
    %c20_572 = arith.constant 20 : index
    %340 = vector.load %arg2[%c0_569, %c4_570, %c0_571, %c20_572] : memref<1x6x8x512xbf16, #tpu.memory_space<vmem>>, vector<1x1x8x384xbf16>
    %341 = vector.shape_cast %340 : vector<1x1x8x384xbf16> to vector<8x384xbf16>
    %c112_573 = arith.constant 112 : index
    %c0_574 = arith.constant 0 : index
    %342 = vector.load %arg7[%c112_573, %c0_574] : memref<216x384xbf16, #tpu.memory_space<vmem>>, vector<8x384xbf16>
    tpu.vector_store %arg7[%c112_573, %c0_574], %341 {strides = array<i32>} : memref<216x384xbf16, #tpu.memory_space<vmem>>, vector<8x384xbf16>,
    %c0_575 = arith.constant 0 : index
    %c4_576 = arith.constant 4 : index
    %c0_577 = arith.constant 0 : index
    %c36_578 = arith.constant 36 : index
    %343 = vector.load %arg2[%c0_575, %c4_576, %c0_577, %c36_578] : memref<1x6x8x512xbf16, #tpu.memory_space<vmem>>, vector<1x1x8x384xbf16>
    %344 = vector.shape_cast %343 : vector<1x1x8x384xbf16> to vector<8x384xbf16>
    %c120_579 = arith.constant 120 : index
    %c0_580 = arith.constant 0 : index
    %345 = vector.load %arg7[%c120_579, %c0_580] : memref<216x384xbf16, #tpu.memory_space<vmem>>, vector<8x384xbf16>
    tpu.vector_store %arg7[%c120_579, %c0_580], %344 {strides = array<i32>} : memref<216x384xbf16, #tpu.memory_space<vmem>>, vector<8x384xbf16>,
    %c0_581 = arith.constant 0 : index
    %c4_582 = arith.constant 4 : index
    %c0_583 = arith.constant 0 : index
    %c37_584 = arith.constant 37 : index
    %346 = vector.load %arg2[%c0_581, %c4_582, %c0_583, %c37_584] : memref<1x6x8x512xbf16, #tpu.memory_space<vmem>>, vector<1x1x8x384xbf16>
    %347 = vector.shape_cast %346 : vector<1x1x8x384xbf16> to vector<8x384xbf16>
    %c128_585 = arith.constant 128 : index
    %c0_586 = arith.constant 0 : index
    %348 = vector.load %arg7[%c128_585, %c0_586] : memref<216x384xbf16, #tpu.memory_space<vmem>>, vector<8x384xbf16>
    tpu.vector_store %arg7[%c128_585, %c0_586], %347 {strides = array<i32>} : memref<216x384xbf16, #tpu.memory_space<vmem>>, vector<8x384xbf16>,
    %c0_587 = arith.constant 0 : index
    %c4_588 = arith.constant 4 : index
    %c0_589 = arith.constant 0 : index
    %c38_590 = arith.constant 38 : index
    %349 = vector.load %arg2[%c0_587, %c4_588, %c0_589, %c38_590] : memref<1x6x8x512xbf16, #tpu.memory_space<vmem>>, vector<1x1x8x384xbf16>
    %350 = vector.shape_cast %349 : vector<1x1x8x384xbf16> to vector<8x384xbf16>
    %c136_591 = arith.constant 136 : index
    %c0_592 = arith.constant 0 : index
    %351 = vector.load %arg7[%c136_591, %c0_592] : memref<216x384xbf16, #tpu.memory_space<vmem>>, vector<8x384xbf16>
    tpu.vector_store %arg7[%c136_591, %c0_592], %350 {strides = array<i32>} : memref<216x384xbf16, #tpu.memory_space<vmem>>, vector<8x384xbf16>,
    %c0_593 = arith.constant 0 : index
    %c5 = arith.constant 5 : index
    %c0_594 = arith.constant 0 : index
    %c0_595 = arith.constant 0 : index
    %352 = vector.load %arg2[%c0_593, %c5, %c0_594, %c0_595] : memref<1x6x8x512xbf16, #tpu.memory_space<vmem>>, vector<1x1x8x384xbf16>
    %353 = vector.shape_cast %352 : vector<1x1x8x384xbf16> to vector<8x384xbf16>
    %c144_596 = arith.constant 144 : index
    %c0_597 = arith.constant 0 : index
    %354 = vector.load %arg7[%c144_596, %c0_597] : memref<216x384xbf16, #tpu.memory_space<vmem>>, vector<8x384xbf16>
    tpu.vector_store %arg7[%c144_596, %c0_597], %353 {strides = array<i32>} : memref<216x384xbf16, #tpu.memory_space<vmem>>, vector<8x384xbf16>,
    %c0_598 = arith.constant 0 : index
    %c5_599 = arith.constant 5 : index
    %c0_600 = arith.constant 0 : index
    %c1_601 = arith.constant 1 : index
    %355 = vector.load %arg2[%c0_598, %c5_599, %c0_600, %c1_601] : memref<1x6x8x512xbf16, #tpu.memory_space<vmem>>, vector<1x1x8x384xbf16>
    %356 = vector.shape_cast %355 : vector<1x1x8x384xbf16> to vector<8x384xbf16>
    %c152_602 = arith.constant 152 : index
    %c0_603 = arith.constant 0 : index
    %357 = vector.load %arg7[%c152_602, %c0_603] : memref<216x384xbf16, #tpu.memory_space<vmem>>, vector<8x384xbf16>
    tpu.vector_store %arg7[%c152_602, %c0_603], %356 {strides = array<i32>} : memref<216x384xbf16, #tpu.memory_space<vmem>>, vector<8x384xbf16>,
    %c0_604 = arith.constant 0 : index
    %c5_605 = arith.constant 5 : index
    %c0_606 = arith.constant 0 : index
    %c2_607 = arith.constant 2 : index
    %358 = vector.load %arg2[%c0_604, %c5_605, %c0_606, %c2_607] : memref<1x6x8x512xbf16, #tpu.memory_space<vmem>>, vector<1x1x8x384xbf16>
    %359 = vector.shape_cast %358 : vector<1x1x8x384xbf16> to vector<8x384xbf16>
    %c160_608 = arith.constant 160 : index
    %c0_609 = arith.constant 0 : index
    %360 = vector.load %arg7[%c160_608, %c0_609] : memref<216x384xbf16, #tpu.memory_space<vmem>>, vector<8x384xbf16>
    tpu.vector_store %arg7[%c160_608, %c0_609], %359 {strides = array<i32>} : memref<216x384xbf16, #tpu.memory_space<vmem>>, vector<8x384xbf16>,
    %c0_610 = arith.constant 0 : index
    %c5_611 = arith.constant 5 : index
    %c0_612 = arith.constant 0 : index
    %c18_613 = arith.constant 18 : index
    %361 = vector.load %arg2[%c0_610, %c5_611, %c0_612, %c18_613] : memref<1x6x8x512xbf16, #tpu.memory_space<vmem>>, vector<1x1x8x384xbf16>
    %362 = vector.shape_cast %361 : vector<1x1x8x384xbf16> to vector<8x384xbf16>
    %c168_614 = arith.constant 168 : index
    %c0_615 = arith.constant 0 : index
    %363 = vector.load %arg7[%c168_614, %c0_615] : memref<216x384xbf16, #tpu.memory_space<vmem>>, vector<8x384xbf16>
    tpu.vector_store %arg7[%c168_614, %c0_615], %362 {strides = array<i32>} : memref<216x384xbf16, #tpu.memory_space<vmem>>, vector<8x384xbf16>,
    %c0_616 = arith.constant 0 : index
    %c5_617 = arith.constant 5 : index
    %c0_618 = arith.constant 0 : index
    %c19_619 = arith.constant 19 : index
    %364 = vector.load %arg2[%c0_616, %c5_617, %c0_618, %c19_619] : memref<1x6x8x512xbf16, #tpu.memory_space<vmem>>, vector<1x1x8x384xbf16>
    %365 = vector.shape_cast %364 : vector<1x1x8x384xbf16> to vector<8x384xbf16>
    %c176_620 = arith.constant 176 : index
    %c0_621 = arith.constant 0 : index
    %366 = vector.load %arg7[%c176_620, %c0_621] : memref<216x384xbf16, #tpu.memory_space<vmem>>, vector<8x384xbf16>
    tpu.vector_store %arg7[%c176_620, %c0_621], %365 {strides = array<i32>} : memref<216x384xbf16, #tpu.memory_space<vmem>>, vector<8x384xbf16>,
    %c0_622 = arith.constant 0 : index
    %c5_623 = arith.constant 5 : index
    %c0_624 = arith.constant 0 : index
    %c20_625 = arith.constant 20 : index
    %367 = vector.load %arg2[%c0_622, %c5_623, %c0_624, %c20_625] : memref<1x6x8x512xbf16, #tpu.memory_space<vmem>>, vector<1x1x8x384xbf16>
    %368 = vector.shape_cast %367 : vector<1x1x8x384xbf16> to vector<8x384xbf16>
    %c184_626 = arith.constant 184 : index
    %c0_627 = arith.constant 0 : index
    %369 = vector.load %arg7[%c184_626, %c0_627] : memref<216x384xbf16, #tpu.memory_space<vmem>>, vector<8x384xbf16>
    tpu.vector_store %arg7[%c184_626, %c0_627], %368 {strides = array<i32>} : memref<216x384xbf16, #tpu.memory_space<vmem>>, vector<8x384xbf16>,
    %c0_628 = arith.constant 0 : index
    %c5_629 = arith.constant 5 : index
    %c0_630 = arith.constant 0 : index
    %c36_631 = arith.constant 36 : index
    %370 = vector.load %arg2[%c0_628, %c5_629, %c0_630, %c36_631] : memref<1x6x8x512xbf16, #tpu.memory_space<vmem>>, vector<1x1x8x384xbf16>
    %371 = vector.shape_cast %370 : vector<1x1x8x384xbf16> to vector<8x384xbf16>
    %c192_632 = arith.constant 192 : index
    %c0_633 = arith.constant 0 : index
    %372 = vector.load %arg7[%c192_632, %c0_633] : memref<216x384xbf16, #tpu.memory_space<vmem>>, vector<8x384xbf16>
    tpu.vector_store %arg7[%c192_632, %c0_633], %371 {strides = array<i32>} : memref<216x384xbf16, #tpu.memory_space<vmem>>, vector<8x384xbf16>,
    %c0_634 = arith.constant 0 : index
    %c5_635 = arith.constant 5 : index
    %c0_636 = arith.constant 0 : index
    %c37_637 = arith.constant 37 : index
    %373 = vector.load %arg2[%c0_634, %c5_635, %c0_636, %c37_637] : memref<1x6x8x512xbf16, #tpu.memory_space<vmem>>, vector<1x1x8x384xbf16>
    %374 = vector.shape_cast %373 : vector<1x1x8x384xbf16> to vector<8x384xbf16>
    %c200_638 = arith.constant 200 : index
    %c0_639 = arith.constant 0 : index
    %375 = vector.load %arg7[%c200_638, %c0_639] : memref<216x384xbf16, #tpu.memory_space<vmem>>, vector<8x384xbf16>
    tpu.vector_store %arg7[%c200_638, %c0_639], %374 {strides = array<i32>} : memref<216x384xbf16, #tpu.memory_space<vmem>>, vector<8x384xbf16>,
    %c0_640 = arith.constant 0 : index
    %c5_641 = arith.constant 5 : index
    %c0_642 = arith.constant 0 : index
    %c38_643 = arith.constant 38 : index
    %376 = vector.load %arg2[%c0_640, %c5_641, %c0_642, %c38_643] : memref<1x6x8x512xbf16, #tpu.memory_space<vmem>>, vector<1x1x8x384xbf16>
    %377 = vector.shape_cast %376 : vector<1x1x8x384xbf16> to vector<8x384xbf16>
    %c208_644 = arith.constant 208 : index
    %c0_645 = arith.constant 0 : index
    %378 = vector.load %arg7[%c208_644, %c0_645] : memref<216x384xbf16, #tpu.memory_space<vmem>>, vector<8x384xbf16>
    tpu.vector_store %arg7[%c208_644, %c0_645], %377 {strides = array<i32>} : memref<216x384xbf16, #tpu.memory_space<vmem>>, vector<8x384xbf16>,
    %c0_646 = arith.constant 0 : index
    %c0_647 = arith.constant 0 : index
    %379 = vector.load %arg7[%c0_646, %c0_647] : memref<216x384xbf16, #tpu.memory_space<vmem>>, vector<216x384xbf16>
    %cst_648 = arith.constant dense<0.000000e+00> : vector<8x384xf32>
    %380 = tpu.matmul %0, %379, %cst_648 {dimension_numbers = #tpu.dot_dimension_numbers<[1], [0], [0], [1], [0, 0, 1, 1], [], []>} : vector<8x216xbf16>, vector<216x384xbf16>, vector<8x384xf32> -> vector<8x384xf32>
    %381 = vector.broadcast %1 : vector<8x1xf32> to vector<8x384xf32>
    %382 = arith.addf %380, %381 : vector<8x384xf32>
    %cst_649 = arith.constant 0.000000e+00 : f32
    %383 = vector.broadcast %cst_649 : f32 to vector<8x384xf32>
    %384 = arith.cmpf oge, %382, %383 : vector<8x384xf32>
    %cst_650 = arith.constant 2.000000e-01 : f32
    %385 = vector.broadcast %cst_650 : f32 to vector<8x384xf32>
    %386 = arith.mulf %385, %382 : vector<8x384xf32>
    %387 = arith.select %384, %382, %386 : vector<8x384xi1>, vector<8x384xf32>
    %c0_651 = arith.constant 0 : index
    %c3_652 = arith.constant 3 : index
    %c0_653 = arith.constant 0 : index
    %c0_654 = arith.constant 0 : index
    %388 = vector.load %arg6[%c0_651, %c3_652, %c0_653, %c0_654] : memref<1x4x8x384xf32, #tpu.memory_space<vmem>>, vector<1x1x8x384xf32>
    %389 = vector.shape_cast %388 : vector<1x1x8x384xf32> to vector<8x384xf32>
    %390 = vector.shape_cast %387 : vector<8x384xf32> to vector<1x1x8x384xf32>
    tpu.vector_store %arg6[%c0_651, %c3_652, %c0_653, %c0_654], %390 {strides = array<i32>} : memref<1x4x8x384xf32, #tpu.memory_space<vmem>>, vector<1x1x8x384xf32>,
    %391 = vector.broadcast %2 : vector<1x384xf32> to vector<8x384xf32>
    %392 = arith.mulf %387, %391 : vector<8x384xf32>
    %cst_655 = arith.constant dense<0.000000e+00> : vector<8xf32>
    %393 = vector.multi_reduction <add>, %392, %cst_655 [1] : vector<8x384xf32> to vector<8xf32>
    %394 = vector.shape_cast %393 : vector<8xf32> to vector<8x1xf32>
    %395 = arith.addf %297, %394 : vector<8x1xf32>
    %cst_656 = arith.constant 9.765625E-4 : f32
    %396 = vector.broadcast %cst_656 : f32 to vector<8x1xf32>
    %397 = arith.mulf %395, %396 : vector<8x1xf32>
    %c0_657 = arith.constant 0 : index
    %c0_658 = arith.constant 0 : index
    %c0_659 = arith.constant 0 : index
    %c0_660 = arith.constant 0 : index
    %398 = vector.load %arg6[%c0_657, %c0_658, %c0_659, %c0_660] : memref<1x4x8x384xf32, #tpu.memory_space<vmem>>, vector<1x1x8x384xf32>
    %399 = vector.shape_cast %398 : vector<1x1x8x384xf32> to vector<8x384xf32>
    %400 = vector.broadcast %397 : vector<8x1xf32> to vector<8x384xf32>
    %401 = arith.subf %399, %400 : vector<8x384xf32>
    %402 = vector.broadcast %2 : vector<1x384xf32> to vector<8x384xf32>
    %403 = arith.mulf %401, %402 : vector<8x384xf32>
    %404 = arith.mulf %403, %403 : vector<8x384xf32>
    %cst_661 = arith.constant dense<0.000000e+00> : vector<8xf32>
    %405 = vector.multi_reduction <add>, %404, %cst_661 [1] : vector<8x384xf32> to vector<8xf32>
    %406 = vector.shape_cast %405 : vector<8xf32> to vector<8x1xf32>
    %407 = arith.addf %3, %406 : vector<8x1xf32>
    %c0_662 = arith.constant 0 : index
    %c1_663 = arith.constant 1 : index
    %c0_664 = arith.constant 0 : index
    %c0_665 = arith.constant 0 : index
    %408 = vector.load %arg6[%c0_662, %c1_663, %c0_664, %c0_665] : memref<1x4x8x384xf32, #tpu.memory_space<vmem>>, vector<1x1x8x384xf32>
    %409 = vector.shape_cast %408 : vector<1x1x8x384xf32> to vector<8x384xf32>
    %410 = vector.broadcast %397 : vector<8x1xf32> to vector<8x384xf32>
    %411 = arith.subf %409, %410 : vector<8x384xf32>
    %412 = vector.broadcast %2 : vector<1x384xf32> to vector<8x384xf32>
    %413 = arith.mulf %411, %412 : vector<8x384xf32>
    %414 = arith.mulf %413, %413 : vector<8x384xf32>
    %cst_666 = arith.constant dense<0.000000e+00> : vector<8xf32>
    %415 = vector.multi_reduction <add>, %414, %cst_666 [1] : vector<8x384xf32> to vector<8xf32>
    %416 = vector.shape_cast %415 : vector<8xf32> to vector<8x1xf32>
    %417 = arith.addf %407, %416 : vector<8x1xf32>
    %c0_667 = arith.constant 0 : index
    %c2_668 = arith.constant 2 : index
    %c0_669 = arith.constant 0 : index
    %c0_670 = arith.constant 0 : index
    %418 = vector.load %arg6[%c0_667, %c2_668, %c0_669, %c0_670] : memref<1x4x8x384xf32, #tpu.memory_space<vmem>>, vector<1x1x8x384xf32>
    %419 = vector.shape_cast %418 : vector<1x1x8x384xf32> to vector<8x384xf32>
    %420 = vector.broadcast %397 : vector<8x1xf32> to vector<8x384xf32>
    %421 = arith.subf %419, %420 : vector<8x384xf32>
    %422 = vector.broadcast %2 : vector<1x384xf32> to vector<8x384xf32>
    %423 = arith.mulf %421, %422 : vector<8x384xf32>
    %424 = arith.mulf %423, %423 : vector<8x384xf32>
    %cst_671 = arith.constant dense<0.000000e+00> : vector<8xf32>
    %425 = vector.multi_reduction <add>, %424, %cst_671 [1] : vector<8x384xf32> to vector<8xf32>
    %426 = vector.shape_cast %425 : vector<8xf32> to vector<8x1xf32>
    %427 = arith.addf %417, %426 : vector<8x1xf32>
    %c0_672 = arith.constant 0 : index
    %c3_673 = arith.constant 3 : index
    %c0_674 = arith.constant 0 : index
    %c0_675 = arith.constant 0 : index
    %428 = vector.load %arg6[%c0_672, %c3_673, %c0_674, %c0_675] : memref<1x4x8x384xf32, #tpu.memory_space<vmem>>, vector<1x1x8x384xf32>
    %429 = vector.shape_cast %428 : vector<1x1x8x384xf32> to vector<8x384xf32>
    %430 = vector.broadcast %397 : vector<8x1xf32> to vector<8x384xf32>
    %431 = arith.subf %429, %430 : vector<8x384xf32>
    %432 = vector.broadcast %2 : vector<1x384xf32> to vector<8x384xf32>
    %433 = arith.mulf %431, %432 : vector<8x384xf32>
    %434 = arith.mulf %433, %433 : vector<8x384xf32>
    %cst_676 = arith.constant dense<0.000000e+00> : vector<8xf32>
    %435 = vector.multi_reduction <add>, %434, %cst_676 [1] : vector<8x384xf32> to vector<8xf32>
    %436 = vector.shape_cast %435 : vector<8xf32> to vector<8x1xf32>
    %437 = arith.addf %427, %436 : vector<8x1xf32>
    %cst_677 = arith.constant 9.765625E-4 : f32
    %438 = vector.broadcast %cst_677 : f32 to vector<8x1xf32>
    %439 = arith.mulf %437, %438 : vector<8x1xf32>
    %cst_678 = arith.constant 0.000000e+00 : f32
    %440 = vector.broadcast %cst_678 : f32 to vector<8x1xf32>
    %441 = arith.maximumf %439, %440 : vector<8x1xf32>
    %cst_679 = arith.constant 9.99999974E-6 : f32
    %442 = vector.broadcast %cst_679 : f32 to vector<8x1xf32>
    %443 = arith.addf %441, %442 : vector<8x1xf32>
    %444 = math.rsqrt %443 : vector<8x1xf32>
    %c0_680 = arith.constant 0 : index
    %c0_681 = arith.constant 0 : index
    %c0_682 = arith.constant 0 : index
    %c0_683 = arith.constant 0 : index
    %445 = vector.load %arg6[%c0_680, %c0_681, %c0_682, %c0_683] : memref<1x4x8x384xf32, #tpu.memory_space<vmem>>, vector<1x1x8x384xf32>
    %446 = vector.shape_cast %445 : vector<1x1x8x384xf32> to vector<8x384xf32>
    %447 = vector.broadcast %397 : vector<8x1xf32> to vector<8x384xf32>
    %448 = arith.subf %446, %447 : vector<8x384xf32>
    %449 = vector.broadcast %444 : vector<8x1xf32> to vector<8x384xf32>
    %450 = arith.mulf %448, %449 : vector<8x384xf32>
    %c0_684 = arith.constant 0 : index
    %c0_685 = arith.constant 0 : index
    %c0_686 = arith.constant 0 : index
    %c0_687 = arith.constant 0 : index
    %451 = vector.load %arg6[%c0_684, %c0_685, %c0_686, %c0_687] : memref<1x4x8x384xf32, #tpu.memory_space<vmem>>, vector<1x1x8x384xf32>
    %452 = vector.shape_cast %451 : vector<1x1x8x384xf32> to vector<8x384xf32>
    %453 = vector.shape_cast %450 : vector<8x384xf32> to vector<1x1x8x384xf32>
    tpu.vector_store %arg6[%c0_684, %c0_685, %c0_686, %c0_687], %453 {strides = array<i32>} : memref<1x4x8x384xf32, #tpu.memory_space<vmem>>, vector<1x1x8x384xf32>,
    %c0_688 = arith.constant 0 : index
    %c1_689 = arith.constant 1 : index
    %c0_690 = arith.constant 0 : index
    %c0_691 = arith.constant 0 : index
    %454 = vector.load %arg6[%c0_688, %c1_689, %c0_690, %c0_691] : memref<1x4x8x384xf32, #tpu.memory_space<vmem>>, vector<1x1x8x384xf32>
    %455 = vector.shape_cast %454 : vector<1x1x8x384xf32> to vector<8x384xf32>
    %456 = vector.broadcast %397 : vector<8x1xf32> to vector<8x384xf32>
    %457 = arith.subf %455, %456 : vector<8x384xf32>
    %458 = vector.broadcast %444 : vector<8x1xf32> to vector<8x384xf32>
    %459 = arith.mulf %457, %458 : vector<8x384xf32>
    %c0_692 = arith.constant 0 : index
    %c1_693 = arith.constant 1 : index
    %c0_694 = arith.constant 0 : index
    %c0_695 = arith.constant 0 : index
    %460 = vector.load %arg6[%c0_692, %c1_693, %c0_694, %c0_695] : memref<1x4x8x384xf32, #tpu.memory_space<vmem>>, vector<1x1x8x384xf32>
    %461 = vector.shape_cast %460 : vector<1x1x8x384xf32> to vector<8x384xf32>
    %462 = vector.shape_cast %459 : vector<8x384xf32> to vector<1x1x8x384xf32>
    tpu.vector_store %arg6[%c0_692, %c1_693, %c0_694, %c0_695], %462 {strides = array<i32>} : memref<1x4x8x384xf32, #tpu.memory_space<vmem>>, vector<1x1x8x384xf32>,
    %c0_696 = arith.constant 0 : index
    %c2_697 = arith.constant 2 : index
    %c0_698 = arith.constant 0 : index
    %c0_699 = arith.constant 0 : index
    %463 = vector.load %arg6[%c0_696, %c2_697, %c0_698, %c0_699] : memref<1x4x8x384xf32, #tpu.memory_space<vmem>>, vector<1x1x8x384xf32>
    %464 = vector.shape_cast %463 : vector<1x1x8x384xf32> to vector<8x384xf32>
    %465 = vector.broadcast %397 : vector<8x1xf32> to vector<8x384xf32>
    %466 = arith.subf %464, %465 : vector<8x384xf32>
    %467 = vector.broadcast %444 : vector<8x1xf32> to vector<8x384xf32>
    %468 = arith.mulf %466, %467 : vector<8x384xf32>
    %c0_700 = arith.constant 0 : index
    %c2_701 = arith.constant 2 : index
    %c0_702 = arith.constant 0 : index
    %c0_703 = arith.constant 0 : index
    %469 = vector.load %arg6[%c0_700, %c2_701, %c0_702, %c0_703] : memref<1x4x8x384xf32, #tpu.memory_space<vmem>>, vector<1x1x8x384xf32>
    %470 = vector.shape_cast %469 : vector<1x1x8x384xf32> to vector<8x384xf32>
    %471 = vector.shape_cast %468 : vector<8x384xf32> to vector<1x1x8x384xf32>
    tpu.vector_store %arg6[%c0_700, %c2_701, %c0_702, %c0_703], %471 {strides = array<i32>} : memref<1x4x8x384xf32, #tpu.memory_space<vmem>>, vector<1x1x8x384xf32>,
    %c0_704 = arith.constant 0 : index
    %c3_705 = arith.constant 3 : index
    %c0_706 = arith.constant 0 : index
    %c0_707 = arith.constant 0 : index
    %472 = vector.load %arg6[%c0_704, %c3_705, %c0_706, %c0_707] : memref<1x4x8x384xf32, #tpu.memory_space<vmem>>, vector<1x1x8x384xf32>
    %473 = vector.shape_cast %472 : vector<1x1x8x384xf32> to vector<8x384xf32>
    %474 = vector.broadcast %397 : vector<8x1xf32> to vector<8x384xf32>
    %475 = arith.subf %473, %474 : vector<8x384xf32>
    %476 = vector.broadcast %444 : vector<8x1xf32> to vector<8x384xf32>
    %477 = arith.mulf %475, %476 : vector<8x384xf32>
    %c0_708 = arith.constant 0 : index
    %c3_709 = arith.constant 3 : index
    %c0_710 = arith.constant 0 : index
    %c0_711 = arith.constant 0 : index
    %478 = vector.load %arg6[%c0_708, %c3_709, %c0_710, %c0_711] : memref<1x4x8x384xf32, #tpu.memory_space<vmem>>, vector<1x1x8x384xf32>
    %479 = vector.shape_cast %478 : vector<1x1x8x384xf32> to vector<8x384xf32>
    %480 = vector.shape_cast %477 : vector<8x384xf32> to vector<1x1x8x384xf32>
    tpu.vector_store %arg6[%c0_708, %c3_709, %c0_710, %c0_711], %480 {strides = array<i32>} : memref<1x4x8x384xf32, #tpu.memory_space<vmem>>, vector<1x1x8x384xf32>,
    return
  }
  func.func @transform_0(%arg0: i32, %arg1: i32) -> (i32, i32, i32, i32) {
    %c0_i32 = arith.constant 0 : i32
    %c0_i32_0 = arith.constant 0 : i32
    %c0_i32_1 = arith.constant 0 : i32
    %c0_i32_2 = arith.constant 0 : i32
    return %arg0, %c0_i32, %c0_i32_0, %c0_i32_1 : i32, i32, i32, i32
  }
  func.func @transform_1(%arg0: i32, %arg1: i32) -> (i32, i32) {
    %c0_i32 = arith.constant 0 : i32
    %c0_i32_0 = arith.constant 0 : i32
    return %arg1, %c0_i32 : i32, i32
  }
  func.func @transform_2(%arg0: i32, %arg1: i32) -> (i32, i32) {
    %c0_i32 = arith.constant 0 : i32
    %c0_i32_0 = arith.constant 0 : i32
    return %arg1, %c0_i32 : i32, i32
  }
  func.func @transform_3(%arg0: i32, %arg1: i32) -> (i32, i32) {
    %c0_i32 = arith.constant 0 : i32
    %c0_i32_0 = arith.constant 0 : i32
    %c0_i32_1 = arith.constant 0 : i32
    return %c0_i32, %c0_i32_0 : i32, i32
  }
  func.func @transform_4(%arg0: i32, %arg1: i32) -> (i32, i32, i32, i32) {
    %c0_i32 = arith.constant 0 : i32
    %c0_i32_0 = arith.constant 0 : i32
    %c0_i32_1 = arith.constant 0 : i32
    return %arg0, %c0_i32, %arg1, %c0_i32_0 : i32, i32, i32, i32
  }
}

</mosaic_0001>

<llo_original>
// kernel: conv_block_forward.1
$region0: #{conv_block_forward.1}
  #allocation0 [shape = 'u32[]', space=smem, size = 0x4, offset = 0x4, fixed_abs, tag = 'smem constant byte address 0x4 - core index']
  #allocation1 [shape = 'u32[144,128]{1,0:T(1,128)}', space=vmem, size = 0x12000, scoped, tag = 'internal scratch']
  #allocation2 [shape = 'bf16[216,384]{1,0:T(8,128)(2,1)}', space=vmem, size = 0x28800, scoped, tag = 'scratch operand']
  %s0 = inlined_call_operand.vmem [shape: bf16[2,6,8,512], index: 0, kind: input, shape index: {}]
  %s1 = inlined_call_operand.vmem [shape: bf16[8,216], index: 1, kind: input, shape index: {}]
  %s2 = inlined_call_operand.vmem [shape: f32[8,1], index: 2, kind: input, shape index: {}]
  %s3 = inlined_call_operand.vmem [shape: f32[1,384], index: 3, kind: input, shape index: {}]
  %s4 = inlined_call_operand.vmem [shape: f32[2,4,8,384], index: 4, kind: output, shape index: {}]
  %s5 = sld [smem:[#allocation0]]
  $region49: #{conv_block_forward.1} parent=0
    _
  %s7 = ssub.s32 1, %s5
  %s8 = scalar_select 0, %s7, %s5
  loop: start=0, step=1, limit=4
  $region2: #{conv_block_forward.1} parent=0 // loop_pre_header
    _
  $region3: #{conv_block_forward.1} parent=0 // loop_header
    %s10 = sphi 0, %s14
    %p11 = scmp.ge.s32.totalorder %s10, 4
    %s17 = sphi 0, %s29
    %s18 = sphi 0, %s25
    %s19 = sphi 0, %s17
    %s20 = sphi 0, %s18
    %s21 = sphi 0, %s19
    %s22 = sphi 0, %s20
    %s32 = sphi 0, %s34
    %s35 = sphi 0, %s32
    %s36 = sphi 0, %s35
    %s52 = sphi 0, %s36
    %s58 = sphi 0, %s60
    %s61 = sphi 0, %s58
    %s62 = sphi 0, %s61
    %s78 = sphi 0, %s62
    %s84 = sphi 0, %s86
    %s87 = sphi 0, %s84
    %s88 = sphi 0, %s87
    %s104 = sphi 0, %s88
    %s108 = sphi 0, %s108
    %s110 = sphi 0, %s108
    %s111 = sphi 0, %s110
    %s125 = sphi 0, %s111
    %s133 = sphi 0, %s135
    %s136 = sphi 0, %s133
    %s137 = sphi 0, %s136
    %s153 = sphi 0, %s137
  $region4: #{conv_block_forward.1} parent=0 // loop_header_branch
    %13 = sbr.rel (%p11) target = $region8
  $region5: #{conv_block_forward.1} parent=0 // loop_body
    %s15 = ssub.s32 %s10, 1
    %s16 = ssub.s32 %s10, 2
    %s23 = sadd.s32 1, %s18
    %p24 = scmp.ge.s32.totalorder %s23, 1
    %s25 = scalar_select %p24, 0, %s23
    %s26 = sadd.s32 1, %s17
    %s27 = scalar_select %p24, %s26, %s17
    %p28 = scmp.ge.s32.totalorder %s27, 2
    %s29 = scalar_select %p28, 0, %s27
    %s30 = ssub.s32 %s17, %s29
    %p31 = scmp.eq.s32.totalorder %s30, 0
    %s33 = sadd.s32 %s32, 1
    %s34 = scalar_select %p31, %s32, %s33
    %p37 = pneg %p31
    %p38 = scmp.eq.s32.totalorder %s10, 1
    %p39 = por %p37, %p38
    %p40 = scmp.ne.s32.totalorder %s32, %s35
    %p41 = scmp.eq.s32.totalorder %s10, 0
    %p42 = por %p40, %p41
    %p43 = scmp.ne.s32.totalorder %s32, %s35
    %p44 = scmp.eq.s32.totalorder %s15, 1
    %p45 = por %p43, %p44
    %p46 = scmp.ne.s32.totalorder %s35, %s36
    %p47 = scmp.eq.s32.totalorder %s15, 0
    %p48 = por %p46, %p47
    %p49 = scmp.ne.s32.totalorder %s35, %s36
    %p50 = scmp.eq.s32.totalorder %s16, 1
    %p51 = por %p49, %p50
    %p53 = scmp.ne.s32.totalorder %s36, %s52
    %p54 = scmp.eq.s32.totalorder %s16, 0
    %p55 = por %p53, %p54
    %s56 = ssub.s32 %s18, %s25
    %p57 = scmp.eq.s32.totalorder %s56, 0
    %s59 = sadd.s32 %s58, 1
    %s60 = scalar_select %p57, %s58, %s59
    %p63 = pneg %p57
    %p64 = scmp.eq.s32.totalorder %s10, 1
    %p65 = por %p63, %p64
    %p66 = scmp.ne.s32.totalorder %s58, %s61
    %p67 = scmp.eq.s32.totalorder %s10, 0
    %p68 = por %p66, %p67
    %p69 = scmp.ne.s32.totalorder %s58, %s61
    %p70 = scmp.eq.s32.totalorder %s15, 1
    %p71 = por %p69, %p70
    %p72 = scmp.ne.s32.totalorder %s61, %s62
    %p73 = scmp.eq.s32.totalorder %s15, 0
    %p74 = por %p72, %p73
    %p75 = scmp.ne.s32.totalorder %s61, %s62
    %p76 = scmp.eq.s32.totalorder %s16, 1
    %p77 = por %p75, %p76
    %p79 = scmp.ne.s32.totalorder %s62, %s78
    %p80 = scmp.eq.s32.totalorder %s16, 0
    %p81 = por %p79, %p80
    %s82 = ssub.s32 %s18, %s25
    %p83 = scmp.eq.s32.totalorder %s82, 0
    %s85 = sadd.s32 %s84, 1
    %s86 = scalar_select %p83, %s84, %s85
    %p89 = pneg %p83
    %p90 = scmp.eq.s32.totalorder %s10, 1
    %p91 = por %p89, %p90
    %p92 = scmp.ne.s32.totalorder %s84, %s87
    %p93 = scmp.eq.s32.totalorder %s10, 0
    %p94 = por %p92, %p93
    %p95 = scmp.ne.s32.totalorder %s84, %s87
    %p96 = scmp.eq.s32.totalorder %s15, 1
    %p97 = por %p95, %p96
    %p98 = scmp.ne.s32.totalorder %s87, %s88
    %p99 = scmp.eq.s32.totalorder %s15, 0
    %p100 = por %p98, %p99
    %p101 = scmp.ne.s32.totalorder %s87, %s88
    %p102 = scmp.eq.s32.totalorder %s16, 1
    %p103 = por %p101, %p102
    %p105 = scmp.ne.s32.totalorder %s88, %s104
    %p106 = scmp.eq.s32.totalorder %s16, 0
    %p107 = por %p105, %p106
    %s109 = sadd.s32 %s108, 1
    %p112 = scmp.eq.s32.totalorder %s10, 1
    %p113 = scmp.ne.s32.totalorder %s108, %s110
    %p114 = scmp.eq.s32.totalorder %s10, 0
    %p115 = por %p113, %p114
    %p116 = scmp.ne.s32.totalorder %s108, %s110
    %p117 = scmp.eq.s32.totalorder %s15, 1
    %p118 = por %p116, %p117
    %p119 = scmp.ne.s32.totalorder %s110, %s111
    %p120 = scmp.eq.s32.totalorder %s15, 0
    %p121 = por %p119, %p120
    %p122 = scmp.ne.s32.totalorder %s110, %s111
    %p123 = scmp.eq.s32.totalorder %s16, 1
    %p124 = por %p122, %p123
    %p126 = scmp.ne.s32.totalorder %s111, %s125
    %p127 = scmp.eq.s32.totalorder %s16, 0
    %p128 = por %p126, %p127
    %s129 = ssub.s32 %s17, %s29
    %s130 = ssub.s32 %s18, %s25
    %s131 = sor.u32 %s129, %s130
    %p132 = scmp.eq.s32.totalorder %s131, 0
    %s134 = sadd.s32 %s133, 1
    %s135 = scalar_select %p132, %s133, %s134
    %p138 = pneg %p132
    %p139 = scmp.eq.s32.totalorder %s10, 1
    %p140 = por %p138, %p139
    %p141 = scmp.ne.s32.totalorder %s133, %s136
    %p142 = scmp.eq.s32.totalorder %s10, 0
    %p143 = por %p141, %p142
    %p144 = scmp.ne.s32.totalorder %s133, %s136
    %p145 = scmp.eq.s32.totalorder %s15, 1
    %p146 = por %p144, %p145
    %p147 = scmp.ne.s32.totalorder %s136, %s137
    %p148 = scmp.eq.s32.totalorder %s15, 0
    %p149 = por %p147, %p148
    %p150 = scmp.ne.s32.totalorder %s136, %s137
    %p151 = scmp.eq.s32.totalorder %s16, 1
    %p152 = por %p150, %p151
    %p154 = scmp.ne.s32.totalorder %s137, %s153
    %p155 = scmp.eq.s32.totalorder %s16, 0
    %p156 = por %p154, %p155
    %p157 = scmp.le.s32.totalorder 1, %s10
    %p158 = scmp.lt.s32.totalorder %s10, 3
    %p159 = pnand %p157, %p158
    %p160 = pneg %p159
    // Predicated region
    $region9: #{conv_block_forward.1} parent=5 // pred_check
      _
    $region10: #{conv_block_forward.1} parent=5 // pred_check_branch
      %162 = sbr.rel (%p159) target = $region12
    $region11: #{conv_block_forward.1} parent=5 // pred_region
      %s163 = ssub.s32 %s10, 1
      // Predicated region
      $region13: #{conv_block_forward.1} parent=11 // pred_check
        %p164 = pneg %p74
      $region14: #{conv_block_forward.1} parent=11 // pred_check_branch
        %166 = sbr.rel (%p164) target = $region16
      $region15: #{conv_block_forward.1} parent=11 // pred_region
        %p167 = scmp.lt.s32.totalorder %s20, 0
        %s168 = scalar_select %p167, %s20, 0
        %s169 = smul.addr %s168, 2
        %s170 = smul.addr %s169, 4
        %s171 = scalar_lea.vmem %s1, %s170
      $region16: #{conv_block_forward.1} parent=11 // pred_fallthru
        _
      // Predicated region
      $region17: #{conv_block_forward.1} parent=11 // pred_check
        %p172 = pneg %p100
      $region18: #{conv_block_forward.1} parent=11 // pred_check_branch
        %174 = sbr.rel (%p172) target = $region20
      $region19: #{conv_block_forward.1} parent=11 // pred_region
        %p175 = scmp.lt.s32.totalorder %s20, 0
        %s176 = scalar_select %p175, %s20, 0
        %s177 = smul.addr %s176, 8
        %s178 = scalar_lea.vmem %s2, %s177
      $region20: #{conv_block_forward.1} parent=11 // pred_fallthru
        _
      // Predicated region
      $region21: #{conv_block_forward.1} parent=11 // pred_check
        %p179 = pneg %p121
      $region22: #{conv_block_forward.1} parent=11 // pred_check_branch
        %181 = sbr.rel (%p179) target = $region24
      $region23: #{conv_block_forward.1} parent=11 // pred_region
        _
      $region24: #{conv_block_forward.1} parent=11 // pred_fallthru
        _
    $region12: #{conv_block_forward.1} parent=5 // pred_fallthru
      _
    %p182 = scmp.lt.s32.totalorder %s10, 2
    // Predicated region
    $region25: #{conv_block_forward.1} parent=5 // pred_check
      %p183 = pneg %p182
    $region26: #{conv_block_forward.1} parent=5 // pred_check_branch
      %185 = sbr.rel (%p183) target = $region28
    $region27: #{conv_block_forward.1} parent=5 // pred_region
      // Predicated region
      $region29: #{conv_block_forward.1} parent=27 // pred_check
        %p186 = pneg %p42
      $region30: #{conv_block_forward.1} parent=27 // pred_check_branch
        %188 = sbr.rel (%p186) target = $region32
      $region31: #{conv_block_forward.1} parent=27 // pred_region
        %p189 = scmp.lt.s32.totalorder %s17, 1
        %s190 = scalar_select %p189, %s17, 1
        %s191 = smul.addr %s190, 24
        %s192 = smul.addr %s191, 4
        %s193 = scalar_lea.vmem %s0, %s192
      $region32: #{conv_block_forward.1} parent=27 // pred_fallthru
        _
    $region28: #{conv_block_forward.1} parent=5 // pred_fallthru
      _
    %p194 = scmp.le.s32.totalorder 1, %s10
    %p195 = scmp.lt.s32.totalorder %s10, 3
    %p196 = pnand %p194, %p195
    %p197 = pneg %p196
    // Predicated region
    $region33: #{conv_block_forward.1} parent=5 // pred_check
      _
    $region34: #{conv_block_forward.1} parent=5 // pred_check_branch
      %199 = sbr.rel (%p196) target = $region36
    $region35: #{conv_block_forward.1} parent=5 // pred_region
      %s200 = ssub.s32 %s10, 1
      %p201 = scmp.lt.s32.totalorder %s19, 1
      %s202 = scalar_select %p201, %s19, 1
      %s203 = smul.addr %s202, 24
      %s204 = smul.addr %s203, 4
      %s205 = scalar_lea.vmem %s0, %s204
      %p206 = pneg %p48
      %p207 = pneg %p45
      %p208 = scmp.lt.s32.totalorder %s20, 0
      %s209 = scalar_select %p208, %s20, 0
      %s210 = smul.addr %s209, 2
      %s211 = smul.addr %s210, 4
      %s212 = scalar_lea.vmem %s1, %s211
      %p213 = pneg %p74
      %p214 = pneg %p71
      %p215 = scmp.lt.s32.totalorder %s20, 0
      %s216 = scalar_select %p215, %s20, 0
      %s217 = smul.addr %s216, 8
      %s218 = scalar_lea.vmem %s2, %s217
      %p219 = pneg %p100
      %p220 = pneg %p97
      %p221 = pneg %p121
      %p222 = pneg %p118
      %p223 = pneg %p149
      %p224 = pneg %p146
      %p225 = scmp.lt.s32.totalorder %s19, 1
      %s226 = scalar_select %p225, %s19, 1
      %p227 = scmp.lt.s32.totalorder %s20, 0
      %s228 = scalar_select %p227, %s20, 0
      %s229 = smul.addr %s228, 3
      %s230 = smul.addr %s226, 12
      %s231 = sadd.s32 %s229, %s230
      %s232 = smul.addr %s231, 8
      %s233 = scalar_lea.vmem %s4, %s232
      %p234 = scmp.lt.s32.totalorder %s19, 1
      %s235 = scalar_select %p234, %s19, 1
      %s236 = smul.addr %s235, 24
      %s237 = smul.addr %s236, 4
      %s238 = scalar_lea.vmem %s0, %s237
      %p239 = scmp.lt.s32.totalorder %s20, 0
      %s240 = scalar_select %p239, %s20, 0
      %s241 = smul.addr %s240, 2
      %s242 = smul.addr %s241, 4
      %s243 = scalar_lea.vmem %s1, %s242
      %p244 = scmp.lt.s32.totalorder %s20, 0
      %s245 = scalar_select %p244, %s20, 0
      %s246 = smul.addr %s245, 8
      %s247 = scalar_lea.vmem %s2, %s246
      %p248 = scmp.lt.s32.totalorder %s19, 1
      %s249 = scalar_select %p248, %s19, 1
      %p250 = scmp.lt.s32.totalorder %s20, 0
      %s251 = scalar_select %p250, %s20, 0
      %s252 = smul.addr %s251, 3
      %s253 = smul.addr %s249, 12
      %s254 = sadd.s32 %s252, %s253
      %s255 = smul.addr %s254, 8
      %s256 = scalar_lea.vmem %s4, %s255
      %v258 = vld [vmem:[%s243] sm:$0xff]
      %v259 = vld [vmem:[%s247] sm:$0xff]
      %v260 = vld [vmem:[%s3] sm:$0x7]
      %v261 = vld [vmem:[%s238] sm:$0xff]
      %v262 = vld [vmem:[%s238 + $0x8] sm:$0xf]
      %263 = vst [vmem:[#allocation2] sm:$0xff] %v261
      %264 = vst [vmem:[#allocation2 + $0x8] sm:$0xf] %v262
      %v265 = vld [vmem:[%s238] sm:$0xff]
      %v266 = vld [vmem:[%s238 + $0x8] sm:$0xff]
      %269 = vrot.lane.b32.xlu0 %v265, 127
      %v270 = vpop.permute.xlu0 %269
      %271 = vrot.lane.b32.xlu0 %v266, 127
      %v272 = vpop.permute.xlu0 %271
      %v273 = vrot.slane %v270, 4
      %v274 = vrot.slane %v272, 4
      %vm275 = vcmask 1043456
      %v276 = vsel %vm275, %v273, %v274
      %vm277 = vcmask 1039360
      %v278 = vsel %vm277, %v270, %v276
      %v279 = vsel %vm277, %v272, %v274
      %282 = vst [vmem:[#allocation2 + $0xc] sm:$0xff] %v278
      %283 = vst [vmem:[#allocation2 + $0x14] sm:$0xf] %v279
      %v284 = vld [vmem:[%s238] sm:$0xff]
      %v285 = vld [vmem:[%s238 + $0x8] sm:$0xff]
      %288 = vrot.lane.b32.xlu0 %v284, 126
      %v289 = vpop.permute.xlu0 %288
      %290 = vrot.lane.b32.xlu0 %v285, 126
      %v291 = vpop.permute.xlu0 %290
      %v292 = vrot.slane %v289, 4
      %v293 = vrot.slane %v291, 4
      %v294 = vsel %vm275, %v292, %v293
      %vm295 = vcmask 1031168
      %v296 = vsel %vm295, %v289, %v294
      %v297 = vsel %vm295, %v291, %v293
      %300 = vst [vmem:[#allocation2 + $0x18] sm:$0xff] %v296
      %301 = vst [vmem:[#allocation2 + $0x20] sm:$0xf] %v297
      %v302 = vld [vmem:[%s238] sm:$0xff]
      %v303 = vld [vmem:[%s238 + $0x8] sm:$0xff]
      %306 = vrot.lane.b32.xlu0 %v302, 110
      %v307 = vpop.permute.xlu0 %306
      %308 = vrot.lane.b32.xlu0 %v303, 110
      %v309 = vpop.permute.xlu0 %308
      %v310 = vrot.slane %v307, 4
      %v311 = vrot.slane %v309, 4
      %v312 = vsel %vm275, %v310, %v311
      %vm313 = vcmask 900096
      %v314 = vsel %vm313, %v307, %v312
      %v315 = vsel %vm313, %v309, %v311
      %318 = vst [vmem:[#allocation2 + $0x24] sm:$0xff] %v314
      %319 = vst [vmem:[#allocation2 + $0x2c] sm:$0xf] %v315
      %v320 = vld [vmem:[%s238] sm:$0xff]
      %v321 = vld [vmem:[%s238 + $0x8] sm:$0xff]
      %324 = vrot.lane.b32.xlu0 %v320, 109
      %v325 = vpop.permute.xlu0 %324
      %326 = vrot.lane.b32.xlu0 %v321, 109
      %v327 = vpop.permute.xlu0 %326
      %v328 = vrot.slane %v325, 4
      %v329 = vrot.slane %v327, 4
      %v330 = vsel %vm275, %v328, %v329
      %vm331 = vcmask 891904
      %v332 = vsel %vm331, %v325, %v330
      %v333 = vsel %vm331, %v327, %v329
      %336 = vst [vmem:[#allocation2 + $0x30] sm:$0xff] %v332
      %337 = vst [vmem:[#allocation2 + $0x38] sm:$0xf] %v333
      %v338 = vld [vmem:[%s238] sm:$0xff]
      %v339 = vld [vmem:[%s238 + $0x8] sm:$0xff]
      %342 = vrot.lane.b32.xlu0 %v338, 108
      %v343 = vpop.permute.xlu0 %342
      %344 = vrot.lane.b32.xlu0 %v339, 108
      %v345 = vpop.permute.xlu0 %344
      %v346 = vrot.slane %v343, 4
      %v347 = vrot.slane %v345, 4
      %v348 = vsel %vm275, %v346, %v347
      %vm349 = vcmask 883712
      %v350 = vsel %vm349, %v343, %v348
      %v351 = vsel %vm349, %v345, %v347
      %354 = vst [vmem:[#allocation2 + $0x3c] sm:$0xff] %v350
      %355 = vst [vmem:[#allocation2 + $0x44] sm:$0xf] %v351
      %v356 = vld [vmem:[%s238] sm:$0xff]
      %v357 = vld [vmem:[%s238 + $0x8] sm:$0xff]
      %360 = vrot.lane.b32.xlu0 %v356, 92
      %v361 = vpop.permute.xlu0 %360
      %362 = vrot.lane.b32.xlu0 %v357, 92
      %v363 = vpop.permute.xlu0 %362
      %v364 = vrot.slane %v361, 4
      %v365 = vrot.slane %v363, 4
      %v366 = vsel %vm275, %v364, %v365
      %vm367 = vcmask 752640
      %v368 = vsel %vm367, %v361, %v366
      %v369 = vsel %vm367, %v363, %v365
      %372 = vst [vmem:[#allocation2 + $0x48] sm:$0xff] %v368
      %373 = vst [vmem:[#allocation2 + $0x50] sm:$0xf] %v369
      %v374 = vld [vmem:[%s238] sm:$0xff]
      %v375 = vld [vmem:[%s238 + $0x8] sm:$0xff]
      %378 = vrot.lane.b32.xlu0 %v374, 91
      %v379 = vpop.permute.xlu0 %378
      %380 = vrot.lane.b32.xlu0 %v375, 91
      %v381 = vpop.permute.xlu0 %380
      %v382 = vrot.slane %v379, 4
      %v383 = vrot.slane %v381, 4
      %v384 = vsel %vm275, %v382, %v383
      %vm385 = vcmask 744448
      %v386 = vsel %vm385, %v379, %v384
      %v387 = vsel %vm385, %v381, %v383
      %390 = vst [vmem:[#allocation2 + $0x54] sm:$0xff] %v386
      %391 = vst [vmem:[#allocation2 + $0x5c] sm:$0xf] %v387
      %v392 = vld [vmem:[%s238] sm:$0xff]
      %v393 = vld [vmem:[%s238 + $0x8] sm:$0xff]
      %396 = vrot.lane.b32.xlu0 %v392, 90
      %v397 = vpop.permute.xlu0 %396
      %398 = vrot.lane.b32.xlu0 %v393, 90
      %v399 = vpop.permute.xlu0 %398
      %v400 = vrot.slane %v397, 4
      %v401 = vrot.slane %v399, 4
      %v402 = vsel %vm275, %v400, %v401
      %vm403 = vcmask 736256
      %v404 = vsel %vm403, %v397, %v402
      %v405 = vsel %vm403, %v399, %v401
      %408 = vst [vmem:[#allocation2 + $0x60] sm:$0xff] %v404
      %409 = vst [vmem:[#allocation2 + $0x68] sm:$0xf] %v405
      %s410 = scalar_lea.vmem %s238, 16
      %v411 = vld [vmem:[%s410] sm:$0xff]
      %v412 = vld [vmem:[%s410 + $0x8] sm:$0xf]
      %413 = vst [vmem:[#allocation2 + $0x6c] sm:$0xff] %v411
      %414 = vst [vmem:[#allocation2 + $0x74] sm:$0xf] %v412
      %v415 = vld [vmem:[%s410] sm:$0xff]
      %v416 = vld [vmem:[%s410 + $0x8] sm:$0xff]
      %419 = vrot.lane.b32.xlu0 %v415, 127
      %v420 = vpop.permute.xlu0 %419
      %421 = vrot.lane.b32.xlu0 %v416, 127
      %v422 = vpop.permute.xlu0 %421
      %v423 = vrot.slane %v420, 4
      %v424 = vrot.slane %v422, 4
      %v425 = vsel %vm275, %v423, %v424
      %v426 = vsel %vm277, %v420, %v425
      %v427 = vsel %vm277, %v422, %v424
      %430 = vst [vmem:[#allocation2 + $0x78] sm:$0xff] %v426
      %431 = vst [vmem:[#allocation2 + $0x80] sm:$0xf] %v427
      %v432 = vld [vmem:[%s410] sm:$0xff]
      %v433 = vld [vmem:[%s410 + $0x8] sm:$0xff]
      %436 = vrot.lane.b32.xlu0 %v432, 126
      %v437 = vpop.permute.xlu0 %436
      %438 = vrot.lane.b32.xlu0 %v433, 126
      %v439 = vpop.permute.xlu0 %438
      %v440 = vrot.slane %v437, 4
      %v441 = vrot.slane %v439, 4
      %v442 = vsel %vm275, %v440, %v441
      %v443 = vsel %vm295, %v437, %v442
      %v444 = vsel %vm295, %v439, %v441
      %447 = vst [vmem:[#allocation2 + $0x84] sm:$0xff] %v443
      %448 = vst [vmem:[#allocation2 + $0x8c] sm:$0xf] %v444
      %v449 = vld [vmem:[%s410] sm:$0xff]
      %v450 = vld [vmem:[%s410 + $0x8] sm:$0xff]
      %453 = vrot.lane.b32.xlu0 %v449, 110
      %v454 = vpop.permute.xlu0 %453
      %455 = vrot.lane.b32.xlu0 %v450, 110
      %v456 = vpop.permute.xlu0 %455
      %v457 = vrot.slane %v454, 4
      %v458 = vrot.slane %v456, 4
      %v459 = vsel %vm275, %v457, %v458
      %v460 = vsel %vm313, %v454, %v459
      %v461 = vsel %vm313, %v456, %v458
      %464 = vst [vmem:[#allocation2 + $0x90] sm:$0xff] %v460
      %465 = vst [vmem:[#allocation2 + $0x98] sm:$0xf] %v461
      %v466 = vld [vmem:[%s410] sm:$0xff]
      %v467 = vld [vmem:[%s410 + $0x8] sm:$0xff]
      %470 = vrot.lane.b32.xlu0 %v466, 109
      %v471 = vpop.permute.xlu0 %470
      %472 = vrot.lane.b32.xlu0 %v467, 109
      %v473 = vpop.permute.xlu0 %472
      %v474 = vrot.slane %v471, 4
      %v475 = vrot.slane %v473, 4
      %v476 = vsel %vm275, %v474, %v475
      %v477 = vsel %vm331, %v471, %v476
      %v478 = vsel %vm331, %v473, %v475
      %481 = vst [vmem:[#allocation2 + $0x9c] sm:$0xff] %v477
      %482 = vst [vmem:[#allocation2 + $0xa4] sm:$0xf] %v478
      %v483 = vld [vmem:[%s410] sm:$0xff]
      %v484 = vld [vmem:[%s410 + $0x8] sm:$0xff]
      %487 = vrot.lane.b32.xlu0 %v483, 108
      %v488 = vpop.permute.xlu0 %487
      %489 = vrot.lane.b32.xlu0 %v484, 108
      %v490 = vpop.permute.xlu0 %489
      %v491 = vrot.slane %v488, 4
      %v492 = vrot.slane %v490, 4
      %v493 = vsel %vm275, %v491, %v492
      %v494 = vsel %vm349, %v488, %v493
      %v495 = vsel %vm349, %v490, %v492
      %498 = vst [vmem:[#allocation2 + $0xa8] sm:$0xff] %v494
      %499 = vst [vmem:[#allocation2 + $0xb0] sm:$0xf] %v495
      %v500 = vld [vmem:[%s410] sm:$0xff]
      %v501 = vld [vmem:[%s410 + $0x8] sm:$0xff]
      %504 = vrot.lane.b32.xlu0 %v500, 92
      %v505 = vpop.permute.xlu0 %504
      %506 = vrot.lane.b32.xlu0 %v501, 92
      %v507 = vpop.permute.xlu0 %506
      %v508 = vrot.slane %v505, 4
      %v509 = vrot.slane %v507, 4
      %v510 = vsel %vm275, %v508, %v509
      %v511 = vsel %vm367, %v505, %v510
      %v512 = vsel %vm367, %v507, %v509
      %515 = vst [vmem:[#allocation2 + $0xb4] sm:$0xff] %v511
      %516 = vst [vmem:[#allocation2 + $0xbc] sm:$0xf] %v512
      %v517 = vld [vmem:[%s410] sm:$0xff]
      %v518 = vld [vmem:[%s410 + $0x8] sm:$0xff]
      %521 = vrot.lane.b32.xlu0 %v517, 91
      %v522 = vpop.permute.xlu0 %521
      %523 = vrot.lane.b32.xlu0 %v518, 91
      %v524 = vpop.permute.xlu0 %523
      %v525 = vrot.slane %v522, 4
      %v526 = vrot.slane %v524, 4
      %v527 = vsel %vm275, %v525, %v526
      %v528 = vsel %vm385, %v522, %v527
      %v529 = vsel %vm385, %v524, %v526
      %532 = vst [vmem:[#allocation2 + $0xc0] sm:$0xff] %v528
      %533 = vst [vmem:[#allocation2 + $0xc8] sm:$0xf] %v529
      %v534 = vld [vmem:[%s410] sm:$0xff]
      %v535 = vld [vmem:[%s410 + $0x8] sm:$0xff]
      %538 = vrot.lane.b32.xlu0 %v534, 90
      %v539 = vpop.permute.xlu0 %538
      %540 = vrot.lane.b32.xlu0 %v535, 90
      %v541 = vpop.permute.xlu0 %540
      %v542 = vrot.slane %v539, 4
      %v543 = vrot.slane %v541, 4
      %v544 = vsel %vm275, %v542, %v543
      %v545 = vsel %vm403, %v539, %v544
      %v546 = vsel %vm403, %v541, %v543
      %549 = vst [vmem:[#allocation2 + $0xcc] sm:$0xff] %v545
      %550 = vst [vmem:[#allocation2 + $0xd4] sm:$0xf] %v546
      %s551 = scalar_lea.vmem %s238, 32
      %v552 = vld [vmem:[%s551] sm:$0xff]
      %v553 = vld [vmem:[%s551 + $0x8] sm:$0xf]
      %554 = vst [vmem:[#allocation2 + $0xd8] sm:$0xff] %v552
      %555 = vst [vmem:[#allocation2 + $0xe0] sm:$0xf] %v553
      %v556 = vld [vmem:[%s551] sm:$0xff]
      %v557 = vld [vmem:[%s551 + $0x8] sm:$0xff]
      %560 = vrot.lane.b32.xlu0 %v556, 127
      %v561 = vpop.permute.xlu0 %560
      %562 = vrot.lane.b32.xlu0 %v557, 127
      %v563 = vpop.permute.xlu0 %562
      %v564 = vrot.slane %v561, 4
      %v565 = vrot.slane %v563, 4
      %v566 = vsel %vm275, %v564, %v565
      %v567 = vsel %vm277, %v561, %v566
      %v568 = vsel %vm277, %v563, %v565
      %571 = vst [vmem:[#allocation2 + $0xe4] sm:$0xff] %v567
      %572 = vst [vmem:[#allocation2 + $0xec] sm:$0xf] %v568
      %v573 = vld [vmem:[%s551] sm:$0xff]
      %v574 = vld [vmem:[%s551 + $0x8] sm:$0xff]
      %577 = vrot.lane.b32.xlu0 %v573, 126
      %v578 = vpop.permute.xlu0 %577
      %579 = vrot.lane.b32.xlu0 %v574, 126
      %v580 = vpop.permute.xlu0 %579
      %v581 = vrot.slane %v578, 4
      %v582 = vrot.slane %v580, 4
      %v583 = vsel %vm275, %v581, %v582
      %v584 = vsel %vm295, %v578, %v583
      %v585 = vsel %vm295, %v580, %v582
      %588 = vst [vmem:[#allocation2 + $0xf0] sm:$0xff] %v584
      %589 = vst [vmem:[#allocation2 + $0xf8] sm:$0xf] %v585
      %v590 = vld [vmem:[%s551] sm:$0xff]
      %v591 = vld [vmem:[%s551 + $0x8] sm:$0xff]
      %594 = vrot.lane.b32.xlu0 %v590, 110
      %v595 = vpop.permute.xlu0 %594
      %596 = vrot.lane.b32.xlu0 %v591, 110
      %v597 = vpop.permute.xlu0 %596
      %v598 = vrot.slane %v595, 4
      %v599 = vrot.slane %v597, 4
      %v600 = vsel %vm275, %v598, %v599
      %v601 = vsel %vm313, %v595, %v600
      %v602 = vsel %vm313, %v597, %v599
      %605 = vst [vmem:[#allocation2 + $0xfc] sm:$0xff] %v601
      %606 = vst [vmem:[#allocation2 + $0x104] sm:$0xf] %v602
      %v607 = vld [vmem:[%s551] sm:$0xff]
      %v608 = vld [vmem:[%s551 + $0x8] sm:$0xff]
      %611 = vrot.lane.b32.xlu0 %v607, 109
      %v612 = vpop.permute.xlu0 %611
      %613 = vrot.lane.b32.xlu0 %v608, 109
      %v614 = vpop.permute.xlu0 %613
      %v615 = vrot.slane %v612, 4
      %v616 = vrot.slane %v614, 4
      %v617 = vsel %vm275, %v615, %v616
      %v618 = vsel %vm331, %v612, %v617
      %v619 = vsel %vm331, %v614, %v616
      %622 = vst [vmem:[#allocation2 + $0x108] sm:$0xff] %v618
      %623 = vst [vmem:[#allocation2 + $0x110] sm:$0xf] %v619
      %v624 = vld [vmem:[%s551] sm:$0xff]
      %v625 = vld [vmem:[%s551 + $0x8] sm:$0xff]
      %628 = vrot.lane.b32.xlu0 %v624, 108
      %v629 = vpop.permute.xlu0 %628
      %630 = vrot.lane.b32.xlu0 %v625, 108
      %v631 = vpop.permute.xlu0 %630
      %v632 = vrot.slane %v629, 4
      %v633 = vrot.slane %v631, 4
      %v634 = vsel %vm275, %v632, %v633
      %v635 = vsel %vm349, %v629, %v634
      %v636 = vsel %vm349, %v631, %v633
      %639 = vst [vmem:[#allocation2 + $0x114] sm:$0xff] %v635
      %640 = vst [vmem:[#allocation2 + $0x11c] sm:$0xf] %v636
      %v641 = vld [vmem:[%s551] sm:$0xff]
      %v642 = vld [vmem:[%s551 + $0x8] sm:$0xff]
      %645 = vrot.lane.b32.xlu0 %v641, 92
      %v646 = vpop.permute.xlu0 %645
      %647 = vrot.lane.b32.xlu0 %v642, 92
      %v648 = vpop.permute.xlu0 %647
      %v649 = vrot.slane %v646, 4
      %v650 = vrot.slane %v648, 4
      %v651 = vsel %vm275, %v649, %v650
      %v652 = vsel %vm367, %v646, %v651
      %v653 = vsel %vm367, %v648, %v650
      %656 = vst [vmem:[#allocation2 + $0x120] sm:$0xff] %v652
      %657 = vst [vmem:[#allocation2 + $0x128] sm:$0xf] %v653
      %v658 = vld [vmem:[%s551] sm:$0xff]
      %v659 = vld [vmem:[%s551 + $0x8] sm:$0xff]
      %662 = vrot.lane.b32.xlu0 %v658, 91
      %v663 = vpop.permute.xlu0 %662
      %664 = vrot.lane.b32.xlu0 %v659, 91
      %v665 = vpop.permute.xlu0 %664
      %v666 = vrot.slane %v663, 4
      %v667 = vrot.slane %v665, 4
      %v668 = vsel %vm275, %v666, %v667
      %v669 = vsel %vm385, %v663, %v668
      %v670 = vsel %vm385, %v665, %v667
      %673 = vst [vmem:[#allocation2 + $0x12c] sm:$0xff] %v669
      %674 = vst [vmem:[#allocation2 + $0x134] sm:$0xf] %v670
      %v675 = vld [vmem:[%s551] sm:$0xff]
      %v676 = vld [vmem:[%s551 + $0x8] sm:$0xff]
      %679 = vrot.lane.b32.xlu0 %v675, 90
      %v680 = vpop.permute.xlu0 %679
      %681 = vrot.lane.b32.xlu0 %v676, 90
      %v682 = vpop.permute.xlu0 %681
      %v683 = vrot.slane %v680, 4
      %v684 = vrot.slane %v682, 4
      %v685 = vsel %vm275, %v683, %v684
      %v686 = vsel %vm403, %v680, %v685
      %v687 = vsel %vm403, %v682, %v684
      %690 = vst [vmem:[#allocation2 + $0x138] sm:$0xff] %v686
      %691 = vst [vmem:[#allocation2 + $0x140] sm:$0xf] %v687
      %v692 = vld [vmem:[#allocation2] sm:$0xff]
      %v693 = vld [vmem:[#allocation2 + $0x8] sm:$0xf]
      %v694 = vld [vmem:[#allocation2 + $0xc] sm:$0xff]
      %v695 = vld [vmem:[#allocation2 + $0x14] sm:$0xf]
      %v696 = vld [vmem:[#allocation2 + $0x18] sm:$0xff]
      %v697 = vld [vmem:[#allocation2 + $0x20] sm:$0xf]
      %v698 = vld [vmem:[#allocation2 + $0x24] sm:$0xff]
      %v699 = vld [vmem:[#allocation2 + $0x2c] sm:$0xf]
      %v700 = vld [vmem:[#allocation2 + $0x30] sm:$0xff]
      %v701 = vld [vmem:[#allocation2 + $0x38] sm:$0xf]
      %v702 = vld [vmem:[#allocation2 + $0x3c] sm:$0xff]
      %v703 = vld [vmem:[#allocation2 + $0x44] sm:$0xf]
      %v704 = vld [vmem:[#allocation2 + $0x48] sm:$0xff]
      %v705 = vld [vmem:[#allocation2 + $0x50] sm:$0xf]
      %v706 = vld [vmem:[#allocation2 + $0x54] sm:$0xff]
      %v707 = vld [vmem:[#allocation2 + $0x5c] sm:$0xf]
      %v708 = vld [vmem:[#allocation2 + $0x60] sm:$0xff]
      %v709 = vld [vmem:[#allocation2 + $0x68] sm:$0xf]
      %v710 = vld [vmem:[#allocation2 + $0x6c] sm:$0xff]
      %v711 = vld [vmem:[#allocation2 + $0x74] sm:$0xf]
      %v712 = vld [vmem:[#allocation2 + $0x78] sm:$0xff]
      %v713 = vld [vmem:[#allocation2 + $0x80] sm:$0xf]
      %v714 = vld [vmem:[#allocation2 + $0x84] sm:$0xff]
      %v715 = vld [vmem:[#allocation2 + $0x8c] sm:$0xf]
      %v716 = vld [vmem:[#allocation2 + $0x90] sm:$0xff]
      %v717 = vld [vmem:[#allocation2 + $0x98] sm:$0xf]
      %v718 = vld [vmem:[#allocation2 + $0x9c] sm:$0xff]
      %v719 = vld [vmem:[#allocation2 + $0xa4] sm:$0xf]
      %v720 = vld [vmem:[#allocation2 + $0xa8] sm:$0xff]
      %v721 = vld [vmem:[#allocation2 + $0xb0] sm:$0xf]
      %v722 = vld [vmem:[#allocation2 + $0xb4] sm:$0xff]
      %v723 = vld [vmem:[#allocation2 + $0xbc] sm:$0xf]
      %v724 = vld [vmem:[#allocation2 + $0xc0] sm:$0xff]
      %v725 = vld [vmem:[#allocation2 + $0xc8] sm:$0xf]
      %v726 = vld [vmem:[#allocation2 + $0xcc] sm:$0xff]
      %v727 = vld [vmem:[#allocation2 + $0xd4] sm:$0xf]
      %v728 = vld [vmem:[#allocation2 + $0xd8] sm:$0xff]
      %v729 = vld [vmem:[#allocation2 + $0xe0] sm:$0xf]
      %v730 = vld [vmem:[#allocation2 + $0xe4] sm:$0xff]
      %v731 = vld [vmem:[#allocation2 + $0xec] sm:$0xf]
      %v732 = vld [vmem:[#allocation2 + $0xf0] sm:$0xff]
      %v733 = vld [vmem:[#allocation2 + $0xf8] sm:$0xf]
      %v734 = vld [vmem:[#allocation2 + $0xfc] sm:$0xff]
      %v735 = vld [vmem:[#allocation2 + $0x104] sm:$0xf]
      %v736 = vld [vmem:[#allocation2 + $0x108] sm:$0xff]
      %v737 = vld [vmem:[#allocation2 + $0x110] sm:$0xf]
      %v738 = vld [vmem:[#allocation2 + $0x114] sm:$0xff]
      %v739 = vld [vmem:[#allocation2 + $0x11c] sm:$0xf]
      %v740 = vld [vmem:[#allocation2 + $0x120] sm:$0xff]
      %v741 = vld [vmem:[#allocation2 + $0x128] sm:$0xf]
      %v742 = vld [vmem:[#allocation2 + $0x12c] sm:$0xff]
      %v743 = vld [vmem:[#allocation2 + $0x134] sm:$0xf]
      %v744 = vld [vmem:[#allocation2 + $0x138] sm:$0xff]
      %v745 = vld [vmem:[#allocation2 + $0x140] sm:$0xf]
      %747 = vset.pattern.permute.xlu0 0
      %748 = vperm.xlu0 %747, %v259
      %v749 = vpop.permute.xlu0 %748
      %v752 = vunpack.c.l.b16 %v258
      %v753 = vunpack.c.h.b16 %v258
      %v754 = vpack.c.b16 %v752, %v752
      %v755 = vpack.c.b16 %v753, %v753
      %v811 = vunpack.c.l.b16 %v692
      %v812 = vunpack.c.h.b16 %v692
      %v813 = vunpack.c.l.b16 %v693
      %v814 = vunpack.c.l.b16 %v694
      %v815 = vunpack.c.h.b16 %v694
      %v816 = vunpack.c.l.b16 %v695
      %v817 = vunpack.c.l.b16 %v696
      %v818 = vunpack.c.h.b16 %v696
      %v819 = vunpack.c.l.b16 %v697
      %v820 = vunpack.c.l.b16 %v698
      %v821 = vunpack.c.h.b16 %v698
      %v822 = vunpack.c.l.b16 %v699
      %v823 = vunpack.c.l.b16 %v700
      %v824 = vunpack.c.h.b16 %v700
      %v825 = vunpack.c.l.b16 %v701
      %v826 = vunpack.c.l.b16 %v702
      %v827 = vunpack.c.h.b16 %v702
      %v828 = vunpack.c.l.b16 %v703
      %v829 = vunpack.c.l.b16 %v704
      %v830 = vunpack.c.h.b16 %v704
      %v831 = vunpack.c.l.b16 %v705
      %v832 = vunpack.c.l.b16 %v706
      %v833 = vunpack.c.h.b16 %v706
      %v834 = vunpack.c.l.b16 %v707
      %v835 = vunpack.c.l.b16 %v708
      %v836 = vunpack.c.h.b16 %v708
      %v837 = vunpack.c.l.b16 %v709
      %v838 = vunpack.c.l.b16 %v710
      %v839 = vunpack.c.h.b16 %v710
      %v840 = vunpack.c.l.b16 %v711
      %v841 = vunpack.c.l.b16 %v712
      %v842 = vunpack.c.h.b16 %v712
      %v843 = vunpack.c.l.b16 %v713
      %v844 = vunpack.c.l.b16 %v714
      %v845 = vunpack.c.h.b16 %v714
      %v846 = vunpack.c.l.b16 %v715
      %v847 = vunpack.c.l.b16 %v716
      %v848 = vunpack.c.h.b16 %v716
      %v849 = vunpack.c.l.b16 %v717
      %v850 = vunpack.c.l.b16 %v718
      %v851 = vunpack.c.h.b16 %v718
      %v852 = vunpack.c.l.b16 %v719
      %v853 = vunpack.c.l.b16 %v720
      %v854 = vunpack.c.h.b16 %v720
      %v855 = vunpack.c.l.b16 %v721
      %v856 = vunpack.c.l.b16 %v722
      %v857 = vunpack.c.h.b16 %v722
      %v858 = vunpack.c.l.b16 %v723
      %v859 = vunpack.c.l.b16 %v724
      %v860 = vunpack.c.h.b16 %v724
      %v861 = vunpack.c.l.b16 %v725
      %v862 = vunpack.c.l.b16 %v726
      %v863 = vunpack.c.h.b16 %v726
      %v864 = vunpack.c.l.b16 %v727
      %v865 = vunpack.c.l.b16 %v728
      %v866 = vunpack.c.h.b16 %v728
      %v867 = vunpack.c.l.b16 %v729
      %v868 = vunpack.c.l.b16 %v730
      %v869 = vunpack.c.h.b16 %v730
      %v870 = vunpack.c.l.b16 %v731
      %v871 = vunpack.c.l.b16 %v732
      %v872 = vunpack.c.h.b16 %v732
      %v873 = vunpack.c.l.b16 %v733
      %v874 = vunpack.c.l.b16 %v734
      %v875 = vunpack.c.h.b16 %v734
      %v876 = vunpack.c.l.b16 %v735
      %v877 = vunpack.c.l.b16 %v736
      %v878 = vunpack.c.h.b16 %v736
      %v879 = vunpack.c.l.b16 %v737
      %v880 = vunpack.c.l.b16 %v738
      %v881 = vunpack.c.h.b16 %v738
      %v882 = vunpack.c.l.b16 %v739
      %v883 = vunpack.c.l.b16 %v740
      %v884 = vunpack.c.h.b16 %v740
      %v885 = vunpack.c.l.b16 %v741
      %v886 = vunpack.c.l.b16 %v742
      %v887 = vunpack.c.h.b16 %v742
      %v888 = vunpack.c.l.b16 %v743
      %v889 = vunpack.c.l.b16 %v744
      %v890 = vunpack.c.h.b16 %v744
      %v891 = vunpack.c.l.b16 %v745
      %v892 = vpack.c.b16 %v814, %v811
      %v893 = vpack.c.b16 %v815, %v812
      %v894 = vpack.c.b16 %v816, %v813
      %v895 = vpack.c.b16 %v820, %v817
      %v896 = vpack.c.b16 %v821, %v818
      %v897 = vpack.c.b16 %v822, %v819
      %v898 = vpack.c.b16 %v826, %v823
      %v899 = vpack.c.b16 %v827, %v824
      %v900 = vpack.c.b16 %v828, %v825
      %v901 = vpack.c.b16 %v832, %v829
      %v902 = vpack.c.b16 %v833, %v830
      %v903 = vpack.c.b16 %v834, %v831
      %v904 = vpack.c.b16 %v838, %v835
      %v905 = vpack.c.b16 %v839, %v836
      %v906 = vpack.c.b16 %v840, %v837
      %v907 = vpack.c.b16 %v844, %v841
      %v908 = vpack.c.b16 %v845, %v842
      %v909 = vpack.c.b16 %v846, %v843
      %v910 = vpack.c.b16 %v850, %v847
      %v911 = vpack.c.b16 %v851, %v848
      %v912 = vpack.c.b16 %v852, %v849
      %v913 = vpack.c.b16 %v856, %v853
      %v914 = vpack.c.b16 %v857, %v854
      %v915 = vpack.c.b16 %v858, %v855
      %v916 = vpack.c.b16 %v862, %v859
      %v917 = vpack.c.b16 %v863, %v860
      %v918 = vpack.c.b16 %v864, %v861
      %v919 = vpack.c.b16 %v868, %v865
      %v920 = vpack.c.b16 %v869, %v866
      %v921 = vpack.c.b16 %v870, %v867
      %v922 = vpack.c.b16 %v874, %v871
      %v923 = vpack.c.b16 %v875, %v872
      %v924 = vpack.c.b16 %v876, %v873
      %v925 = vpack.c.b16 %v880, %v877
      %v926 = vpack.c.b16 %v881, %v878
      %v927 = vpack.c.b16 %v882, %v879
      %v928 = vpack.c.b16 %v886, %v883
      %v929 = vpack.c.b16 %v887, %v884
      %v930 = vpack.c.b16 %v888, %v885
      %v931 = vpack.c.b16 %v889, %v889
      %v932 = vpack.c.b16 %v890, %v890
      %v933 = vpack.c.b16 %v891, %v891
      %vm973 = vcmask 719872
      %v975 = vsel %vm973, %v755, 0
      %vm977 = vcmask 1043456
      %v979 = vsel %vm977, %v931, 0
      %v982 = vsel %vm977, %v932, 0
      %v985 = vsel %vm977, %v933, 0
      %987 = vmatprep.subr.bf16.mxu0 %v893
      %988 = vmatpush1.bf16.msra.mxu0 %v892
      %989 = vmatprep.subr.bf16.mxu0 %v896
      %990 = vmatpush1.bf16.msra.mxu0 %v895
      %991 = vmatprep.subr.bf16.mxu0 %v899
      %992 = vmatpush1.bf16.msra.mxu0 %v898
      %993 = vmatprep.subr.bf16.mxu0 %v902
      %994 = vmatpush1.bf16.msra.mxu0 %v901
      %995 = vmatprep.subr.bf16.mxu0 %v905
      %996 = vmatpush1.bf16.msra.mxu0 %v904
      %997 = vmatprep.subr.bf16.mxu0 %v908
      %998 = vmatpush1.bf16.msra.mxu0 %v907
      %999 = vmatprep.subr.bf16.mxu0 %v911
      %1000 = vmatpush1.bf16.msra.mxu0 %v910
      %1001 = vmatprep.subr.bf16.mxu0 %v914
      %1002 = vmatpush1.bf16.msra.mxu0 %v913
      %1003 = vmatprep.subr.bf16.mxu0 %v917
      %1004 = vmatpush1.bf16.msra.mxu0 %v916
      %1005 = vmatprep.subr.bf16.mxu0 %v920
      %1006 = vmatpush1.bf16.msra.mxu0 %v919
      %1007 = vmatprep.subr.bf16.mxu0 %v923
      %1008 = vmatpush1.bf16.msra.mxu0 %v922
      %1009 = vmatprep.subr.bf16.mxu0 %v926
      %1010 = vmatpush1.bf16.msra.mxu0 %v925
      %1011 = vmatprep.subr.bf16.mxu0 %v929
      %1012 = vmatpush1.bf16.msra.mxu0 %v928
      %1013 = vmatprep.subr.bf16.mxu0 %v982
      %1014 = vmatpush1.bf16.msra.mxu0 %v979
      %1015 = vmatprep.subr.bf16.mxu0 0
      %1016 = vmatpush1.bf16.msra.mxu0 0
      %1017 = vmatprep.subr.bf16.mxu0 0
      %1018 = vmatpush1.bf16.msra.mxu0 0
      %1019 = vmatprep.mubr.bf16.mxu0 %v975
      %1020 = vmatmul.mubr.bf16.gmra.mrb[0].mxu0 %v754
      %v1021 = vpop.f32.mrb[0].mxu0
      %v1022 = vadd.f32 %v749, %v1021
      %v1023 = vpop.f32.mrb[0].mxu0
      %v1024 = vadd.f32 %v749, %v1023
      %v1025 = vpop.f32.mrb[0].mxu0
      %v1026 = vpop.f32.mrb[0].mxu0
      %1027 = vdwg.mxu0
      %1028 = vmatprep.subr.bf16.mxu0 0
      %1029 = vmatpush1.bf16.msra.mxu0 %v894
      %1030 = vmatprep.subr.bf16.mxu0 0
      %1031 = vmatpush1.bf16.msra.mxu0 %v897
      %1032 = vmatprep.subr.bf16.mxu0 0
      %1033 = vmatpush1.bf16.msra.mxu0 %v900
      %1034 = vmatprep.subr.bf16.mxu0 0
      %1035 = vmatpush1.bf16.msra.mxu0 %v903
      %1036 = vmatprep.subr.bf16.mxu0 0
      %1037 = vmatpush1.bf16.msra.mxu0 %v906
      %1038 = vmatprep.subr.bf16.mxu0 0
      %1039 = vmatpush1.bf16.msra.mxu0 %v909
      %1040 = vmatprep.subr.bf16.mxu0 0
      %1041 = vmatpush1.bf16.msra.mxu0 %v912
      %1042 = vmatprep.subr.bf16.mxu0 0
      %1043 = vmatpush1.bf16.msra.mxu0 %v915
      %1044 = vmatprep.subr.bf16.mxu0 0
      %1045 = vmatpush1.bf16.msra.mxu0 %v918
      %1046 = vmatprep.subr.bf16.mxu0 0
      %1047 = vmatpush1.bf16.msra.mxu0 %v921
      %1048 = vmatprep.subr.bf16.mxu0 0
      %1049 = vmatpush1.bf16.msra.mxu0 %v924
      %1050 = vmatprep.subr.bf16.mxu0 0
      %1051 = vmatpush1.bf16.msra.mxu0 %v927
      %1052 = vmatprep.subr.bf16.mxu0 0
      %1053 = vmatpush1.bf16.msra.mxu0 %v930
      %1054 = vmatprep.subr.bf16.mxu0 0
      %1055 = vmatpush1.bf16.msra.mxu0 %v985
      %1056 = vmatprep.subr.bf16.mxu0 0
      %1057 = vmatpush1.bf16.msra.mxu0 0
      %1058 = vmatprep.subr.bf16.mxu0 0
      %1059 = vmatpush1.bf16.msra.mxu0 0
      %1060 = vmatprep.mubr.bf16.mxu0 %v975
      %1061 = vmatmul.mubr.bf16.gmra.mrb[0].mxu0 %v754
      %v1062 = vpop.f32.mrb[0].mxu0
      %v1063 = vadd.f32 %v749, %v1062
      %v1064 = vpop.f32.mrb[0].mxu0
      %v1065 = vpop.f32.mrb[0].mxu0
      %v1066 = vpop.f32.mrb[0].mxu0
      %1067 = vdwg.mxu0
      %vm1068 = vcmp.ge.f32.partialorder %v1022, 0.0
      %vm1069 = vcmp.ge.f32.partialorder %v1024, 0.0
      %vm1070 = vcmp.ge.f32.partialorder %v1063, 0.0
      %v1071 = vmul.f32 %v1022, 0.2
      %v1072 = vmul.f32 %v1024, 0.2
      %v1073 = vmul.f32 %v1063, 0.2
      %v1074 = vsel %vm1068, %v1022, %v1071
      %v1075 = vsel %vm1069, %v1024, %v1072
      %v1076 = vsel %vm1070, %v1063, %v1073
      %1077 = vst [vmem:[%s256] sm:$0xff] %v1074
      %1078 = vst [vmem:[%s256 + $0x8] sm:$0xff] %v1075
      %1079 = vst [vmem:[%s256 + $0x10] sm:$0xff] %v1076
      %v1081 = vlaneseq
      %v1082 = vshrl.u32 %v1081, 7
      %v1083 = vsub.s32 0, %v1082
      %v1084 = vrot.slane %v260, %v1083
      %v1085 = vlaneseq
      %v1086 = vshrl.u32 %v1085, 7
      %v1087 = vsub.s32 1, %v1086
      %v1088 = vrot.slane %v260, %v1087
      %v1089 = vlaneseq
      %v1090 = vshrl.u32 %v1089, 7
      %v1091 = vsub.s32 2, %v1090
      %v1092 = vrot.slane %v260, %v1091
      %v1096 = vmul.f32 %v1074, %v1084
      %v1097 = vmul.f32 %v1075, %v1088
      %v1098 = vmul.f32 %v1076, %v1092
      %v1099 = vadd.f32 %v1096, %v1097
      %v1100 = vadd.f32 %v1099, %v1098
      %1101 = vadd.xlane.f32.xlu0 %v1100
      %v1102 = vpop.xlane.xlu0 %1101
      %v1103 = vadd.f32 %v1102, 0.0
      %v1104 = vld [vmem:[%s410] sm:$0xff]
      %v1105 = vld [vmem:[%s410 + $0x8] sm:$0xf]
      %1106 = vst [vmem:[#allocation2] sm:$0xff] %v1104
      %1107 = vst [vmem:[#allocation2 + $0x8] sm:$0xf] %v1105
      %v1108 = vld [vmem:[%s410] sm:$0xff]
      %v1109 = vld [vmem:[%s410 + $0x8] sm:$0xff]
      %1112 = vrot.lane.b32.xlu0 %v1108, 127
      %v1113 = vpop.permute.xlu0 %1112
      %1114 = vrot.lane.b32.xlu0 %v1109, 127
      %v1115 = vpop.permute.xlu0 %1114
      %v1116 = vrot.slane %v1113, 4
      %v1117 = vrot.slane %v1115, 4
      %v1118 = vsel %vm275, %v1116, %v1117
      %v1119 = vsel %vm277, %v1113, %v1118
      %v1120 = vsel %vm277, %v1115, %v1117
      %1123 = vst [vmem:[#allocation2 + $0xc] sm:$0xff] %v1119
      %1124 = vst [vmem:[#allocation2 + $0x14] sm:$0xf] %v1120
      %v1125 = vld [vmem:[%s410] sm:$0xff]
      %v1126 = vld [vmem:[%s410 + $0x8] sm:$0xff]
      %1129 = vrot.lane.b32.xlu0 %v1125, 126
      %v1130 = vpop.permute.xlu0 %1129
      %1131 = vrot.lane.b32.xlu0 %v1126, 126
      %v1132 = vpop.permute.xlu0 %1131
      %v1133 = vrot.slane %v1130, 4
      %v1134 = vrot.slane %v1132, 4
      %v1135 = vsel %vm275, %v1133, %v1134
      %v1136 = vsel %vm295, %v1130, %v1135
      %v1137 = vsel %vm295, %v1132, %v1134
      %1140 = vst [vmem:[#allocation2 + $0x18] sm:$0xff] %v1136
      %1141 = vst [vmem:[#allocation2 + $0x20] sm:$0xf] %v1137
      %v1142 = vld [vmem:[%s410] sm:$0xff]
      %v1143 = vld [vmem:[%s410 + $0x8] sm:$0xff]
      %1146 = vrot.lane.b32.xlu0 %v1142, 110
      %v1147 = vpop.permute.xlu0 %1146
      %1148 = vrot.lane.b32.xlu0 %v1143, 110
      %v1149 = vpop.permute.xlu0 %1148
      %v1150 = vrot.slane %v1147, 4
      %v1151 = vrot.slane %v1149, 4
      %v1152 = vsel %vm275, %v1150, %v1151
      %v1153 = vsel %vm313, %v1147, %v1152
      %v1154 = vsel %vm313, %v1149, %v1151
      %1157 = vst [vmem:[#allocation2 + $0x24] sm:$0xff] %v1153
      %1158 = vst [vmem:[#allocation2 + $0x2c] sm:$0xf] %v1154
      %v1159 = vld [vmem:[%s410] sm:$0xff]
      %v1160 = vld [vmem:[%s410 + $0x8] sm:$0xff]
      %1163 = vrot.lane.b32.xlu0 %v1159, 109
      %v1164 = vpop.permute.xlu0 %1163
      %1165 = vrot.lane.b32.xlu0 %v1160, 109
      %v1166 = vpop.permute.xlu0 %1165
      %v1167 = vrot.slane %v1164, 4
      %v1168 = vrot.slane %v1166, 4
      %v1169 = vsel %vm275, %v1167, %v1168
      %v1170 = vsel %vm331, %v1164, %v1169
      %v1171 = vsel %vm331, %v1166, %v1168
      %1174 = vst [vmem:[#allocation2 + $0x30] sm:$0xff] %v1170
      %1175 = vst [vmem:[#allocation2 + $0x38] sm:$0xf] %v1171
      %v1176 = vld [vmem:[%s410] sm:$0xff]
      %v1177 = vld [vmem:[%s410 + $0x8] sm:$0xff]
      %1180 = vrot.lane.b32.xlu0 %v1176, 108
      %v1181 = vpop.permute.xlu0 %1180
      %1182 = vrot.lane.b32.xlu0 %v1177, 108
      %v1183 = vpop.permute.xlu0 %1182
      %v1184 = vrot.slane %v1181, 4
      %v1185 = vrot.slane %v1183, 4
      %v1186 = vsel %vm275, %v1184, %v1185
      %v1187 = vsel %vm349, %v1181, %v1186
      %v1188 = vsel %vm349, %v1183, %v1185
      %1191 = vst [vmem:[#allocation2 + $0x3c] sm:$0xff] %v1187
      %1192 = vst [vmem:[#allocation2 + $0x44] sm:$0xf] %v1188
      %v1193 = vld [vmem:[%s410] sm:$0xff]
      %v1194 = vld [vmem:[%s410 + $0x8] sm:$0xff]
      %1197 = vrot.lane.b32.xlu0 %v1193, 92
      %v1198 = vpop.permute.xlu0 %1197
      %1199 = vrot.lane.b32.xlu0 %v1194, 92
      %v1200 = vpop.permute.xlu0 %1199
      %v1201 = vrot.slane %v1198, 4
      %v1202 = vrot.slane %v1200, 4
      %v1203 = vsel %vm275, %v1201, %v1202
      %v1204 = vsel %vm367, %v1198, %v1203
      %v1205 = vsel %vm367, %v1200, %v1202
      %1208 = vst [vmem:[#allocation2 + $0x48] sm:$0xff] %v1204
      %1209 = vst [vmem:[#allocation2 + $0x50] sm:$0xf] %v1205
      %v1210 = vld [vmem:[%s410] sm:$0xff]
      %v1211 = vld [vmem:[%s410 + $0x8] sm:$0xff]
      %1214 = vrot.lane.b32.xlu0 %v1210, 91
      %v1215 = vpop.permute.xlu0 %1214
      %1216 = vrot.lane.b32.xlu0 %v1211, 91
      %v1217 = vpop.permute.xlu0 %1216
      %v1218 = vrot.slane %v1215, 4
      %v1219 = vrot.slane %v1217, 4
      %v1220 = vsel %vm275, %v1218, %v1219
      %v1221 = vsel %vm385, %v1215, %v1220
      %v1222 = vsel %vm385, %v1217, %v1219
      %1225 = vst [vmem:[#allocation2 + $0x54] sm:$0xff] %v1221
      %1226 = vst [vmem:[#allocation2 + $0x5c] sm:$0xf] %v1222
      %v1227 = vld [vmem:[%s410] sm:$0xff]
      %v1228 = vld [vmem:[%s410 + $0x8] sm:$0xff]
      %1231 = vrot.lane.b32.xlu0 %v1227, 90
      %v1232 = vpop.permute.xlu0 %1231
      %1233 = vrot.lane.b32.xlu0 %v1228, 90
      %v1234 = vpop.permute.xlu0 %1233
      %v1235 = vrot.slane %v1232, 4
      %v1236 = vrot.slane %v1234, 4
      %v1237 = vsel %vm275, %v1235, %v1236
      %v1238 = vsel %vm403, %v1232, %v1237
      %v1239 = vsel %vm403, %v1234, %v1236
      %1242 = vst [vmem:[#allocation2 + $0x60] sm:$0xff] %v1238
      %1243 = vst [vmem:[#allocation2 + $0x68] sm:$0xf] %v1239
      %v1244 = vld [vmem:[%s551] sm:$0xff]
      %v1245 = vld [vmem:[%s551 + $0x8] sm:$0xf]
      %1246 = vst [vmem:[#allocation2 + $0x6c] sm:$0xff] %v1244
      %1247 = vst [vmem:[#allocation2 + $0x74] sm:$0xf] %v1245
      %v1248 = vld [vmem:[%s551] sm:$0xff]
      %v1249 = vld [vmem:[%s551 + $0x8] sm:$0xff]
      %1252 = vrot.lane.b32.xlu0 %v1248, 127
      %v1253 = vpop.permute.xlu0 %1252
      %1254 = vrot.lane.b32.xlu0 %v1249, 127
      %v1255 = vpop.permute.xlu0 %1254
      %v1256 = vrot.slane %v1253, 4
      %v1257 = vrot.slane %v1255, 4
      %v1258 = vsel %vm275, %v1256, %v1257
      %v1259 = vsel %vm277, %v1253, %v1258
      %v1260 = vsel %vm277, %v1255, %v1257
      %1263 = vst [vmem:[#allocation2 + $0x78] sm:$0xff] %v1259
      %1264 = vst [vmem:[#allocation2 + $0x80] sm:$0xf] %v1260
      %v1265 = vld [vmem:[%s551] sm:$0xff]
      %v1266 = vld [vmem:[%s551 + $0x8] sm:$0xff]
      %1269 = vrot.lane.b32.xlu0 %v1265, 126
      %v1270 = vpop.permute.xlu0 %1269
      %1271 = vrot.lane.b32.xlu0 %v1266, 126
      %v1272 = vpop.permute.xlu0 %1271
      %v1273 = vrot.slane %v1270, 4
      %v1274 = vrot.slane %v1272, 4
      %v1275 = vsel %vm275, %v1273, %v1274
      %v1276 = vsel %vm295, %v1270, %v1275
      %v1277 = vsel %vm295, %v1272, %v1274
      %1280 = vst [vmem:[#allocation2 + $0x84] sm:$0xff] %v1276
      %1281 = vst [vmem:[#allocation2 + $0x8c] sm:$0xf] %v1277
      %v1282 = vld [vmem:[%s551] sm:$0xff]
      %v1283 = vld [vmem:[%s551 + $0x8] sm:$0xff]
      %1286 = vrot.lane.b32.xlu0 %v1282, 110
      %v1287 = vpop.permute.xlu0 %1286
      %1288 = vrot.lane.b32.xlu0 %v1283, 110
      %v1289 = vpop.permute.xlu0 %1288
      %v1290 = vrot.slane %v1287, 4
      %v1291 = vrot.slane %v1289, 4
      %v1292 = vsel %vm275, %v1290, %v1291
      %v1293 = vsel %vm313, %v1287, %v1292
      %v1294 = vsel %vm313, %v1289, %v1291
      %1297 = vst [vmem:[#allocation2 + $0x90] sm:$0xff] %v1293
      %1298 = vst [vmem:[#allocation2 + $0x98] sm:$0xf] %v1294
      %v1299 = vld [vmem:[%s551] sm:$0xff]
      %v1300 = vld [vmem:[%s551 + $0x8] sm:$0xff]
      %1303 = vrot.lane.b32.xlu0 %v1299, 109
      %v1304 = vpop.permute.xlu0 %1303
      %1305 = vrot.lane.b32.xlu0 %v1300, 109
      %v1306 = vpop.permute.xlu0 %1305
      %v1307 = vrot.slane %v1304, 4
      %v1308 = vrot.slane %v1306, 4
      %v1309 = vsel %vm275, %v1307, %v1308
      %v1310 = vsel %vm331, %v1304, %v1309
      %v1311 = vsel %vm331, %v1306, %v1308
      %1314 = vst [vmem:[#allocation2 + $0x9c] sm:$0xff] %v1310
      %1315 = vst [vmem:[#allocation2 + $0xa4] sm:$0xf] %v1311
      %v1316 = vld [vmem:[%s551] sm:$0xff]
      %v1317 = vld [vmem:[%s551 + $0x8] sm:$0xff]
      %1320 = vrot.lane.b32.xlu0 %v1316, 108
      %v1321 = vpop.permute.xlu0 %1320
      %1322 = vrot.lane.b32.xlu0 %v1317, 108
      %v1323 = vpop.permute.xlu0 %1322
      %v1324 = vrot.slane %v1321, 4
      %v1325 = vrot.slane %v1323, 4
      %v1326 = vsel %vm275, %v1324, %v1325
      %v1327 = vsel %vm349, %v1321, %v1326
      %v1328 = vsel %vm349, %v1323, %v1325
      %1331 = vst [vmem:[#allocation2 + $0xa8] sm:$0xff] %v1327
      %1332 = vst [vmem:[#allocation2 + $0xb0] sm:$0xf] %v1328
      %v1333 = vld [vmem:[%s551] sm:$0xff]
      %v1334 = vld [vmem:[%s551 + $0x8] sm:$0xff]
      %1337 = vrot.lane.b32.xlu0 %v1333, 92
      %v1338 = vpop.permute.xlu0 %1337
      %1339 = vrot.lane.b32.xlu0 %v1334, 92
      %v1340 = vpop.permute.xlu0 %1339
      %v1341 = vrot.slane %v1338, 4
      %v1342 = vrot.slane %v1340, 4
      %v1343 = vsel %vm275, %v1341, %v1342
      %v1344 = vsel %vm367, %v1338, %v1343
      %v1345 = vsel %vm367, %v1340, %v1342
      %1348 = vst [vmem:[#allocation2 + $0xb4] sm:$0xff] %v1344
      %1349 = vst [vmem:[#allocation2 + $0xbc] sm:$0xf] %v1345
      %v1350 = vld [vmem:[%s551] sm:$0xff]
      %v1351 = vld [vmem:[%s551 + $0x8] sm:$0xff]
      %1354 = vrot.lane.b32.xlu0 %v1350, 91
      %v1355 = vpop.permute.xlu0 %1354
      %1356 = vrot.lane.b32.xlu0 %v1351, 91
      %v1357 = vpop.permute.xlu0 %1356
      %v1358 = vrot.slane %v1355, 4
      %v1359 = vrot.slane %v1357, 4
      %v1360 = vsel %vm275, %v1358, %v1359
      %v1361 = vsel %vm385, %v1355, %v1360
      %v1362 = vsel %vm385, %v1357, %v1359
      %1365 = vst [vmem:[#allocation2 + $0xc0] sm:$0xff] %v1361
      %1366 = vst [vmem:[#allocation2 + $0xc8] sm:$0xf] %v1362
      %v1367 = vld [vmem:[%s551] sm:$0xff]
      %v1368 = vld [vmem:[%s551 + $0x8] sm:$0xff]
      %1371 = vrot.lane.b32.xlu0 %v1367, 90
      %v1372 = vpop.permute.xlu0 %1371
      %1373 = vrot.lane.b32.xlu0 %v1368, 90
      %v1374 = vpop.permute.xlu0 %1373
      %v1375 = vrot.slane %v1372, 4
      %v1376 = vrot.slane %v1374, 4
      %v1377 = vsel %vm275, %v1375, %v1376
      %v1378 = vsel %vm403, %v1372, %v1377
      %v1379 = vsel %vm403, %v1374, %v1376
      %1382 = vst [vmem:[#allocation2 + $0xcc] sm:$0xff] %v1378
      %1383 = vst [vmem:[#allocation2 + $0xd4] sm:$0xf] %v1379
      %s1384 = scalar_lea.vmem %s238, 48
      %v1385 = vld [vmem:[%s1384] sm:$0xff]
      %v1386 = vld [vmem:[%s1384 + $0x8] sm:$0xf]
      %1387 = vst [vmem:[#allocation2 + $0xd8] sm:$0xff] %v1385
      %1388 = vst [vmem:[#allocation2 + $0xe0] sm:$0xf] %v1386
      %v1389 = vld [vmem:[%s1384] sm:$0xff]
      %v1390 = vld [vmem:[%s1384 + $0x8] sm:$0xff]
      %1393 = vrot.lane.b32.xlu0 %v1389, 127
      %v1394 = vpop.permute.xlu0 %1393
      %1395 = vrot.lane.b32.xlu0 %v1390, 127
      %v1396 = vpop.permute.xlu0 %1395
      %v1397 = vrot.slane %v1394, 4
      %v1398 = vrot.slane %v1396, 4
      %v1399 = vsel %vm275, %v1397, %v1398
      %v1400 = vsel %vm277, %v1394, %v1399
      %v1401 = vsel %vm277, %v1396, %v1398
      %1404 = vst [vmem:[#allocation2 + $0xe4] sm:$0xff] %v1400
      %1405 = vst [vmem:[#allocation2 + $0xec] sm:$0xf] %v1401
      %v1406 = vld [vmem:[%s1384] sm:$0xff]
      %v1407 = vld [vmem:[%s1384 + $0x8] sm:$0xff]
      %1410 = vrot.lane.b32.xlu0 %v1406, 126
      %v1411 = vpop.permute.xlu0 %1410
      %1412 = vrot.lane.b32.xlu0 %v1407, 126
      %v1413 = vpop.permute.xlu0 %1412
      %v1414 = vrot.slane %v1411, 4
      %v1415 = vrot.slane %v1413, 4
      %v1416 = vsel %vm275, %v1414, %v1415
      %v1417 = vsel %vm295, %v1411, %v1416
      %v1418 = vsel %vm295, %v1413, %v1415
      %1421 = vst [vmem:[#allocation2 + $0xf0] sm:$0xff] %v1417
      %1422 = vst [vmem:[#allocation2 + $0xf8] sm:$0xf] %v1418
      %v1423 = vld [vmem:[%s1384] sm:$0xff]
      %v1424 = vld [vmem:[%s1384 + $0x8] sm:$0xff]
      %1427 = vrot.lane.b32.xlu0 %v1423, 110
      %v1428 = vpop.permute.xlu0 %1427
      %1429 = vrot.lane.b32.xlu0 %v1424, 110
      %v1430 = vpop.permute.xlu0 %1429
      %v1431 = vrot.slane %v1428, 4
      %v1432 = vrot.slane %v1430, 4
      %v1433 = vsel %vm275, %v1431, %v1432
      %v1434 = vsel %vm313, %v1428, %v1433
      %v1435 = vsel %vm313, %v1430, %v1432
      %1438 = vst [vmem:[#allocation2 + $0xfc] sm:$0xff] %v1434
      %1439 = vst [vmem:[#allocation2 + $0x104] sm:$0xf] %v1435
      %v1440 = vld [vmem:[%s1384] sm:$0xff]
      %v1441 = vld [vmem:[%s1384 + $0x8] sm:$0xff]
      %1444 = vrot.lane.b32.xlu0 %v1440, 109
      %v1445 = vpop.permute.xlu0 %1444
      %1446 = vrot.lane.b32.xlu0 %v1441, 109
      %v1447 = vpop.permute.xlu0 %1446
      %v1448 = vrot.slane %v1445, 4
      %v1449 = vrot.slane %v1447, 4
      %v1450 = vsel %vm275, %v1448, %v1449
      %v1451 = vsel %vm331, %v1445, %v1450
      %v1452 = vsel %vm331, %v1447, %v1449
      %1455 = vst [vmem:[#allocation2 + $0x108] sm:$0xff] %v1451
      %1456 = vst [vmem:[#allocation2 + $0x110] sm:$0xf] %v1452
      %v1457 = vld [vmem:[%s1384] sm:$0xff]
      %v1458 = vld [vmem:[%s1384 + $0x8] sm:$0xff]
      %1461 = vrot.lane.b32.xlu0 %v1457, 108
      %v1462 = vpop.permute.xlu0 %1461
      %1463 = vrot.lane.b32.xlu0 %v1458, 108
      %v1464 = vpop.permute.xlu0 %1463
      %v1465 = vrot.slane %v1462, 4
      %v1466 = vrot.slane %v1464, 4
      %v1467 = vsel %vm275, %v1465, %v1466
      %v1468 = vsel %vm349, %v1462, %v1467
      %v1469 = vsel %vm349, %v1464, %v1466
      %1472 = vst [vmem:[#allocation2 + $0x114] sm:$0xff] %v1468
      %1473 = vst [vmem:[#allocation2 + $0x11c] sm:$0xf] %v1469
      %v1474 = vld [vmem:[%s1384] sm:$0xff]
      %v1475 = vld [vmem:[%s1384 + $0x8] sm:$0xff]
      %1478 = vrot.lane.b32.xlu0 %v1474, 92
      %v1479 = vpop.permute.xlu0 %1478
      %1480 = vrot.lane.b32.xlu0 %v1475, 92
      %v1481 = vpop.permute.xlu0 %1480
      %v1482 = vrot.slane %v1479, 4
      %v1483 = vrot.slane %v1481, 4
      %v1484 = vsel %vm275, %v1482, %v1483
      %v1485 = vsel %vm367, %v1479, %v1484
      %v1486 = vsel %vm367, %v1481, %v1483
      %1489 = vst [vmem:[#allocation2 + $0x120] sm:$0xff] %v1485
      %1490 = vst [vmem:[#allocation2 + $0x128] sm:$0xf] %v1486
      %v1491 = vld [vmem:[%s1384] sm:$0xff]
      %v1492 = vld [vmem:[%s1384 + $0x8] sm:$0xff]
      %1495 = vrot.lane.b32.xlu0 %v1491, 91
      %v1496 = vpop.permute.xlu0 %1495
      %1497 = vrot.lane.b32.xlu0 %v1492, 91
      %v1498 = vpop.permute.xlu0 %1497
      %v1499 = vrot.slane %v1496, 4
      %v1500 = vrot.slane %v1498, 4
      %v1501 = vsel %vm275, %v1499, %v1500
      %v1502 = vsel %vm385, %v1496, %v1501
      %v1503 = vsel %vm385, %v1498, %v1500
      %1506 = vst [vmem:[#allocation2 + $0x12c] sm:$0xff] %v1502
      %1507 = vst [vmem:[#allocation2 + $0x134] sm:$0xf] %v1503
      %v1508 = vld [vmem:[%s1384] sm:$0xff]
      %v1509 = vld [vmem:[%s1384 + $0x8] sm:$0xff]
      %1512 = vrot.lane.b32.xlu0 %v1508, 90
      %v1513 = vpop.permute.xlu0 %1512
      %1514 = vrot.lane.b32.xlu0 %v1509, 90
      %v1515 = vpop.permute.xlu0 %1514
      %v1516 = vrot.slane %v1513, 4
      %v1517 = vrot.slane %v1515, 4
      %v1518 = vsel %vm275, %v1516, %v1517
      %v1519 = vsel %vm403, %v1513, %v1518
      %v1520 = vsel %vm403, %v1515, %v1517
      %1523 = vst [vmem:[#allocation2 + $0x138] sm:$0xff] %v1519
      %1524 = vst [vmem:[#allocation2 + $0x140] sm:$0xf] %v1520
      %v1525 = vld [vmem:[#allocation2] sm:$0xff]
      %v1526 = vld [vmem:[#allocation2 + $0x8] sm:$0xf]
      %v1527 = vld [vmem:[#allocation2 + $0xc] sm:$0xff]
      %v1528 = vld [vmem:[#allocation2 + $0x14] sm:$0xf]
      %v1529 = vld [vmem:[#allocation2 + $0x18] sm:$0xff]
      %v1530 = vld [vmem:[#allocation2 + $0x20] sm:$0xf]
      %v1531 = vld [vmem:[#allocation2 + $0x24] sm:$0xff]
      %v1532 = vld [vmem:[#allocation2 + $0x2c] sm:$0xf]
      %v1533 = vld [vmem:[#allocation2 + $0x30] sm:$0xff]
      %v1534 = vld [vmem:[#allocation2 + $0x38] sm:$0xf]
      %v1535 = vld [vmem:[#allocation2 + $0x3c] sm:$0xff]
      %v1536 = vld [vmem:[#allocation2 + $0x44] sm:$0xf]
      %v1537 = vld [vmem:[#allocation2 + $0x48] sm:$0xff]
      %v1538 = vld [vmem:[#allocation2 + $0x50] sm:$0xf]
      %v1539 = vld [vmem:[#allocation2 + $0x54] sm:$0xff]
      %v1540 = vld [vmem:[#allocation2 + $0x5c] sm:$0xf]
      %v1541 = vld [vmem:[#allocation2 + $0x60] sm:$0xff]
      %v1542 = vld [vmem:[#allocation2 + $0x68] sm:$0xf]
      %v1543 = vld [vmem:[#allocation2 + $0x6c] sm:$0xff]
      %v1544 = vld [vmem:[#allocation2 + $0x74] sm:$0xf]
      %v1545 = vld [vmem:[#allocation2 + $0x78] sm:$0xff]
      %v1546 = vld [vmem:[#allocation2 + $0x80] sm:$0xf]
      %v1547 = vld [vmem:[#allocation2 + $0x84] sm:$0xff]
      %v1548 = vld [vmem:[#allocation2 + $0x8c] sm:$0xf]
      %v1549 = vld [vmem:[#allocation2 + $0x90] sm:$0xff]
      %v1550 = vld [vmem:[#allocation2 + $0x98] sm:$0xf]
      %v1551 = vld [vmem:[#allocation2 + $0x9c] sm:$0xff]
      %v1552 = vld [vmem:[#allocation2 + $0xa4] sm:$0xf]
      %v1553 = vld [vmem:[#allocation2 + $0xa8] sm:$0xff]
      %v1554 = vld [vmem:[#allocation2 + $0xb0] sm:$0xf]
      %v1555 = vld [vmem:[#allocation2 + $0xb4] sm:$0xff]
      %v1556 = vld [vmem:[#allocation2 + $0xbc] sm:$0xf]
      %v1557 = vld [vmem:[#allocation2 + $0xc0] sm:$0xff]
      %v1558 = vld [vmem:[#allocation2 + $0xc8] sm:$0xf]
      %v1559 = vld [vmem:[#allocation2 + $0xcc] sm:$0xff]
      %v1560 = vld [vmem:[#allocation2 + $0xd4] sm:$0xf]
      %v1561 = vld [vmem:[#allocation2 + $0xd8] sm:$0xff]
      %v1562 = vld [vmem:[#allocation2 + $0xe0] sm:$0xf]
      %v1563 = vld [vmem:[#allocation2 + $0xe4] sm:$0xff]
      %v1564 = vld [vmem:[#allocation2 + $0xec] sm:$0xf]
      %v1565 = vld [vmem:[#allocation2 + $0xf0] sm:$0xff]
      %v1566 = vld [vmem:[#allocation2 + $0xf8] sm:$0xf]
      %v1567 = vld [vmem:[#allocation2 + $0xfc] sm:$0xff]
      %v1568 = vld [vmem:[#allocation2 + $0x104] sm:$0xf]
      %v1569 = vld [vmem:[#allocation2 + $0x108] sm:$0xff]
      %v1570 = vld [vmem:[#allocation2 + $0x110] sm:$0xf]
      %v1571 = vld [vmem:[#allocation2 + $0x114] sm:$0xff]
      %v1572 = vld [vmem:[#allocation2 + $0x11c] sm:$0xf]
      %v1573 = vld [vmem:[#allocation2 + $0x120] sm:$0xff]
      %v1574 = vld [vmem:[#allocation2 + $0x128] sm:$0xf]
      %v1575 = vld [vmem:[#allocation2 + $0x12c] sm:$0xff]
      %v1576 = vld [vmem:[#allocation2 + $0x134] sm:$0xf]
      %v1577 = vld [vmem:[#allocation2 + $0x138] sm:$0xff]
      %v1578 = vld [vmem:[#allocation2 + $0x140] sm:$0xf]
      %v1633 = vunpack.c.l.b16 %v1525
      %v1634 = vunpack.c.h.b16 %v1525
      %v1635 = vunpack.c.l.b16 %v1526
      %v1636 = vunpack.c.l.b16 %v1527
      %v1637 = vunpack.c.h.b16 %v1527
      %v1638 = vunpack.c.l.b16 %v1528
      %v1639 = vunpack.c.l.b16 %v1529
      %v1640 = vunpack.c.h.b16 %v1529
      %v1641 = vunpack.c.l.b16 %v1530
      %v1642 = vunpack.c.l.b16 %v1531
      %v1643 = vunpack.c.h.b16 %v1531
      %v1644 = vunpack.c.l.b16 %v1532
      %v1645 = vunpack.c.l.b16 %v1533
      %v1646 = vunpack.c.h.b16 %v1533
      %v1647 = vunpack.c.l.b16 %v1534
      %v1648 = vunpack.c.l.b16 %v1535
      %v1649 = vunpack.c.h.b16 %v1535
      %v1650 = vunpack.c.l.b16 %v1536
      %v1651 = vunpack.c.l.b16 %v1537
      %v1652 = vunpack.c.h.b16 %v1537
      %v1653 = vunpack.c.l.b16 %v1538
      %v1654 = vunpack.c.l.b16 %v1539
      %v1655 = vunpack.c.h.b16 %v1539
      %v1656 = vunpack.c.l.b16 %v1540
      %v1657 = vunpack.c.l.b16 %v1541
      %v1658 = vunpack.c.h.b16 %v1541
      %v1659 = vunpack.c.l.b16 %v1542
      %v1660 = vunpack.c.l.b16 %v1543
      %v1661 = vunpack.c.h.b16 %v1543
      %v1662 = vunpack.c.l.b16 %v1544
      %v1663 = vunpack.c.l.b16 %v1545
      %v1664 = vunpack.c.h.b16 %v1545
      %v1665 = vunpack.c.l.b16 %v1546
      %v1666 = vunpack.c.l.b16 %v1547
      %v1667 = vunpack.c.h.b16 %v1547
      %v1668 = vunpack.c.l.b16 %v1548
      %v1669 = vunpack.c.l.b16 %v1549
      %v1670 = vunpack.c.h.b16 %v1549
      %v1671 = vunpack.c.l.b16 %v1550
      %v1672 = vunpack.c.l.b16 %v1551
      %v1673 = vunpack.c.h.b16 %v1551
      %v1674 = vunpack.c.l.b16 %v1552
      %v1675 = vunpack.c.l.b16 %v1553
      %v1676 = vunpack.c.h.b16 %v1553
      %v1677 = vunpack.c.l.b16 %v1554
      %v1678 = vunpack.c.l.b16 %v1555
      %v1679 = vunpack.c.h.b16 %v1555
      %v1680 = vunpack.c.l.b16 %v1556
      %v1681 = vunpack.c.l.b16 %v1557
      %v1682 = vunpack.c.h.b16 %v1557
      %v1683 = vunpack.c.l.b16 %v1558
      %v1684 = vunpack.c.l.b16 %v1559
      %v1685 = vunpack.c.h.b16 %v1559
      %v1686 = vunpack.c.l.b16 %v1560
      %v1687 = vunpack.c.l.b16 %v1561
      %v1688 = vunpack.c.h.b16 %v1561
      %v1689 = vunpack.c.l.b16 %v1562
      %v1690 = vunpack.c.l.b16 %v1563
      %v1691 = vunpack.c.h.b16 %v1563
      %v1692 = vunpack.c.l.b16 %v1564
      %v1693 = vunpack.c.l.b16 %v1565
      %v1694 = vunpack.c.h.b16 %v1565
      %v1695 = vunpack.c.l.b16 %v1566
      %v1696 = vunpack.c.l.b16 %v1567
      %v1697 = vunpack.c.h.b16 %v1567
      %v1698 = vunpack.c.l.b16 %v1568
      %v1699 = vunpack.c.l.b16 %v1569
      %v1700 = vunpack.c.h.b16 %v1569
      %v1701 = vunpack.c.l.b16 %v1570
      %v1702 = vunpack.c.l.b16 %v1571
      %v1703 = vunpack.c.h.b16 %v1571
      %v1704 = vunpack.c.l.b16 %v1572
      %v1705 = vunpack.c.l.b16 %v1573
      %v1706 = vunpack.c.h.b16 %v1573
      %v1707 = vunpack.c.l.b16 %v1574
      %v1708 = vunpack.c.l.b16 %v1575
      %v1709 = vunpack.c.h.b16 %v1575
      %v1710 = vunpack.c.l.b16 %v1576
      %v1711 = vunpack.c.l.b16 %v1577
      %v1712 = vunpack.c.h.b16 %v1577
      %v1713 = vunpack.c.l.b16 %v1578
      %v1714 = vpack.c.b16 %v1636, %v1633
      %v1715 = vpack.c.b16 %v1637, %v1634
      %v1716 = vpack.c.b16 %v1638, %v1635
      %v1717 = vpack.c.b16 %v1642, %v1639
      %v1718 = vpack.c.b16 %v1643, %v1640
      %v1719 = vpack.c.b16 %v1644, %v1641
      %v1720 = vpack.c.b16 %v1648, %v1645
      %v1721 = vpack.c.b16 %v1649, %v1646
      %v1722 = vpack.c.b16 %v1650, %v1647
      %v1723 = vpack.c.b16 %v1654, %v1651
      %v1724 = vpack.c.b16 %v1655, %v1652
      %v1725 = vpack.c.b16 %v1656, %v1653
      %v1726 = vpack.c.b16 %v1660, %v1657
      %v1727 = vpack.c.b16 %v1661, %v1658
      %v1728 = vpack.c.b16 %v1662, %v1659
      %v1729 = vpack.c.b16 %v1666, %v1663
      %v1730 = vpack.c.b16 %v1667, %v1664
      %v1731 = vpack.c.b16 %v1668, %v1665
      %v1732 = vpack.c.b16 %v1672, %v1669
      %v1733 = vpack.c.b16 %v1673, %v1670
      %v1734 = vpack.c.b16 %v1674, %v1671
      %v1735 = vpack.c.b16 %v1678, %v1675
      %v1736 = vpack.c.b16 %v1679, %v1676
      %v1737 = vpack.c.b16 %v1680, %v1677
      %v1738 = vpack.c.b16 %v1684, %v1681
      %v1739 = vpack.c.b16 %v1685, %v1682
      %v1740 = vpack.c.b16 %v1686, %v1683
      %v1741 = vpack.c.b16 %v1690, %v1687
      %v1742 = vpack.c.b16 %v1691, %v1688
      %v1743 = vpack.c.b16 %v1692, %v1689
      %v1744 = vpack.c.b16 %v1696, %v1693
      %v1745 = vpack.c.b16 %v1697, %v1694
      %v1746 = vpack.c.b16 %v1698, %v1695
      %v1747 = vpack.c.b16 %v1702, %v1699
      %v1748 = vpack.c.b16 %v1703, %v1700
      %v1749 = vpack.c.b16 %v1704, %v1701
      %v1750 = vpack.c.b16 %v1708, %v1705
      %v1751 = vpack.c.b16 %v1709, %v1706
      %v1752 = vpack.c.b16 %v1710, %v1707
      %v1753 = vpack.c.b16 %v1711, %v1711
      %v1754 = vpack.c.b16 %v1712, %v1712
      %v1755 = vpack.c.b16 %v1713, %v1713
      %v1796 = vsel %vm977, %v1753, 0
      %v1799 = vsel %vm977, %v1754, 0
      %v1802 = vsel %vm977, %v1755, 0
      %1804 = vmatprep.subr.bf16.mxu0 %v1715
      %1805 = vmatpush1.bf16.msra.mxu0 %v1714
      %1806 = vmatprep.subr.bf16.mxu0 %v1718
      %1807 = vmatpush1.bf16.msra.mxu0 %v1717
      %1808 = vmatprep.subr.bf16.mxu0 %v1721
      %1809 = vmatpush1.bf16.msra.mxu0 %v1720
      %1810 = vmatprep.subr.bf16.mxu0 %v1724
      %1811 = vmatpush1.bf16.msra.mxu0 %v1723
      %1812 = vmatprep.subr.bf16.mxu0 %v1727
      %1813 = vmatpush1.bf16.msra.mxu0 %v1726
      %1814 = vmatprep.subr.bf16.mxu0 %v1730
      %1815 = vmatpush1.bf16.msra.mxu0 %v1729
      %1816 = vmatprep.subr.bf16.mxu0 %v1733
      %1817 = vmatpush1.bf16.msra.mxu0 %v1732
      %1818 = vmatprep.subr.bf16.mxu0 %v1736
      %1819 = vmatpush1.bf16.msra.mxu0 %v1735
      %1820 = vmatprep.subr.bf16.mxu0 %v1739
      %1821 = vmatpush1.bf16.msra.mxu0 %v1738
      %1822 = vmatprep.subr.bf16.mxu0 %v1742
      %1823 = vmatpush1.bf16.msra.mxu0 %v1741
      %1824 = vmatprep.subr.bf16.mxu0 %v1745
      %1825 = vmatpush1.bf16.msra.mxu0 %v1744
      %1826 = vmatprep.subr.bf16.mxu0 %v1748
      %1827 = vmatpush1.bf16.msra.mxu0 %v1747
      %1828 = vmatprep.subr.bf16.mxu0 %v1751
      %1829 = vmatpush1.bf16.msra.mxu0 %v1750
      %1830 = vmatprep.subr.bf16.mxu0 %v1799
      %1831 = vmatpush1.bf16.msra.mxu0 %v1796
      %1832 = vmatprep.subr.bf16.mxu0 0
      %1833 = vmatpush1.bf16.msra.mxu0 0
      %1834 = vmatprep.subr.bf16.mxu0 0
      %1835 = vmatpush1.bf16.msra.mxu0 0
      %1836 = vmatprep.mubr.bf16.mxu0 %v975
      %1837 = vmatmul.mubr.bf16.gmra.mrb[0].mxu0 %v754
      %v1838 = vpop.f32.mrb[0].mxu0
      %v1839 = vadd.f32 %v749, %v1838
      %v1840 = vpop.f32.mrb[0].mxu0
      %v1841 = vadd.f32 %v749, %v1840
      %v1842 = vpop.f32.mrb[0].mxu0
      %v1843 = vpop.f32.mrb[0].mxu0
      %1844 = vdwg.mxu0
      %1845 = vmatprep.subr.bf16.mxu0 0
      %1846 = vmatpush1.bf16.msra.mxu0 %v1716
      %1847 = vmatprep.subr.bf16.mxu0 0
      %1848 = vmatpush1.bf16.msra.mxu0 %v1719
      %1849 = vmatprep.subr.bf16.mxu0 0
      %1850 = vmatpush1.bf16.msra.mxu0 %v1722
      %1851 = vmatprep.subr.bf16.mxu0 0
      %1852 = vmatpush1.bf16.msra.mxu0 %v1725
      %1853 = vmatprep.subr.bf16.mxu0 0
      %1854 = vmatpush1.bf16.msra.mxu0 %v1728
      %1855 = vmatprep.subr.bf16.mxu0 0
      %1856 = vmatpush1.bf16.msra.mxu0 %v1731
      %1857 = vmatprep.subr.bf16.mxu0 0
      %1858 = vmatpush1.bf16.msra.mxu0 %v1734
      %1859 = vmatprep.subr.bf16.mxu0 0
      %1860 = vmatpush1.bf16.msra.mxu0 %v1737
      %1861 = vmatprep.subr.bf16.mxu0 0
      %1862 = vmatpush1.bf16.msra.mxu0 %v1740
      %1863 = vmatprep.subr.bf16.mxu0 0
      %1864 = vmatpush1.bf16.msra.mxu0 %v1743
      %1865 = vmatprep.subr.bf16.mxu0 0
      %1866 = vmatpush1.bf16.msra.mxu0 %v1746
      %1867 = vmatprep.subr.bf16.mxu0 0
      %1868 = vmatpush1.bf16.msra.mxu0 %v1749
      %1869 = vmatprep.subr.bf16.mxu0 0
      %1870 = vmatpush1.bf16.msra.mxu0 %v1752
      %1871 = vmatprep.subr.bf16.mxu0 0
      %1872 = vmatpush1.bf16.msra.mxu0 %v1802
      %1873 = vmatprep.subr.bf16.mxu0 0
      %1874 = vmatpush1.bf16.msra.mxu0 0
      %1875 = vmatprep.subr.bf16.mxu0 0
      %1876 = vmatpush1.bf16.msra.mxu0 0
      %1877 = vmatprep.mubr.bf16.mxu0 %v975
      %1878 = vmatmul.mubr.bf16.gmra.mrb[0].mxu0 %v754
      %v1879 = vpop.f32.mrb[0].mxu0
      %v1880 = vadd.f32 %v749, %v1879
      %v1881 = vpop.f32.mrb[0].mxu0
      %v1882 = vpop.f32.mrb[0].mxu0
      %v1883 = vpop.f32.mrb[0].mxu0
      %1884 = vdwg.mxu0
      %vm1885 = vcmp.ge.f32.partialorder %v1839, 0.0
      %vm1886 = vcmp.ge.f32.partialorder %v1841, 0.0
      %vm1887 = vcmp.ge.f32.partialorder %v1880, 0.0
      %v1888 = vmul.f32 %v1839, 0.2
      %v1889 = vmul.f32 %v1841, 0.2
      %v1890 = vmul.f32 %v1880, 0.2
      %v1891 = vsel %vm1885, %v1839, %v1888
      %v1892 = vsel %vm1886, %v1841, %v1889
      %v1893 = vsel %vm1887, %v1880, %v1890
      %s1894 = scalar_lea.vmem %s256, 24
      %1895 = vst [vmem:[%s1894] sm:$0xff] %v1891
      %1896 = vst [vmem:[%s1894 + $0x8] sm:$0xff] %v1892
      %1897 = vst [vmem:[%s1894 + $0x10] sm:$0xff] %v1893
      %v1898 = vmul.f32 %v1891, %v1084
      %v1899 = vmul.f32 %v1892, %v1088
      %v1900 = vmul.f32 %v1893, %v1092
      %v1901 = vadd.f32 %v1898, %v1899
      %v1902 = vadd.f32 %v1901, %v1900
      %1903 = vadd.xlane.f32.xlu0 %v1902
      %v1904 = vpop.xlane.xlu0 %1903
      %v1905 = vadd.f32 %v1103, %v1904
      %v1906 = vld [vmem:[%s551] sm:$0xff]
      %v1907 = vld [vmem:[%s551 + $0x8] sm:$0xf]
      %1908 = vst [vmem:[#allocation2] sm:$0xff] %v1906
      %1909 = vst [vmem:[#allocation2 + $0x8] sm:$0xf] %v1907
      %v1910 = vld [vmem:[%s551] sm:$0xff]
      %v1911 = vld [vmem:[%s551 + $0x8] sm:$0xff]
      %1914 = vrot.lane.b32.xlu0 %v1910, 127
      %v1915 = vpop.permute.xlu0 %1914
      %1916 = vrot.lane.b32.xlu0 %v1911, 127
      %v1917 = vpop.permute.xlu0 %1916
      %v1918 = vrot.slane %v1915, 4
      %v1919 = vrot.slane %v1917, 4
      %v1920 = vsel %vm275, %v1918, %v1919
      %v1921 = vsel %vm277, %v1915, %v1920
      %v1922 = vsel %vm277, %v1917, %v1919
      %1925 = vst [vmem:[#allocation2 + $0xc] sm:$0xff] %v1921
      %1926 = vst [vmem:[#allocation2 + $0x14] sm:$0xf] %v1922
      %v1927 = vld [vmem:[%s551] sm:$0xff]
      %v1928 = vld [vmem:[%s551 + $0x8] sm:$0xff]
      %1931 = vrot.lane.b32.xlu0 %v1927, 126
      %v1932 = vpop.permute.xlu0 %1931
      %1933 = vrot.lane.b32.xlu0 %v1928, 126
      %v1934 = vpop.permute.xlu0 %1933
      %v1935 = vrot.slane %v1932, 4
      %v1936 = vrot.slane %v1934, 4
      %v1937 = vsel %vm275, %v1935, %v1936
      %v1938 = vsel %vm295, %v1932, %v1937
      %v1939 = vsel %vm295, %v1934, %v1936
      %1942 = vst [vmem:[#allocation2 + $0x18] sm:$0xff] %v1938
      %1943 = vst [vmem:[#allocation2 + $0x20] sm:$0xf] %v1939
      %v1944 = vld [vmem:[%s551] sm:$0xff]
      %v1945 = vld [vmem:[%s551 + $0x8] sm:$0xff]
      %1948 = vrot.lane.b32.xlu0 %v1944, 110
      %v1949 = vpop.permute.xlu0 %1948
      %1950 = vrot.lane.b32.xlu0 %v1945, 110
      %v1951 = vpop.permute.xlu0 %1950
      %v1952 = vrot.slane %v1949, 4
      %v1953 = vrot.slane %v1951, 4
      %v1954 = vsel %vm275, %v1952, %v1953
      %v1955 = vsel %vm313, %v1949, %v1954
      %v1956 = vsel %vm313, %v1951, %v1953
      %1959 = vst [vmem:[#allocation2 + $0x24] sm:$0xff] %v1955
      %1960 = vst [vmem:[#allocation2 + $0x2c] sm:$0xf] %v1956
      %v1961 = vld [vmem:[%s551] sm:$0xff]
      %v1962 = vld [vmem:[%s551 + $0x8] sm:$0xff]
      %1965 = vrot.lane.b32.xlu0 %v1961, 109
      %v1966 = vpop.permute.xlu0 %1965
      %1967 = vrot.lane.b32.xlu0 %v1962, 109
      %v1968 = vpop.permute.xlu0 %1967
      %v1969 = vrot.slane %v1966, 4
      %v1970 = vrot.slane %v1968, 4
      %v1971 = vsel %vm275, %v1969, %v1970
      %v1972 = vsel %vm331, %v1966, %v1971
      %v1973 = vsel %vm331, %v1968, %v1970
      %1976 = vst [vmem:[#allocation2 + $0x30] sm:$0xff] %v1972
      %1977 = vst [vmem:[#allocation2 + $0x38] sm:$0xf] %v1973
      %v1978 = vld [vmem:[%s551] sm:$0xff]
      %v1979 = vld [vmem:[%s551 + $0x8] sm:$0xff]
      %1982 = vrot.lane.b32.xlu0 %v1978, 108
      %v1983 = vpop.permute.xlu0 %1982
      %1984 = vrot.lane.b32.xlu0 %v1979, 108
      %v1985 = vpop.permute.xlu0 %1984
      %v1986 = vrot.slane %v1983, 4
      %v1987 = vrot.slane %v1985, 4
      %v1988 = vsel %vm275, %v1986, %v1987
      %v1989 = vsel %vm349, %v1983, %v1988
      %v1990 = vsel %vm349, %v1985, %v1987
      %1993 = vst [vmem:[#allocation2 + $0x3c] sm:$0xff] %v1989
      %1994 = vst [vmem:[#allocation2 + $0x44] sm:$0xf] %v1990
      %v1995 = vld [vmem:[%s551] sm:$0xff]
      %v1996 = vld [vmem:[%s551 + $0x8] sm:$0xff]
      %1999 = vrot.lane.b32.xlu0 %v1995, 92
      %v2000 = vpop.permute.xlu0 %1999
      %2001 = vrot.lane.b32.xlu0 %v1996, 92
      %v2002 = vpop.permute.xlu0 %2001
      %v2003 = vrot.slane %v2000, 4
      %v2004 = vrot.slane %v2002, 4
      %v2005 = vsel %vm275, %v2003, %v2004
      %v2006 = vsel %vm367, %v2000, %v2005
      %v2007 = vsel %vm367, %v2002, %v2004
      %2010 = vst [vmem:[#allocation2 + $0x48] sm:$0xff] %v2006
      %2011 = vst [vmem:[#allocation2 + $0x50] sm:$0xf] %v2007
      %v2012 = vld [vmem:[%s551] sm:$0xff]
      %v2013 = vld [vmem:[%s551 + $0x8] sm:$0xff]
      %2016 = vrot.lane.b32.xlu0 %v2012, 91
      %v2017 = vpop.permute.xlu0 %2016
      %2018 = vrot.lane.b32.xlu0 %v2013, 91
      %v2019 = vpop.permute.xlu0 %2018
      %v2020 = vrot.slane %v2017, 4
      %v2021 = vrot.slane %v2019, 4
      %v2022 = vsel %vm275, %v2020, %v2021
      %v2023 = vsel %vm385, %v2017, %v2022
      %v2024 = vsel %vm385, %v2019, %v2021
      %2027 = vst [vmem:[#allocation2 + $0x54] sm:$0xff] %v2023
      %2028 = vst [vmem:[#allocation2 + $0x5c] sm:$0xf] %v2024
      %v2029 = vld [vmem:[%s551] sm:$0xff]
      %v2030 = vld [vmem:[%s551 + $0x8] sm:$0xff]
      %2033 = vrot.lane.b32.xlu0 %v2029, 90
      %v2034 = vpop.permute.xlu0 %2033
      %2035 = vrot.lane.b32.xlu0 %v2030, 90
      %v2036 = vpop.permute.xlu0 %2035
      %v2037 = vrot.slane %v2034, 4
      %v2038 = vrot.slane %v2036, 4
      %v2039 = vsel %vm275, %v2037, %v2038
      %v2040 = vsel %vm403, %v2034, %v2039
      %v2041 = vsel %vm403, %v2036, %v2038
      %2044 = vst [vmem:[#allocation2 + $0x60] sm:$0xff] %v2040
      %2045 = vst [vmem:[#allocation2 + $0x68] sm:$0xf] %v2041
      %v2046 = vld [vmem:[%s1384] sm:$0xff]
      %v2047 = vld [vmem:[%s1384 + $0x8] sm:$0xf]
      %2048 = vst [vmem:[#allocation2 + $0x6c] sm:$0xff] %v2046
      %2049 = vst [vmem:[#allocation2 + $0x74] sm:$0xf] %v2047
      %v2050 = vld [vmem:[%s1384] sm:$0xff]
      %v2051 = vld [vmem:[%s1384 + $0x8] sm:$0xff]
      %2054 = vrot.lane.b32.xlu0 %v2050, 127
      %v2055 = vpop.permute.xlu0 %2054
      %2056 = vrot.lane.b32.xlu0 %v2051, 127
      %v2057 = vpop.permute.xlu0 %2056
      %v2058 = vrot.slane %v2055, 4
      %v2059 = vrot.slane %v2057, 4
      %v2060 = vsel %vm275, %v2058, %v2059
      %v2061 = vsel %vm277, %v2055, %v2060
      %v2062 = vsel %vm277, %v2057, %v2059
      %2065 = vst [vmem:[#allocation2 + $0x78] sm:$0xff] %v2061
      %2066 = vst [vmem:[#allocation2 + $0x80] sm:$0xf] %v2062
      %v2067 = vld [vmem:[%s1384] sm:$0xff]
      %v2068 = vld [vmem:[%s1384 + $0x8] sm:$0xff]
      %2071 = vrot.lane.b32.xlu0 %v2067, 126
      %v2072 = vpop.permute.xlu0 %2071
      %2073 = vrot.lane.b32.xlu0 %v2068, 126
      %v2074 = vpop.permute.xlu0 %2073
      %v2075 = vrot.slane %v2072, 4
      %v2076 = vrot.slane %v2074, 4
      %v2077 = vsel %vm275, %v2075, %v2076
      %v2078 = vsel %vm295, %v2072, %v2077
      %v2079 = vsel %vm295, %v2074, %v2076
      %2082 = vst [vmem:[#allocation2 + $0x84] sm:$0xff] %v2078
      %2083 = vst [vmem:[#allocation2 + $0x8c] sm:$0xf] %v2079
      %v2084 = vld [vmem:[%s1384] sm:$0xff]
      %v2085 = vld [vmem:[%s1384 + $0x8] sm:$0xff]
      %2088 = vrot.lane.b32.xlu0 %v2084, 110
      %v2089 = vpop.permute.xlu0 %2088
      %2090 = vrot.lane.b32.xlu0 %v2085, 110
      %v2091 = vpop.permute.xlu0 %2090
      %v2092 = vrot.slane %v2089, 4
      %v2093 = vrot.slane %v2091, 4
      %v2094 = vsel %vm275, %v2092, %v2093
      %v2095 = vsel %vm313, %v2089, %v2094
      %v2096 = vsel %vm313, %v2091, %v2093
      %2099 = vst [vmem:[#allocation2 + $0x90] sm:$0xff] %v2095
      %2100 = vst [vmem:[#allocation2 + $0x98] sm:$0xf] %v2096
      %v2101 = vld [vmem:[%s1384] sm:$0xff]
      %v2102 = vld [vmem:[%s1384 + $0x8] sm:$0xff]
      %2105 = vrot.lane.b32.xlu0 %v2101, 109
      %v2106 = vpop.permute.xlu0 %2105
      %2107 = vrot.lane.b32.xlu0 %v2102, 109
      %v2108 = vpop.permute.xlu0 %2107
      %v2109 = vrot.slane %v2106, 4
      %v2110 = vrot.slane %v2108, 4
      %v2111 = vsel %vm275, %v2109, %v2110
      %v2112 = vsel %vm331, %v2106, %v2111
      %v2113 = vsel %vm331, %v2108, %v2110
      %2116 = vst [vmem:[#allocation2 + $0x9c] sm:$0xff] %v2112
      %2117 = vst [vmem:[#allocation2 + $0xa4] sm:$0xf] %v2113
      %v2118 = vld [vmem:[%s1384] sm:$0xff]
      %v2119 = vld [vmem:[%s1384 + $0x8] sm:$0xff]
      %2122 = vrot.lane.b32.xlu0 %v2118, 108
      %v2123 = vpop.permute.xlu0 %2122
      %2124 = vrot.lane.b32.xlu0 %v2119, 108
      %v2125 = vpop.permute.xlu0 %2124
      %v2126 = vrot.slane %v2123, 4
      %v2127 = vrot.slane %v2125, 4
      %v2128 = vsel %vm275, %v2126, %v2127
      %v2129 = vsel %vm349, %v2123, %v2128
      %v2130 = vsel %vm349, %v2125, %v2127
      %2133 = vst [vmem:[#allocation2 + $0xa8] sm:$0xff] %v2129
      %2134 = vst [vmem:[#allocation2 + $0xb0] sm:$0xf] %v2130
      %v2135 = vld [vmem:[%s1384] sm:$0xff]
      %v2136 = vld [vmem:[%s1384 + $0x8] sm:$0xff]
      %2139 = vrot.lane.b32.xlu0 %v2135, 92
      %v2140 = vpop.permute.xlu0 %2139
      %2141 = vrot.lane.b32.xlu0 %v2136, 92
      %v2142 = vpop.permute.xlu0 %2141
      %v2143 = vrot.slane %v2140, 4
      %v2144 = vrot.slane %v2142, 4
      %v2145 = vsel %vm275, %v2143, %v2144
      %v2146 = vsel %vm367, %v2140, %v2145
      %v2147 = vsel %vm367, %v2142, %v2144
      %2150 = vst [vmem:[#allocation2 + $0xb4] sm:$0xff] %v2146
      %2151 = vst [vmem:[#allocation2 + $0xbc] sm:$0xf] %v2147
      %v2152 = vld [vmem:[%s1384] sm:$0xff]
      %v2153 = vld [vmem:[%s1384 + $0x8] sm:$0xff]
      %2156 = vrot.lane.b32.xlu0 %v2152, 91
      %v2157 = vpop.permute.xlu0 %2156
      %2158 = vrot.lane.b32.xlu0 %v2153, 91
      %v2159 = vpop.permute.xlu0 %2158
      %v2160 = vrot.slane %v2157, 4
      %v2161 = vrot.slane %v2159, 4
      %v2162 = vsel %vm275, %v2160, %v2161
      %v2163 = vsel %vm385, %v2157, %v2162
      %v2164 = vsel %vm385, %v2159, %v2161
      %2167 = vst [vmem:[#allocation2 + $0xc0] sm:$0xff] %v2163
      %2168 = vst [vmem:[#allocation2 + $0xc8] sm:$0xf] %v2164
      %v2169 = vld [vmem:[%s1384] sm:$0xff]
      %v2170 = vld [vmem:[%s1384 + $0x8] sm:$0xff]
      %2173 = vrot.lane.b32.xlu0 %v2169, 90
      %v2174 = vpop.permute.xlu0 %2173
      %2175 = vrot.lane.b32.xlu0 %v2170, 90
      %v2176 = vpop.permute.xlu0 %2175
      %v2177 = vrot.slane %v2174, 4
      %v2178 = vrot.slane %v2176, 4
      %v2179 = vsel %vm275, %v2177, %v2178
      %v2180 = vsel %vm403, %v2174, %v2179
      %v2181 = vsel %vm403, %v2176, %v2178
      %2184 = vst [vmem:[#allocation2 + $0xcc] sm:$0xff] %v2180
      %2185 = vst [vmem:[#allocation2 + $0xd4] sm:$0xf] %v2181
      %s2186 = scalar_lea.vmem %s238, 64
      %v2187 = vld [vmem:[%s2186] sm:$0xff]
      %v2188 = vld [vmem:[%s2186 + $0x8] sm:$0xf]
      %2189 = vst [vmem:[#allocation2 + $0xd8] sm:$0xff] %v2187
      %2190 = vst [vmem:[#allocation2 + $0xe0] sm:$0xf] %v2188
      %v2191 = vld [vmem:[%s2186] sm:$0xff]
      %v2192 = vld [vmem:[%s2186 + $0x8] sm:$0xff]
      %2195 = vrot.lane.b32.xlu0 %v2191, 127
      %v2196 = vpop.permute.xlu0 %2195
      %2197 = vrot.lane.b32.xlu0 %v2192, 127
      %v2198 = vpop.permute.xlu0 %2197
      %v2199 = vrot.slane %v2196, 4
      %v2200 = vrot.slane %v2198, 4
      %v2201 = vsel %vm275, %v2199, %v2200
      %v2202 = vsel %vm277, %v2196, %v2201
      %v2203 = vsel %vm277, %v2198, %v2200
      %2206 = vst [vmem:[#allocation2 + $0xe4] sm:$0xff] %v2202
      %2207 = vst [vmem:[#allocation2 + $0xec] sm:$0xf] %v2203
      %v2208 = vld [vmem:[%s2186] sm:$0xff]
      %v2209 = vld [vmem:[%s2186 + $0x8] sm:$0xff]
      %2212 = vrot.lane.b32.xlu0 %v2208, 126
      %v2213 = vpop.permute.xlu0 %2212
      %2214 = vrot.lane.b32.xlu0 %v2209, 126
      %v2215 = vpop.permute.xlu0 %2214
      %v2216 = vrot.slane %v2213, 4
      %v2217 = vrot.slane %v2215, 4
      %v2218 = vsel %vm275, %v2216, %v2217
      %v2219 = vsel %vm295, %v2213, %v2218
      %v2220 = vsel %vm295, %v2215, %v2217
      %2223 = vst [vmem:[#allocation2 + $0xf0] sm:$0xff] %v2219
      %2224 = vst [vmem:[#allocation2 + $0xf8] sm:$0xf] %v2220
      %v2225 = vld [vmem:[%s2186] sm:$0xff]
      %v2226 = vld [vmem:[%s2186 + $0x8] sm:$0xff]
      %2229 = vrot.lane.b32.xlu0 %v2225, 110
      %v2230 = vpop.permute.xlu0 %2229
      %2231 = vrot.lane.b32.xlu0 %v2226, 110
      %v2232 = vpop.permute.xlu0 %2231
      %v2233 = vrot.slane %v2230, 4
      %v2234 = vrot.slane %v2232, 4
      %v2235 = vsel %vm275, %v2233, %v2234
      %v2236 = vsel %vm313, %v2230, %v2235
      %v2237 = vsel %vm313, %v2232, %v2234
      %2240 = vst [vmem:[#allocation2 + $0xfc] sm:$0xff] %v2236
      %2241 = vst [vmem:[#allocation2 + $0x104] sm:$0xf] %v2237
      %v2242 = vld [vmem:[%s2186] sm:$0xff]
      %v2243 = vld [vmem:[%s2186 + $0x8] sm:$0xff]
      %2246 = vrot.lane.b32.xlu0 %v2242, 109
      %v2247 = vpop.permute.xlu0 %2246
      %2248 = vrot.lane.b32.xlu0 %v2243, 109
      %v2249 = vpop.permute.xlu0 %2248
      %v2250 = vrot.slane %v2247, 4
      %v2251 = vrot.slane %v2249, 4
      %v2252 = vsel %vm275, %v2250, %v2251
      %v2253 = vsel %vm331, %v2247, %v2252
      %v2254 = vsel %vm331, %v2249, %v2251
      %2257 = vst [vmem:[#allocation2 + $0x108] sm:$0xff] %v2253
      %2258 = vst [vmem:[#allocation2 + $0x110] sm:$0xf] %v2254
      %v2259 = vld [vmem:[%s2186] sm:$0xff]
      %v2260 = vld [vmem:[%s2186 + $0x8] sm:$0xff]
      %2263 = vrot.lane.b32.xlu0 %v2259, 108
      %v2264 = vpop.permute.xlu0 %2263
      %2265 = vrot.lane.b32.xlu0 %v2260, 108
      %v2266 = vpop.permute.xlu0 %2265
      %v2267 = vrot.slane %v2264, 4
      %v2268 = vrot.slane %v2266, 4
      %v2269 = vsel %vm275, %v2267, %v2268
      %v2270 = vsel %vm349, %v2264, %v2269
      %v2271 = vsel %vm349, %v2266, %v2268
      %2274 = vst [vmem:[#allocation2 + $0x114] sm:$0xff] %v2270
      %2275 = vst [vmem:[#allocation2 + $0x11c] sm:$0xf] %v2271
      %v2276 = vld [vmem:[%s2186] sm:$0xff]
      %v2277 = vld [vmem:[%s2186 + $0x8] sm:$0xff]
      %2280 = vrot.lane.b32.xlu0 %v2276, 92
      %v2281 = vpop.permute.xlu0 %2280
      %2282 = vrot.lane.b32.xlu0 %v2277, 92
      %v2283 = vpop.permute.xlu0 %2282
      %v2284 = vrot.slane %v2281, 4
      %v2285 = vrot.slane %v2283, 4
      %v2286 = vsel %vm275, %v2284, %v2285
      %v2287 = vsel %vm367, %v2281, %v2286
      %v2288 = vsel %vm367, %v2283, %v2285
      %2291 = vst [vmem:[#allocation2 + $0x120] sm:$0xff] %v2287
      %2292 = vst [vmem:[#allocation2 + $0x128] sm:$0xf] %v2288
      %v2293 = vld [vmem:[%s2186] sm:$0xff]
      %v2294 = vld [vmem:[%s2186 + $0x8] sm:$0xff]
      %2297 = vrot.lane.b32.xlu0 %v2293, 91
      %v2298 = vpop.permute.xlu0 %2297
      %2299 = vrot.lane.b32.xlu0 %v2294, 91
      %v2300 = vpop.permute.xlu0 %2299
      %v2301 = vrot.slane %v2298, 4
      %v2302 = vrot.slane %v2300, 4
      %v2303 = vsel %vm275, %v2301, %v2302
      %v2304 = vsel %vm385, %v2298, %v2303
      %v2305 = vsel %vm385, %v2300, %v2302
      %2308 = vst [vmem:[#allocation2 + $0x12c] sm:$0xff] %v2304
      %2309 = vst [vmem:[#allocation2 + $0x134] sm:$0xf] %v2305
      %v2310 = vld [vmem:[%s2186] sm:$0xff]
      %v2311 = vld [vmem:[%s2186 + $0x8] sm:$0xff]
      %2314 = vrot.lane.b32.xlu0 %v2310, 90
      %v2315 = vpop.permute.xlu0 %2314
      %2316 = vrot.lane.b32.xlu0 %v2311, 90
      %v2317 = vpop.permute.xlu0 %2316
      %v2318 = vrot.slane %v2315, 4
      %v2319 = vrot.slane %v2317, 4
      %v2320 = vsel %vm275, %v2318, %v2319
      %v2321 = vsel %vm403, %v2315, %v2320
      %v2322 = vsel %vm403, %v2317, %v2319
      %2325 = vst [vmem:[#allocation2 + $0x138] sm:$0xff] %v2321
      %2326 = vst [vmem:[#allocation2 + $0x140] sm:$0xf] %v2322
      %v2327 = vld [vmem:[#allocation2] sm:$0xff]
      %v2328 = vld [vmem:[#allocation2 + $0x8] sm:$0xf]
      %v2329 = vld [vmem:[#allocation2 + $0xc] sm:$0xff]
      %v2330 = vld [vmem:[#allocation2 + $0x14] sm:$0xf]
      %v2331 = vld [vmem:[#allocation2 + $0x18] sm:$0xff]
      %v2332 = vld [vmem:[#allocation2 + $0x20] sm:$0xf]
      %v2333 = vld [vmem:[#allocation2 + $0x24] sm:$0xff]
      %v2334 = vld [vmem:[#allocation2 + $0x2c] sm:$0xf]
      %v2335 = vld [vmem:[#allocation2 + $0x30] sm:$0xff]
      %v2336 = vld [vmem:[#allocation2 + $0x38] sm:$0xf]
      %v2337 = vld [vmem:[#allocation2 + $0x3c] sm:$0xff]
      %v2338 = vld [vmem:[#allocation2 + $0x44] sm:$0xf]
      %v2339 = vld [vmem:[#allocation2 + $0x48] sm:$0xff]
      %v2340 = vld [vmem:[#allocation2 + $0x50] sm:$0xf]
      %v2341 = vld [vmem:[#allocation2 + $0x54] sm:$0xff]
      %v2342 = vld [vmem:[#allocation2 + $0x5c] sm:$0xf]
      %v2343 = vld [vmem:[#allocation2 + $0x60] sm:$0xff]
      %v2344 = vld [vmem:[#allocation2 + $0x68] sm:$0xf]
      %v2345 = vld [vmem:[#allocation2 + $0x6c] sm:$0xff]
      %v2346 = vld [vmem:[#allocation2 + $0x74] sm:$0xf]
      %v2347 = vld [vmem:[#allocation2 + $0x78] sm:$0xff]
      %v2348 = vld [vmem:[#allocation2 + $0x80] sm:$0xf]
      %v2349 = vld [vmem:[#allocation2 + $0x84] sm:$0xff]
      %v2350 = vld [vmem:[#allocation2 + $0x8c] sm:$0xf]
      %v2351 = vld [vmem:[#allocation2 + $0x90] sm:$0xff]
      %v2352 = vld [vmem:[#allocation2 + $0x98] sm:$0xf]
      %v2353 = vld [vmem:[#allocation2 + $0x9c] sm:$0xff]
      %v2354 = vld [vmem:[#allocation2 + $0xa4] sm:$0xf]
      %v2355 = vld [vmem:[#allocation2 + $0xa8] sm:$0xff]
      %v2356 = vld [vmem:[#allocation2 + $0xb0] sm:$0xf]
      %v2357 = vld [vmem:[#allocation2 + $0xb4] sm:$0xff]
      %v2358 = vld [vmem:[#allocation2 + $0xbc] sm:$0xf]
      %v2359 = vld [vmem:[#allocation2 + $0xc0] sm:$0xff]
      %v2360 = vld [vmem:[#allocation2 + $0xc8] sm:$0xf]
      %v2361 = vld [vmem:[#allocation2 + $0xcc] sm:$0xff]
      %v2362 = vld [vmem:[#allocation2 + $0xd4] sm:$0xf]
      %v2363 = vld [vmem:[#allocation2 + $0xd8] sm:$0xff]
      %v2364 = vld [vmem:[#allocation2 + $0xe0] sm:$0xf]
      %v2365 = vld [vmem:[#allocation2 + $0xe4] sm:$0xff]
      %v2366 = vld [vmem:[#allocation2 + $0xec] sm:$0xf]
      %v2367 = vld [vmem:[#allocation2 + $0xf0] sm:$0xff]
      %v2368 = vld [vmem:[#allocation2 + $0xf8] sm:$0xf]
      %v2369 = vld [vmem:[#allocation2 + $0xfc] sm:$0xff]
      %v2370 = vld [vmem:[#allocation2 + $0x104] sm:$0xf]
      %v2371 = vld [vmem:[#allocation2 + $0x108] sm:$0xff]
      %v2372 = vld [vmem:[#allocation2 + $0x110] sm:$0xf]
      %v2373 = vld [vmem:[#allocation2 + $0x114] sm:$0xff]
      %v2374 = vld [vmem:[#allocation2 + $0x11c] sm:$0xf]
      %v2375 = vld [vmem:[#allocation2 + $0x120] sm:$0xff]
      %v2376 = vld [vmem:[#allocation2 + $0x128] sm:$0xf]
      %v2377 = vld [vmem:[#allocation2 + $0x12c] sm:$0xff]
      %v2378 = vld [vmem:[#allocation2 + $0x134] sm:$0xf]
      %v2379 = vld [vmem:[#allocation2 + $0x138] sm:$0xff]
      %v2380 = vld [vmem:[#allocation2 + $0x140] sm:$0xf]
      %v2435 = vunpack.c.l.b16 %v2327
      %v2436 = vunpack.c.h.b16 %v2327
      %v2437 = vunpack.c.l.b16 %v2328
      %v2438 = vunpack.c.l.b16 %v2329
      %v2439 = vunpack.c.h.b16 %v2329
      %v2440 = vunpack.c.l.b16 %v2330
      %v2441 = vunpack.c.l.b16 %v2331
      %v2442 = vunpack.c.h.b16 %v2331
      %v2443 = vunpack.c.l.b16 %v2332
      %v2444 = vunpack.c.l.b16 %v2333
      %v2445 = vunpack.c.h.b16 %v2333
      %v2446 = vunpack.c.l.b16 %v2334
      %v2447 = vunpack.c.l.b16 %v2335
      %v2448 = vunpack.c.h.b16 %v2335
      %v2449 = vunpack.c.l.b16 %v2336
      %v2450 = vunpack.c.l.b16 %v2337
      %v2451 = vunpack.c.h.b16 %v2337
      %v2452 = vunpack.c.l.b16 %v2338
      %v2453 = vunpack.c.l.b16 %v2339
      %v2454 = vunpack.c.h.b16 %v2339
      %v2455 = vunpack.c.l.b16 %v2340
      %v2456 = vunpack.c.l.b16 %v2341
      %v2457 = vunpack.c.h.b16 %v2341
      %v2458 = vunpack.c.l.b16 %v2342
      %v2459 = vunpack.c.l.b16 %v2343
      %v2460 = vunpack.c.h.b16 %v2343
      %v2461 = vunpack.c.l.b16 %v2344
      %v2462 = vunpack.c.l.b16 %v2345
      %v2463 = vunpack.c.h.b16 %v2345
      %v2464 = vunpack.c.l.b16 %v2346
      %v2465 = vunpack.c.l.b16 %v2347
      %v2466 = vunpack.c.h.b16 %v2347
      %v2467 = vunpack.c.l.b16 %v2348
      %v2468 = vunpack.c.l.b16 %v2349
      %v2469 = vunpack.c.h.b16 %v2349
      %v2470 = vunpack.c.l.b16 %v2350
      %v2471 = vunpack.c.l.b16 %v2351
      %v2472 = vunpack.c.h.b16 %v2351
      %v2473 = vunpack.c.l.b16 %v2352
      %v2474 = vunpack.c.l.b16 %v2353
      %v2475 = vunpack.c.h.b16 %v2353
      %v2476 = vunpack.c.l.b16 %v2354
      %v2477 = vunpack.c.l.b16 %v2355
      %v2478 = vunpack.c.h.b16 %v2355
      %v2479 = vunpack.c.l.b16 %v2356
      %v2480 = vunpack.c.l.b16 %v2357
      %v2481 = vunpack.c.h.b16 %v2357
      %v2482 = vunpack.c.l.b16 %v2358
      %v2483 = vunpack.c.l.b16 %v2359
      %v2484 = vunpack.c.h.b16 %v2359
      %v2485 = vunpack.c.l.b16 %v2360
      %v2486 = vunpack.c.l.b16 %v2361
      %v2487 = vunpack.c.h.b16 %v2361
      %v2488 = vunpack.c.l.b16 %v2362
      %v2489 = vunpack.c.l.b16 %v2363
      %v2490 = vunpack.c.h.b16 %v2363
      %v2491 = vunpack.c.l.b16 %v2364
      %v2492 = vunpack.c.l.b16 %v2365
      %v2493 = vunpack.c.h.b16 %v2365
      %v2494 = vunpack.c.l.b16 %v2366
      %v2495 = vunpack.c.l.b16 %v2367
      %v2496 = vunpack.c.h.b16 %v2367
      %v2497 = vunpack.c.l.b16 %v2368
      %v2498 = vunpack.c.l.b16 %v2369
      %v2499 = vunpack.c.h.b16 %v2369
      %v2500 = vunpack.c.l.b16 %v2370
      %v2501 = vunpack.c.l.b16 %v2371
      %v2502 = vunpack.c.h.b16 %v2371
      %v2503 = vunpack.c.l.b16 %v2372
      %v2504 = vunpack.c.l.b16 %v2373
      %v2505 = vunpack.c.h.b16 %v2373
      %v2506 = vunpack.c.l.b16 %v2374
      %v2507 = vunpack.c.l.b16 %v2375
      %v2508 = vunpack.c.h.b16 %v2375
      %v2509 = vunpack.c.l.b16 %v2376
      %v2510 = vunpack.c.l.b16 %v2377
      %v2511 = vunpack.c.h.b16 %v2377
      %v2512 = vunpack.c.l.b16 %v2378
      %v2513 = vunpack.c.l.b16 %v2379
      %v2514 = vunpack.c.h.b16 %v2379
      %v2515 = vunpack.c.l.b16 %v2380
      %v2516 = vpack.c.b16 %v2438, %v2435
      %v2517 = vpack.c.b16 %v2439, %v2436
      %v2518 = vpack.c.b16 %v2440, %v2437
      %v2519 = vpack.c.b16 %v2444, %v2441
      %v2520 = vpack.c.b16 %v2445, %v2442
      %v2521 = vpack.c.b16 %v2446, %v2443
      %v2522 = vpack.c.b16 %v2450, %v2447
      %v2523 = vpack.c.b16 %v2451, %v2448
      %v2524 = vpack.c.b16 %v2452, %v2449
      %v2525 = vpack.c.b16 %v2456, %v2453
      %v2526 = vpack.c.b16 %v2457, %v2454
      %v2527 = vpack.c.b16 %v2458, %v2455
      %v2528 = vpack.c.b16 %v2462, %v2459
      %v2529 = vpack.c.b16 %v2463, %v2460
      %v2530 = vpack.c.b16 %v2464, %v2461
      %v2531 = vpack.c.b16 %v2468, %v2465
      %v2532 = vpack.c.b16 %v2469, %v2466
      %v2533 = vpack.c.b16 %v2470, %v2467
      %v2534 = vpack.c.b16 %v2474, %v2471
      %v2535 = vpack.c.b16 %v2475, %v2472
      %v2536 = vpack.c.b16 %v2476, %v2473
      %v2537 = vpack.c.b16 %v2480, %v2477
      %v2538 = vpack.c.b16 %v2481, %v2478
      %v2539 = vpack.c.b16 %v2482, %v2479
      %v2540 = vpack.c.b16 %v2486, %v2483
      %v2541 = vpack.c.b16 %v2487, %v2484
      %v2542 = vpack.c.b16 %v2488, %v2485
      %v2543 = vpack.c.b16 %v2492, %v2489
      %v2544 = vpack.c.b16 %v2493, %v2490
      %v2545 = vpack.c.b16 %v2494, %v2491
      %v2546 = vpack.c.b16 %v2498, %v2495
      %v2547 = vpack.c.b16 %v2499, %v2496
      %v2548 = vpack.c.b16 %v2500, %v2497
      %v2549 = vpack.c.b16 %v2504, %v2501
      %v2550 = vpack.c.b16 %v2505, %v2502
      %v2551 = vpack.c.b16 %v2506, %v2503
      %v2552 = vpack.c.b16 %v2510, %v2507
      %v2553 = vpack.c.b16 %v2511, %v2508
      %v2554 = vpack.c.b16 %v2512, %v2509
      %v2555 = vpack.c.b16 %v2513, %v2513
      %v2556 = vpack.c.b16 %v2514, %v2514
      %v2557 = vpack.c.b16 %v2515, %v2515
      %v2598 = vsel %vm977, %v2555, 0
      %v2601 = vsel %vm977, %v2556, 0
      %v2604 = vsel %vm977, %v2557, 0
      %2606 = vmatprep.subr.bf16.mxu0 %v2517
      %2607 = vmatpush1.bf16.msra.mxu0 %v2516
      %2608 = vmatprep.subr.bf16.mxu0 %v2520
      %2609 = vmatpush1.bf16.msra.mxu0 %v2519
      %2610 = vmatprep.subr.bf16.mxu0 %v2523
      %2611 = vmatpush1.bf16.msra.mxu0 %v2522
      %2612 = vmatprep.subr.bf16.mxu0 %v2526
      %2613 = vmatpush1.bf16.msra.mxu0 %v2525
      %2614 = vmatprep.subr.bf16.mxu0 %v2529
      %2615 = vmatpush1.bf16.msra.mxu0 %v2528
      %2616 = vmatprep.subr.bf16.mxu0 %v2532
      %2617 = vmatpush1.bf16.msra.mxu0 %v2531
      %2618 = vmatprep.subr.bf16.mxu0 %v2535
      %2619 = vmatpush1.bf16.msra.mxu0 %v2534
      %2620 = vmatprep.subr.bf16.mxu0 %v2538
      %2621 = vmatpush1.bf16.msra.mxu0 %v2537
      %2622 = vmatprep.subr.bf16.mxu0 %v2541
      %2623 = vmatpush1.bf16.msra.mxu0 %v2540
      %2624 = vmatprep.subr.bf16.mxu0 %v2544
      %2625 = vmatpush1.bf16.msra.mxu0 %v2543
      %2626 = vmatprep.subr.bf16.mxu0 %v2547
      %2627 = vmatpush1.bf16.msra.mxu0 %v2546
      %2628 = vmatprep.subr.bf16.mxu0 %v2550
      %2629 = vmatpush1.bf16.msra.mxu0 %v2549
      %2630 = vmatprep.subr.bf16.mxu0 %v2553
      %2631 = vmatpush1.bf16.msra.mxu0 %v2552
      %2632 = vmatprep.subr.bf16.mxu0 %v2601
      %2633 = vmatpush1.bf16.msra.mxu0 %v2598
      %2634 = vmatprep.subr.bf16.mxu0 0
      %2635 = vmatpush1.bf16.msra.mxu0 0
      %2636 = vmatprep.subr.bf16.mxu0 0
      %2637 = vmatpush1.bf16.msra.mxu0 0
      %2638 = vmatprep.mubr.bf16.mxu0 %v975
      %2639 = vmatmul.mubr.bf16.gmra.mrb[0].mxu0 %v754
      %v2640 = vpop.f32.mrb[0].mxu0
      %v2641 = vadd.f32 %v749, %v2640
      %v2642 = vpop.f32.mrb[0].mxu0
      %v2643 = vadd.f32 %v749, %v2642
      %v2644 = vpop.f32.mrb[0].mxu0
      %v2645 = vpop.f32.mrb[0].mxu0
      %2646 = vdwg.mxu0
      %2647 = vmatprep.subr.bf16.mxu0 0
      %2648 = vmatpush1.bf16.msra.mxu0 %v2518
      %2649 = vmatprep.subr.bf16.mxu0 0
      %2650 = vmatpush1.bf16.msra.mxu0 %v2521
      %2651 = vmatprep.subr.bf16.mxu0 0
      %2652 = vmatpush1.bf16.msra.mxu0 %v2524
      %2653 = vmatprep.subr.bf16.mxu0 0
      %2654 = vmatpush1.bf16.msra.mxu0 %v2527
      %2655 = vmatprep.subr.bf16.mxu0 0
      %2656 = vmatpush1.bf16.msra.mxu0 %v2530
      %2657 = vmatprep.subr.bf16.mxu0 0
      %2658 = vmatpush1.bf16.msra.mxu0 %v2533
      %2659 = vmatprep.subr.bf16.mxu0 0
      %2660 = vmatpush1.bf16.msra.mxu0 %v2536
      %2661 = vmatprep.subr.bf16.mxu0 0
      %2662 = vmatpush1.bf16.msra.mxu0 %v2539
      %2663 = vmatprep.subr.bf16.mxu0 0
      %2664 = vmatpush1.bf16.msra.mxu0 %v2542
      %2665 = vmatprep.subr.bf16.mxu0 0
      %2666 = vmatpush1.bf16.msra.mxu0 %v2545
      %2667 = vmatprep.subr.bf16.mxu0 0
      %2668 = vmatpush1.bf16.msra.mxu0 %v2548
      %2669 = vmatprep.subr.bf16.mxu0 0
      %2670 = vmatpush1.bf16.msra.mxu0 %v2551
      %2671 = vmatprep.subr.bf16.mxu0 0
      %2672 = vmatpush1.bf16.msra.mxu0 %v2554
      %2673 = vmatprep.subr.bf16.mxu0 0
      %2674 = vmatpush1.bf16.msra.mxu0 %v2604
      %2675 = vmatprep.subr.bf16.mxu0 0
      %2676 = vmatpush1.bf16.msra.mxu0 0
      %2677 = vmatprep.subr.bf16.mxu0 0
      %2678 = vmatpush1.bf16.msra.mxu0 0
      %2679 = vmatprep.mubr.bf16.mxu0 %v975
      %2680 = vmatmul.mubr.bf16.gmra.mrb[0].mxu0 %v754
      %v2681 = vpop.f32.mrb[0].mxu0
      %v2682 = vadd.f32 %v749, %v2681
      %v2683 = vpop.f32.mrb[0].mxu0
      %v2684 = vpop.f32.mrb[0].mxu0
      %v2685 = vpop.f32.mrb[0].mxu0
      %2686 = vdwg.mxu0
      %vm2687 = vcmp.ge.f32.partialorder %v2641, 0.0
      %vm2688 = vcmp.ge.f32.partialorder %v2643, 0.0
      %vm2689 = vcmp.ge.f32.partialorder %v2682, 0.0
      %v2690 = vmul.f32 %v2641, 0.2
      %v2691 = vmul.f32 %v2643, 0.2
      %v2692 = vmul.f32 %v2682, 0.2
      %v2693 = vsel %vm2687, %v2641, %v2690
      %v2694 = vsel %vm2688, %v2643, %v2691
      %v2695 = vsel %vm2689, %v2682, %v2692
      %s2696 = scalar_lea.vmem %s256, 48
      %2697 = vst [vmem:[%s2696] sm:$0xff] %v2693
      %2698 = vst [vmem:[%s2696 + $0x8] sm:$0xff] %v2694
      %2699 = vst [vmem:[%s2696 + $0x10] sm:$0xff] %v2695
      %v2700 = vmul.f32 %v2693, %v1084
      %v2701 = vmul.f32 %v2694, %v1088
      %v2702 = vmul.f32 %v2695, %v1092
      %v2703 = vadd.f32 %v2700, %v2701
      %v2704 = vadd.f32 %v2703, %v2702
      %2705 = vadd.xlane.f32.xlu0 %v2704
      %v2706 = vpop.xlane.xlu0 %2705
      %v2707 = vadd.f32 %v1905, %v2706
      %v2708 = vld [vmem:[%s1384] sm:$0xff]
      %v2709 = vld [vmem:[%s1384 + $0x8] sm:$0xf]
      %2710 = vst [vmem:[#allocation2] sm:$0xff] %v2708
      %2711 = vst [vmem:[#allocation2 + $0x8] sm:$0xf] %v2709
      %v2712 = vld [vmem:[%s1384] sm:$0xff]
      %v2713 = vld [vmem:[%s1384 + $0x8] sm:$0xff]
      %2716 = vrot.lane.b32.xlu0 %v2712, 127
      %v2717 = vpop.permute.xlu0 %2716
      %2718 = vrot.lane.b32.xlu0 %v2713, 127
      %v2719 = vpop.permute.xlu0 %2718
      %v2720 = vrot.slane %v2717, 4
      %v2721 = vrot.slane %v2719, 4
      %v2722 = vsel %vm275, %v2720, %v2721
      %v2723 = vsel %vm277, %v2717, %v2722
      %v2724 = vsel %vm277, %v2719, %v2721
      %2727 = vst [vmem:[#allocation2 + $0xc] sm:$0xff] %v2723
      %2728 = vst [vmem:[#allocation2 + $0x14] sm:$0xf] %v2724
      %v2729 = vld [vmem:[%s1384] sm:$0xff]
      %v2730 = vld [vmem:[%s1384 + $0x8] sm:$0xff]
      %2733 = vrot.lane.b32.xlu0 %v2729, 126
      %v2734 = vpop.permute.xlu0 %2733
      %2735 = vrot.lane.b32.xlu0 %v2730, 126
      %v2736 = vpop.permute.xlu0 %2735
      %v2737 = vrot.slane %v2734, 4
      %v2738 = vrot.slane %v2736, 4
      %v2739 = vsel %vm275, %v2737, %v2738
      %v2740 = vsel %vm295, %v2734, %v2739
      %v2741 = vsel %vm295, %v2736, %v2738
      %2744 = vst [vmem:[#allocation2 + $0x18] sm:$0xff] %v2740
      %2745 = vst [vmem:[#allocation2 + $0x20] sm:$0xf] %v2741
      %v2746 = vld [vmem:[%s1384] sm:$0xff]
      %v2747 = vld [vmem:[%s1384 + $0x8] sm:$0xff]
      %2750 = vrot.lane.b32.xlu0 %v2746, 110
      %v2751 = vpop.permute.xlu0 %2750
      %2752 = vrot.lane.b32.xlu0 %v2747, 110
      %v2753 = vpop.permute.xlu0 %2752
      %v2754 = vrot.slane %v2751, 4
      %v2755 = vrot.slane %v2753, 4
      %v2756 = vsel %vm275, %v2754, %v2755
      %v2757 = vsel %vm313, %v2751, %v2756
      %v2758 = vsel %vm313, %v2753, %v2755
      %2761 = vst [vmem:[#allocation2 + $0x24] sm:$0xff] %v2757
      %2762 = vst [vmem:[#allocation2 + $0x2c] sm:$0xf] %v2758
      %v2763 = vld [vmem:[%s1384] sm:$0xff]
      %v2764 = vld [vmem:[%s1384 + $0x8] sm:$0xff]
      %2767 = vrot.lane.b32.xlu0 %v2763, 109
      %v2768 = vpop.permute.xlu0 %2767
      %2769 = vrot.lane.b32.xlu0 %v2764, 109
      %v2770 = vpop.permute.xlu0 %2769
      %v2771 = vrot.slane %v2768, 4
      %v2772 = vrot.slane %v2770, 4
      %v2773 = vsel %vm275, %v2771, %v2772
      %v2774 = vsel %vm331, %v2768, %v2773
      %v2775 = vsel %vm331, %v2770, %v2772
      %2778 = vst [vmem:[#allocation2 + $0x30] sm:$0xff] %v2774
      %2779 = vst [vmem:[#allocation2 + $0x38] sm:$0xf] %v2775
      %v2780 = vld [vmem:[%s1384] sm:$0xff]
      %v2781 = vld [vmem:[%s1384 + $0x8] sm:$0xff]
      %2784 = vrot.lane.b32.xlu0 %v2780, 108
      %v2785 = vpop.permute.xlu0 %2784
      %2786 = vrot.lane.b32.xlu0 %v2781, 108
      %v2787 = vpop.permute.xlu0 %2786
      %v2788 = vrot.slane %v2785, 4
      %v2789 = vrot.slane %v2787, 4
      %v2790 = vsel %vm275, %v2788, %v2789
      %v2791 = vsel %vm349, %v2785, %v2790
      %v2792 = vsel %vm349, %v2787, %v2789
      %2795 = vst [vmem:[#allocation2 + $0x3c] sm:$0xff] %v2791
      %2796 = vst [vmem:[#allocation2 + $0x44] sm:$0xf] %v2792
      %v2797 = vld [vmem:[%s1384] sm:$0xff]
      %v2798 = vld [vmem:[%s1384 + $0x8] sm:$0xff]
      %2801 = vrot.lane.b32.xlu0 %v2797, 92
      %v2802 = vpop.permute.xlu0 %2801
      %2803 = vrot.lane.b32.xlu0 %v2798, 92
      %v2804 = vpop.permute.xlu0 %2803
      %v2805 = vrot.slane %v2802, 4
      %v2806 = vrot.slane %v2804, 4
      %v2807 = vsel %vm275, %v2805, %v2806
      %v2808 = vsel %vm367, %v2802, %v2807
      %v2809 = vsel %vm367, %v2804, %v2806
      %2812 = vst [vmem:[#allocation2 + $0x48] sm:$0xff] %v2808
      %2813 = vst [vmem:[#allocation2 + $0x50] sm:$0xf] %v2809
      %v2814 = vld [vmem:[%s1384] sm:$0xff]
      %v2815 = vld [vmem:[%s1384 + $0x8] sm:$0xff]
      %2818 = vrot.lane.b32.xlu0 %v2814, 91
      %v2819 = vpop.permute.xlu0 %2818
      %2820 = vrot.lane.b32.xlu0 %v2815, 91
      %v2821 = vpop.permute.xlu0 %2820
      %v2822 = vrot.slane %v2819, 4
      %v2823 = vrot.slane %v2821, 4
      %v2824 = vsel %vm275, %v2822, %v2823
      %v2825 = vsel %vm385, %v2819, %v2824
      %v2826 = vsel %vm385, %v2821, %v2823
      %2829 = vst [vmem:[#allocation2 + $0x54] sm:$0xff] %v2825
      %2830 = vst [vmem:[#allocation2 + $0x5c] sm:$0xf] %v2826
      %v2831 = vld [vmem:[%s1384] sm:$0xff]
      %v2832 = vld [vmem:[%s1384 + $0x8] sm:$0xff]
      %2835 = vrot.lane.b32.xlu0 %v2831, 90
      %v2836 = vpop.permute.xlu0 %2835
      %2837 = vrot.lane.b32.xlu0 %v2832, 90
      %v2838 = vpop.permute.xlu0 %2837
      %v2839 = vrot.slane %v2836, 4
      %v2840 = vrot.slane %v2838, 4
      %v2841 = vsel %vm275, %v2839, %v2840
      %v2842 = vsel %vm403, %v2836, %v2841
      %v2843 = vsel %vm403, %v2838, %v2840
      %2846 = vst [vmem:[#allocation2 + $0x60] sm:$0xff] %v2842
      %2847 = vst [vmem:[#allocation2 + $0x68] sm:$0xf] %v2843
      %v2848 = vld [vmem:[%s2186] sm:$0xff]
      %v2849 = vld [vmem:[%s2186 + $0x8] sm:$0xf]
      %2850 = vst [vmem:[#allocation2 + $0x6c] sm:$0xff] %v2848
      %2851 = vst [vmem:[#allocation2 + $0x74] sm:$0xf] %v2849
      %v2852 = vld [vmem:[%s2186] sm:$0xff]
      %v2853 = vld [vmem:[%s2186 + $0x8] sm:$0xff]
      %2856 = vrot.lane.b32.xlu0 %v2852, 127
      %v2857 = vpop.permute.xlu0 %2856
      %2858 = vrot.lane.b32.xlu0 %v2853, 127
      %v2859 = vpop.permute.xlu0 %2858
      %v2860 = vrot.slane %v2857, 4
      %v2861 = vrot.slane %v2859, 4
      %v2862 = vsel %vm275, %v2860, %v2861
      %v2863 = vsel %vm277, %v2857, %v2862
      %v2864 = vsel %vm277, %v2859, %v2861
      %2867 = vst [vmem:[#allocation2 + $0x78] sm:$0xff] %v2863
      %2868 = vst [vmem:[#allocation2 + $0x80] sm:$0xf] %v2864
      %v2869 = vld [vmem:[%s2186] sm:$0xff]
      %v2870 = vld [vmem:[%s2186 + $0x8] sm:$0xff]
      %2873 = vrot.lane.b32.xlu0 %v2869, 126
      %v2874 = vpop.permute.xlu0 %2873
      %2875 = vrot.lane.b32.xlu0 %v2870, 126
      %v2876 = vpop.permute.xlu0 %2875
      %v2877 = vrot.slane %v2874, 4
      %v2878 = vrot.slane %v2876, 4
      %v2879 = vsel %vm275, %v2877, %v2878
      %v2880 = vsel %vm295, %v2874, %v2879
      %v2881 = vsel %vm295, %v2876, %v2878
      %2884 = vst [vmem:[#allocation2 + $0x84] sm:$0xff] %v2880
      %2885 = vst [vmem:[#allocation2 + $0x8c] sm:$0xf] %v2881
      %v2886 = vld [vmem:[%s2186] sm:$0xff]
      %v2887 = vld [vmem:[%s2186 + $0x8] sm:$0xff]
      %2890 = vrot.lane.b32.xlu0 %v2886, 110
      %v2891 = vpop.permute.xlu0 %2890
      %2892 = vrot.lane.b32.xlu0 %v2887, 110
      %v2893 = vpop.permute.xlu0 %2892
      %v2894 = vrot.slane %v2891, 4
      %v2895 = vrot.slane %v2893, 4
      %v2896 = vsel %vm275, %v2894, %v2895
      %v2897 = vsel %vm313, %v2891, %v2896
      %v2898 = vsel %vm313, %v2893, %v2895
      %2901 = vst [vmem:[#allocation2 + $0x90] sm:$0xff] %v2897
      %2902 = vst [vmem:[#allocation2 + $0x98] sm:$0xf] %v2898
      %v2903 = vld [vmem:[%s2186] sm:$0xff]
      %v2904 = vld [vmem:[%s2186 + $0x8] sm:$0xff]
      %2907 = vrot.lane.b32.xlu0 %v2903, 109
      %v2908 = vpop.permute.xlu0 %2907
      %2909 = vrot.lane.b32.xlu0 %v2904, 109
      %v2910 = vpop.permute.xlu0 %2909
      %v2911 = vrot.slane %v2908, 4
      %v2912 = vrot.slane %v2910, 4
      %v2913 = vsel %vm275, %v2911, %v2912
      %v2914 = vsel %vm331, %v2908, %v2913
      %v2915 = vsel %vm331, %v2910, %v2912
      %2918 = vst [vmem:[#allocation2 + $0x9c] sm:$0xff] %v2914
      %2919 = vst [vmem:[#allocation2 + $0xa4] sm:$0xf] %v2915
      %v2920 = vld [vmem:[%s2186] sm:$0xff]
      %v2921 = vld [vmem:[%s2186 + $0x8] sm:$0xff]
      %2924 = vrot.lane.b32.xlu0 %v2920, 108
      %v2925 = vpop.permute.xlu0 %2924
      %2926 = vrot.lane.b32.xlu0 %v2921, 108
      %v2927 = vpop.permute.xlu0 %2926
      %v2928 = vrot.slane %v2925, 4
      %v2929 = vrot.slane %v2927, 4
      %v2930 = vsel %vm275, %v2928, %v2929
      %v2931 = vsel %vm349, %v2925, %v2930
      %v2932 = vsel %vm349, %v2927, %v2929
      %2935 = vst [vmem:[#allocation2 + $0xa8] sm:$0xff] %v2931
      %2936 = vst [vmem:[#allocation2 + $0xb0] sm:$0xf] %v2932
      %v2937 = vld [vmem:[%s2186] sm:$0xff]
      %v2938 = vld [vmem:[%s2186 + $0x8] sm:$0xff]
      %2941 = vrot.lane.b32.xlu0 %v2937, 92
      %v2942 = vpop.permute.xlu0 %2941
      %2943 = vrot.lane.b32.xlu0 %v2938, 92
      %v2944 = vpop.permute.xlu0 %2943
      %v2945 = vrot.slane %v2942, 4
      %v2946 = vrot.slane %v2944, 4
      %v2947 = vsel %vm275, %v2945, %v2946
      %v2948 = vsel %vm367, %v2942, %v2947
      %v2949 = vsel %vm367, %v2944, %v2946
      %2952 = vst [vmem:[#allocation2 + $0xb4] sm:$0xff] %v2948
      %2953 = vst [vmem:[#allocation2 + $0xbc] sm:$0xf] %v2949
      %v2954 = vld [vmem:[%s2186] sm:$0xff]
      %v2955 = vld [vmem:[%s2186 + $0x8] sm:$0xff]
      %2958 = vrot.lane.b32.xlu0 %v2954, 91
      %v2959 = vpop.permute.xlu0 %2958
      %2960 = vrot.lane.b32.xlu0 %v2955, 91
      %v2961 = vpop.permute.xlu0 %2960
      %v2962 = vrot.slane %v2959, 4
      %v2963 = vrot.slane %v2961, 4
      %v2964 = vsel %vm275, %v2962, %v2963
      %v2965 = vsel %vm385, %v2959, %v2964
      %v2966 = vsel %vm385, %v2961, %v2963
      %2969 = vst [vmem:[#allocation2 + $0xc0] sm:$0xff] %v2965
      %2970 = vst [vmem:[#allocation2 + $0xc8] sm:$0xf] %v2966
      %v2971 = vld [vmem:[%s2186] sm:$0xff]
      %v2972 = vld [vmem:[%s2186 + $0x8] sm:$0xff]
      %2975 = vrot.lane.b32.xlu0 %v2971, 90
      %v2976 = vpop.permute.xlu0 %2975
      %2977 = vrot.lane.b32.xlu0 %v2972, 90
      %v2978 = vpop.permute.xlu0 %2977
      %v2979 = vrot.slane %v2976, 4
      %v2980 = vrot.slane %v2978, 4
      %v2981 = vsel %vm275, %v2979, %v2980
      %v2982 = vsel %vm403, %v2976, %v2981
      %v2983 = vsel %vm403, %v2978, %v2980
      %2986 = vst [vmem:[#allocation2 + $0xcc] sm:$0xff] %v2982
      %2987 = vst [vmem:[#allocation2 + $0xd4] sm:$0xf] %v2983
      %s2988 = scalar_lea.vmem %s238, 80
      %v2989 = vld [vmem:[%s2988] sm:$0xff]
      %v2990 = vld [vmem:[%s2988 + $0x8] sm:$0xf]
      %2991 = vst [vmem:[#allocation2 + $0xd8] sm:$0xff] %v2989
      %2992 = vst [vmem:[#allocation2 + $0xe0] sm:$0xf] %v2990
      %v2993 = vld [vmem:[%s2988] sm:$0xff]
      %v2994 = vld [vmem:[%s2988 + $0x8] sm:$0xff]
      %2997 = vrot.lane.b32.xlu0 %v2993, 127
      %v2998 = vpop.permute.xlu0 %2997
      %2999 = vrot.lane.b32.xlu0 %v2994, 127
      %v3000 = vpop.permute.xlu0 %2999
      %v3001 = vrot.slane %v2998, 4
      %v3002 = vrot.slane %v3000, 4
      %v3003 = vsel %vm275, %v3001, %v3002
      %v3004 = vsel %vm277, %v2998, %v3003
      %v3005 = vsel %vm277, %v3000, %v3002
      %3008 = vst [vmem:[#allocation2 + $0xe4] sm:$0xff] %v3004
      %3009 = vst [vmem:[#allocation2 + $0xec] sm:$0xf] %v3005
      %v3010 = vld [vmem:[%s2988] sm:$0xff]
      %v3011 = vld [vmem:[%s2988 + $0x8] sm:$0xff]
      %3014 = vrot.lane.b32.xlu0 %v3010, 126
      %v3015 = vpop.permute.xlu0 %3014
      %3016 = vrot.lane.b32.xlu0 %v3011, 126
      %v3017 = vpop.permute.xlu0 %3016
      %v3018 = vrot.slane %v3015, 4
      %v3019 = vrot.slane %v3017, 4
      %v3020 = vsel %vm275, %v3018, %v3019
      %v3021 = vsel %vm295, %v3015, %v3020
      %v3022 = vsel %vm295, %v3017, %v3019
      %3025 = vst [vmem:[#allocation2 + $0xf0] sm:$0xff] %v3021
      %3026 = vst [vmem:[#allocation2 + $0xf8] sm:$0xf] %v3022
      %v3027 = vld [vmem:[%s2988] sm:$0xff]
      %v3028 = vld [vmem:[%s2988 + $0x8] sm:$0xff]
      %3031 = vrot.lane.b32.xlu0 %v3027, 110
      %v3032 = vpop.permute.xlu0 %3031
      %3033 = vrot.lane.b32.xlu0 %v3028, 110
      %v3034 = vpop.permute.xlu0 %3033
      %v3035 = vrot.slane %v3032, 4
      %v3036 = vrot.slane %v3034, 4
      %v3037 = vsel %vm275, %v3035, %v3036
      %v3038 = vsel %vm313, %v3032, %v3037
      %v3039 = vsel %vm313, %v3034, %v3036
      %3042 = vst [vmem:[#allocation2 + $0xfc] sm:$0xff] %v3038
      %3043 = vst [vmem:[#allocation2 + $0x104] sm:$0xf] %v3039
      %v3044 = vld [vmem:[%s2988] sm:$0xff]
      %v3045 = vld [vmem:[%s2988 + $0x8] sm:$0xff]
      %3048 = vrot.lane.b32.xlu0 %v3044, 109
      %v3049 = vpop.permute.xlu0 %3048
      %3050 = vrot.lane.b32.xlu0 %v3045, 109
      %v3051 = vpop.permute.xlu0 %3050
      %v3052 = vrot.slane %v3049, 4
      %v3053 = vrot.slane %v3051, 4
      %v3054 = vsel %vm275, %v3052, %v3053
      %v3055 = vsel %vm331, %v3049, %v3054
      %v3056 = vsel %vm331, %v3051, %v3053
      %3059 = vst [vmem:[#allocation2 + $0x108] sm:$0xff] %v3055
      %3060 = vst [vmem:[#allocation2 + $0x110] sm:$0xf] %v3056
      %v3061 = vld [vmem:[%s2988] sm:$0xff]
      %v3062 = vld [vmem:[%s2988 + $0x8] sm:$0xff]
      %3065 = vrot.lane.b32.xlu0 %v3061, 108
      %v3066 = vpop.permute.xlu0 %3065
      %3067 = vrot.lane.b32.xlu0 %v3062, 108
      %v3068 = vpop.permute.xlu0 %3067
      %v3069 = vrot.slane %v3066, 4
      %v3070 = vrot.slane %v3068, 4
      %v3071 = vsel %vm275, %v3069, %v3070
      %v3072 = vsel %vm349, %v3066, %v3071
      %v3073 = vsel %vm349, %v3068, %v3070
      %3076 = vst [vmem:[#allocation2 + $0x114] sm:$0xff] %v3072
      %3077 = vst [vmem:[#allocation2 + $0x11c] sm:$0xf] %v3073
      %v3078 = vld [vmem:[%s2988] sm:$0xff]
      %v3079 = vld [vmem:[%s2988 + $0x8] sm:$0xff]
      %3082 = vrot.lane.b32.xlu0 %v3078, 92
      %v3083 = vpop.permute.xlu0 %3082
      %3084 = vrot.lane.b32.xlu0 %v3079, 92
      %v3085 = vpop.permute.xlu0 %3084
      %v3086 = vrot.slane %v3083, 4
      %v3087 = vrot.slane %v3085, 4
      %v3088 = vsel %vm275, %v3086, %v3087
      %v3089 = vsel %vm367, %v3083, %v3088
      %v3090 = vsel %vm367, %v3085, %v3087
      %3093 = vst [vmem:[#allocation2 + $0x120] sm:$0xff] %v3089
      %3094 = vst [vmem:[#allocation2 + $0x128] sm:$0xf] %v3090
      %v3095 = vld [vmem:[%s2988] sm:$0xff]
      %v3096 = vld [vmem:[%s2988 + $0x8] sm:$0xff]
      %3099 = vrot.lane.b32.xlu0 %v3095, 91
      %v3100 = vpop.permute.xlu0 %3099
      %3101 = vrot.lane.b32.xlu0 %v3096, 91
      %v3102 = vpop.permute.xlu0 %3101
      %v3103 = vrot.slane %v3100, 4
      %v3104 = vrot.slane %v3102, 4
      %v3105 = vsel %vm275, %v3103, %v3104
      %v3106 = vsel %vm385, %v3100, %v3105
      %v3107 = vsel %vm385, %v3102, %v3104
      %3110 = vst [vmem:[#allocation2 + $0x12c] sm:$0xff] %v3106
      %3111 = vst [vmem:[#allocation2 + $0x134] sm:$0xf] %v3107
      %v3112 = vld [vmem:[%s2988] sm:$0xff]
      %v3113 = vld [vmem:[%s2988 + $0x8] sm:$0xff]
      %3116 = vrot.lane.b32.xlu0 %v3112, 90
      %v3117 = vpop.permute.xlu0 %3116
      %3118 = vrot.lane.b32.xlu0 %v3113, 90
      %v3119 = vpop.permute.xlu0 %3118
      %v3120 = vrot.slane %v3117, 4
      %v3121 = vrot.slane %v3119, 4
      %v3122 = vsel %vm275, %v3120, %v3121
      %v3123 = vsel %vm403, %v3117, %v3122
      %v3124 = vsel %vm403, %v3119, %v3121
      %3127 = vst [vmem:[#allocation2 + $0x138] sm:$0xff] %v3123
      %3128 = vst [vmem:[#allocation2 + $0x140] sm:$0xf] %v3124
      %v3129 = vld [vmem:[#allocation2] sm:$0xff]
      %v3130 = vld [vmem:[#allocation2 + $0x8] sm:$0xf]
      %v3131 = vld [vmem:[#allocation2 + $0xc] sm:$0xff]
      %v3132 = vld [vmem:[#allocation2 + $0x14] sm:$0xf]
      %v3133 = vld [vmem:[#allocation2 + $0x18] sm:$0xff]
      %v3134 = vld [vmem:[#allocation2 + $0x20] sm:$0xf]
      %v3135 = vld [vmem:[#allocation2 + $0x24] sm:$0xff]
      %v3136 = vld [vmem:[#allocation2 + $0x2c] sm:$0xf]
      %v3137 = vld [vmem:[#allocation2 + $0x30] sm:$0xff]
      %v3138 = vld [vmem:[#allocation2 + $0x38] sm:$0xf]
      %v3139 = vld [vmem:[#allocation2 + $0x3c] sm:$0xff]
      %v3140 = vld [vmem:[#allocation2 + $0x44] sm:$0xf]
      %v3141 = vld [vmem:[#allocation2 + $0x48] sm:$0xff]
      %v3142 = vld [vmem:[#allocation2 + $0x50] sm:$0xf]
      %v3143 = vld [vmem:[#allocation2 + $0x54] sm:$0xff]
      %v3144 = vld [vmem:[#allocation2 + $0x5c] sm:$0xf]
      %v3145 = vld [vmem:[#allocation2 + $0x60] sm:$0xff]
      %v3146 = vld [vmem:[#allocation2 + $0x68] sm:$0xf]
      %v3147 = vld [vmem:[#allocation2 + $0x6c] sm:$0xff]
      %v3148 = vld [vmem:[#allocation2 + $0x74] sm:$0xf]
      %v3149 = vld [vmem:[#allocation2 + $0x78] sm:$0xff]
      %v3150 = vld [vmem:[#allocation2 + $0x80] sm:$0xf]
      %v3151 = vld [vmem:[#allocation2 + $0x84] sm:$0xff]
      %v3152 = vld [vmem:[#allocation2 + $0x8c] sm:$0xf]
      %v3153 = vld [vmem:[#allocation2 + $0x90] sm:$0xff]
      %v3154 = vld [vmem:[#allocation2 + $0x98] sm:$0xf]
      %v3155 = vld [vmem:[#allocation2 + $0x9c] sm:$0xff]
      %v3156 = vld [vmem:[#allocation2 + $0xa4] sm:$0xf]
      %v3157 = vld [vmem:[#allocation2 + $0xa8] sm:$0xff]
      %v3158 = vld [vmem:[#allocation2 + $0xb0] sm:$0xf]
      %v3159 = vld [vmem:[#allocation2 + $0xb4] sm:$0xff]
      %v3160 = vld [vmem:[#allocation2 + $0xbc] sm:$0xf]
      %v3161 = vld [vmem:[#allocation2 + $0xc0] sm:$0xff]
      %v3162 = vld [vmem:[#allocation2 + $0xc8] sm:$0xf]
      %v3163 = vld [vmem:[#allocation2 + $0xcc] sm:$0xff]
      %v3164 = vld [vmem:[#allocation2 + $0xd4] sm:$0xf]
      %v3165 = vld [vmem:[#allocation2 + $0xd8] sm:$0xff]
      %v3166 = vld [vmem:[#allocation2 + $0xe0] sm:$0xf]
      %v3167 = vld [vmem:[#allocation2 + $0xe4] sm:$0xff]
      %v3168 = vld [vmem:[#allocation2 + $0xec] sm:$0xf]
      %v3169 = vld [vmem:[#allocation2 + $0xf0] sm:$0xff]
      %v3170 = vld [vmem:[#allocation2 + $0xf8] sm:$0xf]
      %v3171 = vld [vmem:[#allocation2 + $0xfc] sm:$0xff]
      %v3172 = vld [vmem:[#allocation2 + $0x104] sm:$0xf]
      %v3173 = vld [vmem:[#allocation2 + $0x108] sm:$0xff]
      %v3174 = vld [vmem:[#allocation2 + $0x110] sm:$0xf]
      %v3175 = vld [vmem:[#allocation2 + $0x114] sm:$0xff]
      %v3176 = vld [vmem:[#allocation2 + $0x11c] sm:$0xf]
      %v3177 = vld [vmem:[#allocation2 + $0x120] sm:$0xff]
      %v3178 = vld [vmem:[#allocation2 + $0x128] sm:$0xf]
      %v3179 = vld [vmem:[#allocation2 + $0x12c] sm:$0xff]
      %v3180 = vld [vmem:[#allocation2 + $0x134] sm:$0xf]
      %v3181 = vld [vmem:[#allocation2 + $0x138] sm:$0xff]
      %v3182 = vld [vmem:[#allocation2 + $0x140] sm:$0xf]
      %v3237 = vunpack.c.l.b16 %v3129
      %v3238 = vunpack.c.h.b16 %v3129
      %v3239 = vunpack.c.l.b16 %v3130
      %v3240 = vunpack.c.l.b16 %v3131
      %v3241 = vunpack.c.h.b16 %v3131
      %v3242 = vunpack.c.l.b16 %v3132
      %v3243 = vunpack.c.l.b16 %v3133
      %v3244 = vunpack.c.h.b16 %v3133
      %v3245 = vunpack.c.l.b16 %v3134
      %v3246 = vunpack.c.l.b16 %v3135
      %v3247 = vunpack.c.h.b16 %v3135
      %v3248 = vunpack.c.l.b16 %v3136
      %v3249 = vunpack.c.l.b16 %v3137
      %v3250 = vunpack.c.h.b16 %v3137
      %v3251 = vunpack.c.l.b16 %v3138
      %v3252 = vunpack.c.l.b16 %v3139
      %v3253 = vunpack.c.h.b16 %v3139
      %v3254 = vunpack.c.l.b16 %v3140
      %v3255 = vunpack.c.l.b16 %v3141
      %v3256 = vunpack.c.h.b16 %v3141
      %v3257 = vunpack.c.l.b16 %v3142
      %v3258 = vunpack.c.l.b16 %v3143
      %v3259 = vunpack.c.h.b16 %v3143
      %v3260 = vunpack.c.l.b16 %v3144
      %v3261 = vunpack.c.l.b16 %v3145
      %v3262 = vunpack.c.h.b16 %v3145
      %v3263 = vunpack.c.l.b16 %v3146
      %v3264 = vunpack.c.l.b16 %v3147
      %v3265 = vunpack.c.h.b16 %v3147
      %v3266 = vunpack.c.l.b16 %v3148
      %v3267 = vunpack.c.l.b16 %v3149
      %v3268 = vunpack.c.h.b16 %v3149
      %v3269 = vunpack.c.l.b16 %v3150
      %v3270 = vunpack.c.l.b16 %v3151
      %v3271 = vunpack.c.h.b16 %v3151
      %v3272 = vunpack.c.l.b16 %v3152
      %v3273 = vunpack.c.l.b16 %v3153
      %v3274 = vunpack.c.h.b16 %v3153
      %v3275 = vunpack.c.l.b16 %v3154
      %v3276 = vunpack.c.l.b16 %v3155
      %v3277 = vunpack.c.h.b16 %v3155
      %v3278 = vunpack.c.l.b16 %v3156
      %v3279 = vunpack.c.l.b16 %v3157
      %v3280 = vunpack.c.h.b16 %v3157
      %v3281 = vunpack.c.l.b16 %v3158
      %v3282 = vunpack.c.l.b16 %v3159
      %v3283 = vunpack.c.h.b16 %v3159
      %v3284 = vunpack.c.l.b16 %v3160
      %v3285 = vunpack.c.l.b16 %v3161
      %v3286 = vunpack.c.h.b16 %v3161
      %v3287 = vunpack.c.l.b16 %v3162
      %v3288 = vunpack.c.l.b16 %v3163
      %v3289 = vunpack.c.h.b16 %v3163
      %v3290 = vunpack.c.l.b16 %v3164
      %v3291 = vunpack.c.l.b16 %v3165
      %v3292 = vunpack.c.h.b16 %v3165
      %v3293 = vunpack.c.l.b16 %v3166
      %v3294 = vunpack.c.l.b16 %v3167
      %v3295 = vunpack.c.h.b16 %v3167
      %v3296 = vunpack.c.l.b16 %v3168
      %v3297 = vunpack.c.l.b16 %v3169
      %v3298 = vunpack.c.h.b16 %v3169
      %v3299 = vunpack.c.l.b16 %v3170
      %v3300 = vunpack.c.l.b16 %v3171
      %v3301 = vunpack.c.h.b16 %v3171
      %v3302 = vunpack.c.l.b16 %v3172
      %v3303 = vunpack.c.l.b16 %v3173
      %v3304 = vunpack.c.h.b16 %v3173
      %v3305 = vunpack.c.l.b16 %v3174
      %v3306 = vunpack.c.l.b16 %v3175
      %v3307 = vunpack.c.h.b16 %v3175
      %v3308 = vunpack.c.l.b16 %v3176
      %v3309 = vunpack.c.l.b16 %v3177
      %v3310 = vunpack.c.h.b16 %v3177
      %v3311 = vunpack.c.l.b16 %v3178
      %v3312 = vunpack.c.l.b16 %v3179
      %v3313 = vunpack.c.h.b16 %v3179
      %v3314 = vunpack.c.l.b16 %v3180
      %v3315 = vunpack.c.l.b16 %v3181
      %v3316 = vunpack.c.h.b16 %v3181
      %v3317 = vunpack.c.l.b16 %v3182
      %v3318 = vpack.c.b16 %v3240, %v3237
      %v3319 = vpack.c.b16 %v3241, %v3238
      %v3320 = vpack.c.b16 %v3242, %v3239
      %v3321 = vpack.c.b16 %v3246, %v3243
      %v3322 = vpack.c.b16 %v3247, %v3244
      %v3323 = vpack.c.b16 %v3248, %v3245
      %v3324 = vpack.c.b16 %v3252, %v3249
      %v3325 = vpack.c.b16 %v3253, %v3250
      %v3326 = vpack.c.b16 %v3254, %v3251
      %v3327 = vpack.c.b16 %v3258, %v3255
      %v3328 = vpack.c.b16 %v3259, %v3256
      %v3329 = vpack.c.b16 %v3260, %v3257
      %v3330 = vpack.c.b16 %v3264, %v3261
      %v3331 = vpack.c.b16 %v3265, %v3262
      %v3332 = vpack.c.b16 %v3266, %v3263
      %v3333 = vpack.c.b16 %v3270, %v3267
      %v3334 = vpack.c.b16 %v3271, %v3268
      %v3335 = vpack.c.b16 %v3272, %v3269
      %v3336 = vpack.c.b16 %v3276, %v3273
      %v3337 = vpack.c.b16 %v3277, %v3274
      %v3338 = vpack.c.b16 %v3278, %v3275
      %v3339 = vpack.c.b16 %v3282, %v3279
      %v3340 = vpack.c.b16 %v3283, %v3280
      %v3341 = vpack.c.b16 %v3284, %v3281
      %v3342 = vpack.c.b16 %v3288, %v3285
      %v3343 = vpack.c.b16 %v3289, %v3286
      %v3344 = vpack.c.b16 %v3290, %v3287
      %v3345 = vpack.c.b16 %v3294, %v3291
      %v3346 = vpack.c.b16 %v3295, %v3292
      %v3347 = vpack.c.b16 %v3296, %v3293
      %v3348 = vpack.c.b16 %v3300, %v3297
      %v3349 = vpack.c.b16 %v3301, %v3298
      %v3350 = vpack.c.b16 %v3302, %v3299
      %v3351 = vpack.c.b16 %v3306, %v3303
      %v3352 = vpack.c.b16 %v3307, %v3304
      %v3353 = vpack.c.b16 %v3308, %v3305
      %v3354 = vpack.c.b16 %v3312, %v3309
      %v3355 = vpack.c.b16 %v3313, %v3310
      %v3356 = vpack.c.b16 %v3314, %v3311
      %v3357 = vpack.c.b16 %v3315, %v3315
      %v3358 = vpack.c.b16 %v3316, %v3316
      %v3359 = vpack.c.b16 %v3317, %v3317
      %v3400 = vsel %vm977, %v3357, 0
      %v3403 = vsel %vm977, %v3358, 0
      %v3406 = vsel %vm977, %v3359, 0
      %3408 = vmatprep.subr.bf16.mxu0 %v3319
      %3409 = vmatpush1.bf16.msra.mxu0 %v3318
      %3410 = vmatprep.subr.bf16.mxu0 %v3322
      %3411 = vmatpush1.bf16.msra.mxu0 %v3321
      %3412 = vmatprep.subr.bf16.mxu0 %v3325
      %3413 = vmatpush1.bf16.msra.mxu0 %v3324
      %3414 = vmatprep.subr.bf16.mxu0 %v3328
      %3415 = vmatpush1.bf16.msra.mxu0 %v3327
      %3416 = vmatprep.subr.bf16.mxu0 %v3331
      %3417 = vmatpush1.bf16.msra.mxu0 %v3330
      %3418 = vmatprep.subr.bf16.mxu0 %v3334
      %3419 = vmatpush1.bf16.msra.mxu0 %v3333
      %3420 = vmatprep.subr.bf16.mxu0 %v3337
      %3421 = vmatpush1.bf16.msra.mxu0 %v3336
      %3422 = vmatprep.subr.bf16.mxu0 %v3340
      %3423 = vmatpush1.bf16.msra.mxu0 %v3339
      %3424 = vmatprep.subr.bf16.mxu0 %v3343
      %3425 = vmatpush1.bf16.msra.mxu0 %v3342
      %3426 = vmatprep.subr.bf16.mxu0 %v3346
      %3427 = vmatpush1.bf16.msra.mxu0 %v3345
      %3428 = vmatprep.subr.bf16.mxu0 %v3349
      %3429 = vmatpush1.bf16.msra.mxu0 %v3348
      %3430 = vmatprep.subr.bf16.mxu0 %v3352
      %3431 = vmatpush1.bf16.msra.mxu0 %v3351
      %3432 = vmatprep.subr.bf16.mxu0 %v3355
      %3433 = vmatpush1.bf16.msra.mxu0 %v3354
      %3434 = vmatprep.subr.bf16.mxu0 %v3403
      %3435 = vmatpush1.bf16.msra.mxu0 %v3400
      %3436 = vmatprep.subr.bf16.mxu0 0
      %3437 = vmatpush1.bf16.msra.mxu0 0
      %3438 = vmatprep.subr.bf16.mxu0 0
      %3439 = vmatpush1.bf16.msra.mxu0 0
      %3440 = vmatprep.mubr.bf16.mxu0 %v975
      %3441 = vmatmul.mubr.bf16.gmra.mrb[0].mxu0 %v754
      %v3442 = vpop.f32.mrb[0].mxu0
      %v3443 = vadd.f32 %v749, %v3442
      %v3444 = vpop.f32.mrb[0].mxu0
      %v3445 = vadd.f32 %v749, %v3444
      %v3446 = vpop.f32.mrb[0].mxu0
      %v3447 = vpop.f32.mrb[0].mxu0
      %3448 = vdwg.mxu0
      %3449 = vmatprep.subr.bf16.mxu0 0
      %3450 = vmatpush1.bf16.msra.mxu0 %v3320
      %3451 = vmatprep.subr.bf16.mxu0 0
      %3452 = vmatpush1.bf16.msra.mxu0 %v3323
      %3453 = vmatprep.subr.bf16.mxu0 0
      %3454 = vmatpush1.bf16.msra.mxu0 %v3326
      %3455 = vmatprep.subr.bf16.mxu0 0
      %3456 = vmatpush1.bf16.msra.mxu0 %v3329
      %3457 = vmatprep.subr.bf16.mxu0 0
      %3458 = vmatpush1.bf16.msra.mxu0 %v3332
      %3459 = vmatprep.subr.bf16.mxu0 0
      %3460 = vmatpush1.bf16.msra.mxu0 %v3335
      %3461 = vmatprep.subr.bf16.mxu0 0
      %3462 = vmatpush1.bf16.msra.mxu0 %v3338
      %3463 = vmatprep.subr.bf16.mxu0 0
      %3464 = vmatpush1.bf16.msra.mxu0 %v3341
      %3465 = vmatprep.subr.bf16.mxu0 0
      %3466 = vmatpush1.bf16.msra.mxu0 %v3344
      %3467 = vmatprep.subr.bf16.mxu0 0
      %3468 = vmatpush1.bf16.msra.mxu0 %v3347
      %3469 = vmatprep.subr.bf16.mxu0 0
      %3470 = vmatpush1.bf16.msra.mxu0 %v3350
      %3471 = vmatprep.subr.bf16.mxu0 0
      %3472 = vmatpush1.bf16.msra.mxu0 %v3353
      %3473 = vmatprep.subr.bf16.mxu0 0
      %3474 = vmatpush1.bf16.msra.mxu0 %v3356
      %3475 = vmatprep.subr.bf16.mxu0 0
      %3476 = vmatpush1.bf16.msra.mxu0 %v3406
      %3477 = vmatprep.subr.bf16.mxu0 0
      %3478 = vmatpush1.bf16.msra.mxu0 0
      %3479 = vmatprep.subr.bf16.mxu0 0
      %3480 = vmatpush1.bf16.msra.mxu0 0
      %3481 = vmatprep.mubr.bf16.mxu0 %v975
      %3482 = vmatmul.mubr.bf16.gmra.mrb[0].mxu0 %v754
      %v3483 = vpop.f32.mrb[0].mxu0
      %v3484 = vadd.f32 %v749, %v3483
      %v3485 = vpop.f32.mrb[0].mxu0
      %v3486 = vpop.f32.mrb[0].mxu0
      %v3487 = vpop.f32.mrb[0].mxu0
      %3488 = vdwg.mxu0
      %vm3489 = vcmp.ge.f32.partialorder %v3443, 0.0
      %vm3490 = vcmp.ge.f32.partialorder %v3445, 0.0
      %vm3491 = vcmp.ge.f32.partialorder %v3484, 0.0
      %v3492 = vmul.f32 %v3443, 0.2
      %v3493 = vmul.f32 %v3445, 0.2
      %v3494 = vmul.f32 %v3484, 0.2
      %v3495 = vsel %vm3489, %v3443, %v3492
      %v3496 = vsel %vm3490, %v3445, %v3493
      %v3497 = vsel %vm3491, %v3484, %v3494
      %s3498 = scalar_lea.vmem %s256, 72
      %3499 = vst [vmem:[%s3498] sm:$0xff] %v3495
      %3500 = vst [vmem:[%s3498 + $0x8] sm:$0xff] %v3496
      %3501 = vst [vmem:[%s3498 + $0x10] sm:$0xff] %v3497
      %v3502 = vmul.f32 %v3495, %v1084
      %v3503 = vmul.f32 %v3496, %v1088
      %v3504 = vmul.f32 %v3497, %v1092
      %v3505 = vadd.f32 %v3502, %v3503
      %v3506 = vadd.f32 %v3505, %v3504
      %3507 = vadd.xlane.f32.xlu0 %v3506
      %v3508 = vpop.xlane.xlu0 %3507
      %v3509 = vadd.f32 %v2707, %v3508
      %v3510 = vmul.f32 %v3509, 0.0009765625
      %v3511 = vld [vmem:[%s256] sm:$0xff]
      %v3512 = vld [vmem:[%s256 + $0x8] sm:$0xff]
      %v3513 = vld [vmem:[%s256 + $0x10] sm:$0xff]
      %v3514 = vsub.f32 %v3511, %v3510
      %v3515 = vsub.f32 %v3512, %v3510
      %v3516 = vsub.f32 %v3513, %v3510
      %v3517 = vmul.f32 %v3514, %v1084
      %v3518 = vmul.f32 %v3515, %v1088
      %v3519 = vmul.f32 %v3516, %v1092
      %v3520 = vmul.f32 %v3517, %v3517
      %v3521 = vmul.f32 %v3518, %v3518
      %v3522 = vmul.f32 %v3519, %v3519
      %v3523 = vadd.f32 %v3520, %v3521
      %v3524 = vadd.f32 %v3523, %v3522
      %3525 = vadd.xlane.f32.xlu0 %v3524
      %v3526 = vpop.xlane.xlu0 %3525
      %v3527 = vadd.f32 %v3526, 0.0
      %v3528 = vld [vmem:[%s1894] sm:$0xff]
      %v3529 = vld [vmem:[%s1894 + $0x8] sm:$0xff]
      %v3530 = vld [vmem:[%s1894 + $0x10] sm:$0xff]
      %v3531 = vsub.f32 %v3528, %v3510
      %v3532 = vsub.f32 %v3529, %v3510
      %v3533 = vsub.f32 %v3530, %v3510
      %v3534 = vmul.f32 %v3531, %v1084
      %v3535 = vmul.f32 %v3532, %v1088
      %v3536 = vmul.f32 %v3533, %v1092
      %v3537 = vmul.f32 %v3534, %v3534
      %v3538 = vmul.f32 %v3535, %v3535
      %v3539 = vmul.f32 %v3536, %v3536
      %v3540 = vadd.f32 %v3537, %v3538
      %v3541 = vadd.f32 %v3540, %v3539
      %3542 = vadd.xlane.f32.xlu0 %v3541
      %v3543 = vpop.xlane.xlu0 %3542
      %v3544 = vadd.f32 %v3527, %v3543
      %v3545 = vld [vmem:[%s2696] sm:$0xff]
      %v3546 = vld [vmem:[%s2696 + $0x8] sm:$0xff]
      %v3547 = vld [vmem:[%s2696 + $0x10] sm:$0xff]
      %v3548 = vsub.f32 %v3545, %v3510
      %v3549 = vsub.f32 %v3546, %v3510
      %v3550 = vsub.f32 %v3547, %v3510
      %v3551 = vmul.f32 %v3548, %v1084
      %v3552 = vmul.f32 %v3549, %v1088
      %v3553 = vmul.f32 %v3550, %v1092
      %v3554 = vmul.f32 %v3551, %v3551
      %v3555 = vmul.f32 %v3552, %v3552
      %v3556 = vmul.f32 %v3553, %v3553
      %v3557 = vadd.f32 %v3554, %v3555
      %v3558 = vadd.f32 %v3557, %v3556
      %3559 = vadd.xlane.f32.xlu0 %v3558
      %v3560 = vpop.xlane.xlu0 %3559
      %v3561 = vadd.f32 %v3544, %v3560
      %v3562 = vld [vmem:[%s3498] sm:$0xff]
      %v3563 = vld [vmem:[%s3498 + $0x8] sm:$0xff]
      %v3564 = vld [vmem:[%s3498 + $0x10] sm:$0xff]
      %v3565 = vsub.f32 %v3562, %v3510
      %v3566 = vsub.f32 %v3563, %v3510
      %v3567 = vsub.f32 %v3564, %v3510
      %v3568 = vmul.f32 %v3565, %v1084
      %v3569 = vmul.f32 %v3566, %v1088
      %v3570 = vmul.f32 %v3567, %v1092
      %v3571 = vmul.f32 %v3568, %v3568
      %v3572 = vmul.f32 %v3569, %v3569
      %v3573 = vmul.f32 %v3570, %v3570
      %v3574 = vadd.f32 %v3571, %v3572
      %v3575 = vadd.f32 %v3574, %v3573
      %3576 = vadd.xlane.f32.xlu0 %v3575
      %v3577 = vpop.xlane.xlu0 %3576
      %v3578 = vadd.f32 %v3561, %v3577
      %v3579 = vmul.f32 %v3578, 0.0009765625
      %v3580 = vmax.f32 %v3579, 0.0
      %v3581 = vadd.f32 %v3580, 1e-05
      %v3582 = vrsqrt.pop %v3581
      %v3583 = vmul.f32 %v3514, %v3582
      %v3584 = vmul.f32 %v3515, %v3582
      %v3585 = vmul.f32 %v3516, %v3582
      %3586 = vst [vmem:[%s256] sm:$0xff] %v3583
      %3587 = vst [vmem:[%s256 + $0x8] sm:$0xff] %v3584
      %3588 = vst [vmem:[%s256 + $0x10] sm:$0xff] %v3585
      %v3589 = vld [vmem:[%s1894] sm:$0xff]
      %v3590 = vld [vmem:[%s1894 + $0x8] sm:$0xff]
      %v3591 = vld [vmem:[%s1894 + $0x10] sm:$0xff]
      %v3592 = vsub.f32 %v3589, %v3510
      %v3593 = vsub.f32 %v3590, %v3510
      %v3594 = vsub.f32 %v3591, %v3510
      %v3595 = vmul.f32 %v3592, %v3582
      %v3596 = vmul.f32 %v3593, %v3582
      %v3597 = vmul.f32 %v3594, %v3582
      %3598 = vst [vmem:[%s1894] sm:$0xff] %v3595
      %3599 = vst [vmem:[%s1894 + $0x8] sm:$0xff] %v3596
      %3600 = vst [vmem:[%s1894 + $0x10] sm:$0xff] %v3597
      %v3601 = vld [vmem:[%s2696] sm:$0xff]
      %v3602 = vld [vmem:[%s2696 + $0x8] sm:$0xff]
      %v3603 = vld [vmem:[%s2696 + $0x10] sm:$0xff]
      %v3604 = vsub.f32 %v3601, %v3510
      %v3605 = vsub.f32 %v3602, %v3510
      %v3606 = vsub.f32 %v3603, %v3510
      %v3607 = vmul.f32 %v3604, %v3582
      %v3608 = vmul.f32 %v3605, %v3582
      %v3609 = vmul.f32 %v3606, %v3582
      %3610 = vst [vmem:[%s2696] sm:$0xff] %v3607
      %3611 = vst [vmem:[%s2696 + $0x8] sm:$0xff] %v3608
      %3612 = vst [vmem:[%s2696 + $0x10] sm:$0xff] %v3609
      %v3613 = vld [vmem:[%s3498] sm:$0xff]
      %v3614 = vld [vmem:[%s3498 + $0x8] sm:$0xff]
      %v3615 = vld [vmem:[%s3498 + $0x10] sm:$0xff]
      %v3616 = vsub.f32 %v3613, %v3510
      %v3617 = vsub.f32 %v3614, %v3510
      %v3618 = vsub.f32 %v3615, %v3510
      %v3619 = vmul.f32 %v3616, %v3582
      %v3620 = vmul.f32 %v3617, %v3582
      %v3621 = vmul.f32 %v3618, %v3582
      %3622 = vst [vmem:[%s3498] sm:$0xff] %v3619
      %3623 = vst [vmem:[%s3498 + $0x8] sm:$0xff] %v3620
      %3624 = vst [vmem:[%s3498 + $0x10] sm:$0xff] %v3621
      %p3625 = scmp.lt.s32.totalorder %s19, 1
      %s3626 = scalar_select %p3625, %s19, 1
      %p3627 = scmp.lt.s32.totalorder %s20, 0
      %s3628 = scalar_select %p3627, %s20, 0
      %s3629 = smul.addr %s3628, 3
      %s3630 = smul.addr %s3626, 12
      %s3631 = sadd.s32 %s3629, %s3630
      %s3632 = smul.addr %s3631, 8
      %s3633 = scalar_lea.vmem %s4, %s3632
      // Predicated region
      $region37: #{conv_block_forward.1} parent=35 // pred_check
        %p3634 = pneg %p146
      $region38: #{conv_block_forward.1} parent=35 // pred_check_branch
        %3636 = sbr.rel (%p3634) target = $region40
      $region39: #{conv_block_forward.1} parent=35 // pred_region
        _
      $region40: #{conv_block_forward.1} parent=35 // pred_fallthru
        _
    $region36: #{conv_block_forward.1} parent=5 // pred_fallthru
      _
    %p3637 = scmp.le.s32.totalorder 2, %s10
    // Predicated region
    $region41: #{conv_block_forward.1} parent=5 // pred_check
      %p3638 = pneg %p3637
    $region42: #{conv_block_forward.1} parent=5 // pred_check_branch
      %3640 = sbr.rel (%p3638) target = $region44
    $region43: #{conv_block_forward.1} parent=5 // pred_region
      %s3641 = ssub.s32 %s10, 2
      // Predicated region
      $region45: #{conv_block_forward.1} parent=43 // pred_check
        %p3642 = pneg %p152
      $region46: #{conv_block_forward.1} parent=43 // pred_check_branch
        %3644 = sbr.rel (%p3642) target = $region48
      $region47: #{conv_block_forward.1} parent=43 // pred_region
        %p3645 = scmp.lt.s32.totalorder %s21, 1
        %s3646 = scalar_select %p3645, %s21, 1
        %p3647 = scmp.lt.s32.totalorder %s22, 0
        %s3648 = scalar_select %p3647, %s22, 0
        %s3649 = smul.addr %s3648, 3
        %s3650 = smul.addr %s3646, 12
        %s3651 = sadd.s32 %s3649, %s3650
        %s3652 = smul.addr %s3651, 8
        %s3653 = scalar_lea.vmem %s4, %s3652
      $region48: #{conv_block_forward.1} parent=43 // pred_fallthru
        _
    $region44: #{conv_block_forward.1} parent=5 // pred_fallthru
      _
  $region6: #{conv_block_forward.1} parent=0 // loop_footer
    %s14 = sadd.s32 1, %s10
  $region7: #{conv_block_forward.1} parent=0 // loop_footer_branch
    %9 = sbr.rel target = $region3
  $region8: #{conv_block_forward.1} parent=0 // loop_exit
    _

</llo_original>
